<compile_context>
chip_gen: v7x
topology: tpu7x:2x2x1
jax: 0.10.0
libtpu: 0.0.40
codegen_flags: <defaults>
</compile_context>

<pallas_src>
import math
from functools import partial

import numpy as np
import jax
import jax.numpy as jnp
from jax.experimental import pallas as pl
from jax.experimental.pallas import tpu as pltpu

WINDOW_SIZE = 11
SIGMA = 1.5
C1 = 0.01 ** 2
C2 = 0.03 ** 2


def _gaussian_1d(window_size: int, sigma: float) -> np.ndarray:
    g = np.array(
        [np.exp(-((x - window_size // 2) ** 2) / (2.0 * sigma ** 2))
         for x in range(window_size)],
        dtype=np.float32,
    )
    return g / g.sum()


def _conv_band_matrix(n: int, g1d: np.ndarray) -> np.ndarray:
    """(n, n) banded matrix implementing the zero-padded 1-D Gaussian conv.

    M[r, c] = g[c - r + pad] for |c - r| <= pad, else 0.  Left-multiplying a
    (n, m) image by M convolves along rows; right-multiplying a (m, n) image
    by M convolves along columns (g is symmetric, so one matrix serves both).
    Out-of-range taps are simply absent from the band == zero padding.
    """
    ws = len(g1d)
    pad = ws // 2
    m = np.zeros((n, n), dtype=np.float32)
    for r in range(n):
        for c in range(max(0, r - pad), min(n, r + pad + 1)):
            m[r, c] = g1d[c - r + pad]
    return m


def _choose_plane_block(P: int, H: int, W: int) -> int:
    """Number of image planes folded into the lane axis per grid step."""
    if W >= 128:
        max_fold = 1                        # a single plane is already lane-dense
    else:
        max_fold = max(1, 512 // W)         # fold up to ~512 lanes wide
    # keep the per-step f32 working set (~30 (H, B*W) temps) around 4 MiB
    budget = max(1, (4 << 20) // (32 * H * W * 4))
    B = max(1, min(P, max_fold, budget))
    if B < P and (B * W) % 128 != 0:
        # when the grid has >1 step, keep the folded lane width 128-aligned
        q = math.lcm(W, 128) // W           # planes per 128-lane quantum
        B = P if q >= P else max(q, (B // q) * q)
    return B


def _mssim_kernel(gh_ref, gwbd_ref, ssum_ref, x1_ref, x2_ref, out_ref, *, H):
    """One grid step: B planes folded along lanes, shape (H, B*W).

    gh_ref   : (H, H)      vertical Gaussian band matrix (left multiplier)
    gwbd_ref : (B*W, B*W)  block-diag horizontal band matrix (right multiplier)
    ssum_ref : (B*W, B)    0/1 matrix folding each plane's W lanes to one sum
    x1/x2    : (H, B*W)    lane-dense input tiles
    out_ref  : (1, 1, B)   per-plane SSIM-map sums for this plane block
    """
    x1 = x1_ref[...]
    x2 = x2_ref[...]
    gh = gh_ref[...]
    gwbd = gwbd_ref[...]
    ssum = ssum_ref[...]

    # Stack the five conv inputs along sublanes -> ONE horizontal-pass matmul.
    # (zero padding commutes with the elementwise products, so convolving the
    #  raw products matches F.conv2d(img*img, ..., padding=ws//2)).
    s = jnp.concatenate([x1, x2, x1 * x1, x2 * x2, x1 * x2], axis=0)  # (5H, BW)
    sh = jnp.dot(s, gwbd, preferred_element_type=jnp.float32,
                 precision=jax.lax.Precision.HIGHEST)                 # (5H, BW)

    def vconv(k):
        # Vertical pass for stacked slot k: (H, H) @ (H, BW) on the MXU.
        return jnp.dot(gh, sh[k * H:(k + 1) * H, :],
                       preferred_element_type=jnp.float32,
                       precision=jax.lax.Precision.HIGHEST)

    mu1, mu2 = vconv(0), vconv(1)
    e11, e22, e12 = vconv(2), vconv(3), vconv(4)

    mu1_sq = mu1 * mu1
    mu2_sq = mu2 * mu2
    mu1_mu2 = mu1 * mu2
    sigma1_sq = e11 - mu1_sq
    sigma2_sq = e22 - mu2_sq
    sigma12 = e12 - mu1_mu2

    num = (2.0 * mu1_mu2 + C1) * (2.0 * sigma12 + C2)
    den = (mu1_sq + mu2_sq + C1) * (sigma1_sq + sigma2_sq + C2)
    # reciprocal goes to the EUP slot instead of a VPU divide sequence
    ssim_map = num * pl.reciprocal(den, approx=False)                 # (H, BW)

    # Per-plane sums: fold each plane's W lanes with one matmul, then reduce
    # the H rows (block-diagonal ssum => no cross-plane mixing).
    per_rows = jnp.dot(ssim_map, ssum, preferred_element_type=jnp.float32,
                       precision=jax.lax.Precision.HIGHEST)           # (H, B)
    out_ref[0] = jnp.sum(per_rows, axis=0, keepdims=True)             # (1, B)


@partial(jax.jit, static_argnames=("window_size", "size_average"))
def mssim(img1, img2, window_size=WINDOW_SIZE, size_average=True):
    """Pallas equivalent of MSSIM.forward(img1, img2) (NCHW float32)."""
    assert img1.shape == img2.shape
    N, C, H, W = img1.shape
    P = N * C

    g1d = _gaussian_1d(window_size, SIGMA)
    B = _choose_plane_block(P, H, W)
    num_blocks = -(-P // B)          # cdiv
    P_pad = num_blocks * B
    BW = B * W

    # Deterministic "parameters": Gaussian band matrices from MSSIM.create_window.
    gh = jnp.asarray(_conv_band_matrix(H, g1d))                         # (H, H)
    gwbd = jnp.asarray(np.kron(np.eye(B, dtype=np.float32),
                               _conv_band_matrix(W, g1d)))              # (BW, BW)
    ssum = jnp.asarray(np.kron(np.eye(B, dtype=np.float32),
                               np.ones((W, 1), dtype=np.float32)))      # (BW, B)

    x1 = img1.astype(jnp.float32).reshape(P, H, W)
    x2 = img2.astype(jnp.float32).reshape(P, H, W)
    if P_pad != P:
        # pad the plane count only (padded zero planes are discarded below)
        pad_cfg = ((0, P_pad - P), (0, 0), (0, 0))
        x1 = jnp.pad(x1, pad_cfg)
        x2 = jnp.pad(x2, pad_cfg)

    # Lane-dense layout: fold planes into the last (lane) axis -> (H, P_pad*W).
    x1f = jnp.transpose(x1, (1, 0, 2)).reshape(H, P_pad * W)
    x2f = jnp.transpose(x2, (1, 0, 2)).reshape(H, P_pad * W)

    kernel = partial(_mssim_kernel, H=H)
    plane_sums = pl.pallas_call(
        kernel,
        out_shape=jax.ShapeDtypeStruct((num_blocks, 1, B), jnp.float32),
        grid=(num_blocks,),
        in_specs=[
            pl.BlockSpec((H, H), lambda i: (0, 0)),
            pl.BlockSpec((BW, BW), lambda i: (0, 0)),
            pl.BlockSpec((BW, B), lambda i: (0, 0)),
            pl.BlockSpec((H, BW), lambda i: (0, i)),
            pl.BlockSpec((H, BW), lambda i: (0, i)),
        ],
        out_specs=pl.BlockSpec((1, 1, B), lambda i: (i, 0, 0)),
        compiler_params=pltpu.CompilerParams(
            dimension_semantics=("parallel",)),
    )(gh, gwbd, ssum, x1f, x2f)

    plane_sums = plane_sums.reshape(P_pad)[:P]
    if size_average:
        # ssim_map.mean() over all of (N, C, H, W)
        return jnp.sum(plane_sums) / (P * H * W)
    else:
        # ssim_map.mean(1).mean(1).mean(1) -> per-batch mean over (C, H, W)
        return jnp.sum(plane_sums.reshape(N, C), axis=1) / (C * H * W)


def _mssim_ref(img1, img2, window_size=WINDOW_SIZE):
    """Pure-JAX reference (lax depthwise conv) for a correctness sanity check."""
    N, C, H, W = img1.shape
    pad = window_size // 2
    g1d = _gaussian_1d(window_size, SIGMA)
    w2d = np.outer(g1d, g1d).astype(np.float32)
    window = jnp.asarray(np.broadcast_to(w2d, (C, 1, window_size, window_size)).copy())

    def conv(x):
        return jax.lax.conv_general_dilated(
            x, window, window_strides=(1, 1),
            padding=((pad, pad), (pad, pad)),
            dimension_numbers=("NCHW", "OIHW", "NCHW"),
            feature_group_count=C,
            precision=jax.lax.Precision.HIGHEST)

    mu1, mu2 = conv(img1), conv(img2)
    mu1_sq, mu2_sq, mu1_mu2 = mu1 * mu1, mu2 * mu2, mu1 * mu2
    s1 = conv(img1 * img1) - mu1_sq
    s2 = conv(img2 * img2) - mu2_sq
    s12 = conv(img1 * img2) - mu1_mu2
    ssim_map = ((2 * mu1_mu2 + C1) * (2 * s12 + C2)) / (
        (mu1_sq + mu2_sq + C1) * (s1 + s2 + C2))
    return jnp.mean(ssim_map)


if __name__ == "__main__":
    key = jax.random.PRNGKey(0)
    k1, k2 = jax.random.split(key)
    shape = (2, 4, 16, 16)  # N, C, H, W
    img1 = jax.random.uniform(k1, shape, dtype=jnp.float32)
    img2 = jax.random.uniform(k2, shape, dtype=jnp.float32)

    out = mssim(img1, img2)
    jax.block_until_ready(out)

    ref = _mssim_ref(img1, img2)
    jax.block_until_ready(ref)
    assert np.allclose(np.asarray(out), np.asarray(ref), rtol=1e-4, atol=5e-5), (
        float(out), float(ref))

    print("KERNEL_OK")
</pallas_src>

<mosaic_0001>
module attributes {stable_mosaic.version = 11 : i64} {
  func.func @_mssim_kernel(%arg0: i32, %arg1: memref<16x16xf32, #tpu.memory_space<vmem>>, %arg2: memref<128x128xf32, #tpu.memory_space<vmem>>, %arg3: memref<128x8xf32, #tpu.memory_space<vmem>>, %arg4: memref<16x128xf32, #tpu.memory_space<vmem>>, %arg5: memref<16x128xf32, #tpu.memory_space<vmem>>, %arg6: memref<1x1x8xf32, #tpu.memory_space<vmem>>) attributes {dimension_semantics = [#tpu.dimension_semantics<parallel>], iteration_bounds = array<i64: 1>, scalar_prefetch = 0 : i64, scratch_operands = 0 : i64, tpu.core_type = #tpu.core_type<tc>, window_params = [{pipeline_mode = #tpu.pipeline_mode<synchronous>, transform_indices = @transform_0, window_bounds = array<i64: 16, 16>}, {pipeline_mode = #tpu.pipeline_mode<synchronous>, transform_indices = @transform_1, window_bounds = array<i64: 128, 128>}, {pipeline_mode = #tpu.pipeline_mode<synchronous>, transform_indices = @transform_2, window_bounds = array<i64: 128, 8>}, {transform_indices = @transform_3, window_bounds = array<i64: 16, 128>}, {transform_indices = @transform_4, window_bounds = array<i64: 16, 128>}, {transform_indices = @transform_5, window_bounds = array<i64: 1, 1, 8>}]} {
    %c0 = arith.constant 0 : index
    %c0_0 = arith.constant 0 : index
    %0 = vector.load %arg4[%c0, %c0_0] : memref<16x128xf32, #tpu.memory_space<vmem>>, vector<16x128xf32>
    %c0_1 = arith.constant 0 : index
    %c0_2 = arith.constant 0 : index
    %1 = vector.load %arg5[%c0_1, %c0_2] : memref<16x128xf32, #tpu.memory_space<vmem>>, vector<16x128xf32>
    %c0_3 = arith.constant 0 : index
    %c0_4 = arith.constant 0 : index
    %2 = vector.load %arg1[%c0_3, %c0_4] : memref<16x16xf32, #tpu.memory_space<vmem>>, vector<16x16xf32>
    %c0_5 = arith.constant 0 : index
    %c0_6 = arith.constant 0 : index
    %3 = vector.load %arg2[%c0_5, %c0_6] : memref<128x128xf32, #tpu.memory_space<vmem>>, vector<128x128xf32>
    %c0_7 = arith.constant 0 : index
    %c0_8 = arith.constant 0 : index
    %4 = vector.load %arg3[%c0_7, %c0_8] : memref<128x8xf32, #tpu.memory_space<vmem>>, vector<128x8xf32>
    %5 = arith.mulf %0, %0 : vector<16x128xf32>
    %6 = arith.mulf %1, %1 : vector<16x128xf32>
    %7 = arith.mulf %0, %1 : vector<16x128xf32>
    %8 = tpu.concatenate %0, %1, %5, %6, %7 in 0 : vector<16x128xf32>, vector<16x128xf32>, vector<16x128xf32>, vector<16x128xf32>, vector<16x128xf32> -> vector<80x128xf32>
    %cst = arith.constant dense<0.000000e+00> : vector<80x128xf32>
    %9 = tpu.matmul %8, %3, %cst {dimension_numbers = #tpu.dot_dimension_numbers<[1], [0], [0], [1], [0, 0, 1, 1], [], []>, precision = #tpu.contract_precision<fp32>} : vector<80x128xf32>, vector<128x128xf32>, vector<80x128xf32> -> vector<80x128xf32>
    %10 = vector.extract_strided_slice %9 {offsets = [0, 0], sizes = [16, 128], strides = [1, 1]} : vector<80x128xf32> to vector<16x128xf32>
    %cst_9 = arith.constant dense<0.000000e+00> : vector<16x128xf32>
    %11 = tpu.matmul %2, %10, %cst_9 {dimension_numbers = #tpu.dot_dimension_numbers<[1], [0], [0], [1], [0, 0, 1, 1], [], []>, precision = #tpu.contract_precision<fp32>} : vector<16x16xf32>, vector<16x128xf32>, vector<16x128xf32> -> vector<16x128xf32>
    %12 = vector.extract_strided_slice %9 {offsets = [16, 0], sizes = [16, 128], strides = [1, 1]} : vector<80x128xf32> to vector<16x128xf32>
    %cst_10 = arith.constant dense<0.000000e+00> : vector<16x128xf32>
    %13 = tpu.matmul %2, %12, %cst_10 {dimension_numbers = #tpu.dot_dimension_numbers<[1], [0], [0], [1], [0, 0, 1, 1], [], []>, precision = #tpu.contract_precision<fp32>} : vector<16x16xf32>, vector<16x128xf32>, vector<16x128xf32> -> vector<16x128xf32>
    %14 = vector.extract_strided_slice %9 {offsets = [32, 0], sizes = [16, 128], strides = [1, 1]} : vector<80x128xf32> to vector<16x128xf32>
    %cst_11 = arith.constant dense<0.000000e+00> : vector<16x128xf32>
    %15 = tpu.matmul %2, %14, %cst_11 {dimension_numbers = #tpu.dot_dimension_numbers<[1], [0], [0], [1], [0, 0, 1, 1], [], []>, precision = #tpu.contract_precision<fp32>} : vector<16x16xf32>, vector<16x128xf32>, vector<16x128xf32> -> vector<16x128xf32>
    %16 = vector.extract_strided_slice %9 {offsets = [48, 0], sizes = [16, 128], strides = [1, 1]} : vector<80x128xf32> to vector<16x128xf32>
    %cst_12 = arith.constant dense<0.000000e+00> : vector<16x128xf32>
    %17 = tpu.matmul %2, %16, %cst_12 {dimension_numbers = #tpu.dot_dimension_numbers<[1], [0], [0], [1], [0, 0, 1, 1], [], []>, precision = #tpu.contract_precision<fp32>} : vector<16x16xf32>, vector<16x128xf32>, vector<16x128xf32> -> vector<16x128xf32>
    %18 = vector.extract_strided_slice %9 {offsets = [64, 0], sizes = [16, 128], strides = [1, 1]} : vector<80x128xf32> to vector<16x128xf32>
    %cst_13 = arith.constant dense<0.000000e+00> : vector<16x128xf32>
    %19 = tpu.matmul %2, %18, %cst_13 {dimension_numbers = #tpu.dot_dimension_numbers<[1], [0], [0], [1], [0, 0, 1, 1], [], []>, precision = #tpu.contract_precision<fp32>} : vector<16x16xf32>, vector<16x128xf32>, vector<16x128xf32> -> vector<16x128xf32>
    %20 = arith.mulf %11, %11 : vector<16x128xf32>
    %21 = arith.mulf %13, %13 : vector<16x128xf32>
    %22 = arith.mulf %11, %13 : vector<16x128xf32>
    %23 = arith.subf %15, %20 : vector<16x128xf32>
    %24 = arith.subf %17, %21 : vector<16x128xf32>
    %25 = arith.subf %19, %22 : vector<16x128xf32>
    %cst_14 = arith.constant 2.000000e+00 : f32
    %26 = vector.broadcast %cst_14 : f32 to vector<16x128xf32>
    %27 = arith.mulf %26, %22 : vector<16x128xf32>
    %cst_15 = arith.constant 9.99999974E-5 : f32
    %28 = vector.broadcast %cst_15 : f32 to vector<16x128xf32>
    %29 = arith.addf %27, %28 : vector<16x128xf32>
    %cst_16 = arith.constant 2.000000e+00 : f32
    %30 = vector.broadcast %cst_16 : f32 to vector<16x128xf32>
    %31 = arith.mulf %30, %25 : vector<16x128xf32>
    %cst_17 = arith.constant 8.99999984E-4 : f32
    %32 = vector.broadcast %cst_17 : f32 to vector<16x128xf32>
    %33 = arith.addf %31, %32 : vector<16x128xf32>
    %34 = arith.mulf %29, %33 : vector<16x128xf32>
    %35 = arith.addf %20, %21 : vector<16x128xf32>
    %cst_18 = arith.constant 9.99999974E-5 : f32
    %36 = vector.broadcast %cst_18 : f32 to vector<16x128xf32>
    %37 = arith.addf %35, %36 : vector<16x128xf32>
    %38 = arith.addf %23, %24 : vector<16x128xf32>
    %cst_19 = arith.constant 8.99999984E-4 : f32
    %39 = vector.broadcast %cst_19 : f32 to vector<16x128xf32>
    %40 = arith.addf %38, %39 : vector<16x128xf32>
    %41 = arith.mulf %37, %40 : vector<16x128xf32>
    %42 = tpu.reciprocal %41 : vector<16x128xf32> -> vector<16x128xf32>
    %43 = arith.mulf %34, %42 : vector<16x128xf32>
    %cst_20 = arith.constant dense<0.000000e+00> : vector<16x8xf32>
    %44 = tpu.matmul %43, %4, %cst_20 {dimension_numbers = #tpu.dot_dimension_numbers<[1], [0], [0], [1], [0, 0, 1, 1], [], []>, precision = #tpu.contract_precision<fp32>} : vector<16x128xf32>, vector<128x8xf32>, vector<16x8xf32> -> vector<16x8xf32>
    %cst_21 = arith.constant dense<0.000000e+00> : vector<8xf32>
    %45 = vector.multi_reduction <add>, %44, %cst_21 [0] : vector<16x8xf32> to vector<8xf32>
    %46 = vector.shape_cast %45 : vector<8xf32> to vector<1x8xf32>
    %c0_22 = arith.constant 0 : index
    %c0_23 = arith.constant 0 : index
    %c0_24 = arith.constant 0 : index
    %47 = vector.load %arg6[%c0_22, %c0_23, %c0_24] : memref<1x1x8xf32, #tpu.memory_space<vmem>>, vector<1x1x8xf32>
    %48 = vector.shape_cast %47 : vector<1x1x8xf32> to vector<1x8xf32>
    %49 = vector.shape_cast %46 : vector<1x8xf32> to vector<1x1x8xf32>
    tpu.vector_store %arg6[%c0_22, %c0_23, %c0_24], %49 {strides = array<i32>} : memref<1x1x8xf32, #tpu.memory_space<vmem>>, vector<1x1x8xf32>,
    return
  }
  func.func @transform_0(%arg0: i32) -> (i32, i32) {
    %c0_i32 = arith.constant 0 : i32
    %c0_i32_0 = arith.constant 0 : i32
    %c0_i32_1 = arith.constant 0 : i32
    return %c0_i32, %c0_i32_0 : i32, i32
  }
  func.func @transform_1(%arg0: i32) -> (i32, i32) {
    %c0_i32 = arith.constant 0 : i32
    %c0_i32_0 = arith.constant 0 : i32
    %c0_i32_1 = arith.constant 0 : i32
    return %c0_i32, %c0_i32_0 : i32, i32
  }
  func.func @transform_2(%arg0: i32) -> (i32, i32) {
    %c0_i32 = arith.constant 0 : i32
    %c0_i32_0 = arith.constant 0 : i32
    %c0_i32_1 = arith.constant 0 : i32
    return %c0_i32, %c0_i32_0 : i32, i32
  }
  func.func @transform_3(%arg0: i32) -> (i32, i32) {
    %c0_i32 = arith.constant 0 : i32
    %c0_i32_0 = arith.constant 0 : i32
    return %c0_i32, %arg0 : i32, i32
  }
  func.func @transform_4(%arg0: i32) -> (i32, i32) {
    %c0_i32 = arith.constant 0 : i32
    %c0_i32_0 = arith.constant 0 : i32
    return %c0_i32, %arg0 : i32, i32
  }
  func.func @transform_5(%arg0: i32) -> (i32, i32, i32) {
    %c0_i32 = arith.constant 0 : i32
    %c0_i32_0 = arith.constant 0 : i32
    %c0_i32_1 = arith.constant 0 : i32
    return %arg0, %c0_i32, %c0_i32_0 : i32, i32, i32
  }
}

</mosaic_0001>

<llo_original>
// kernel: mssim.1
$region0: #{mssim.1}
  #allocation0 [shape = 'u32[]', space=smem, size = 0x4, offset = 0x4, fixed_abs, tag = 'smem constant byte address 0x4 - core index']
  #allocation1 [shape = 'u32[144,128]{1,0:T(1,128)}', space=vmem, size = 0x12000, scoped, tag = 'internal scratch']
  %s0 = inlined_call_operand.vmem [shape: f32[16,16], index: 0, kind: input, shape index: {}]
  %s1 = inlined_call_operand.vmem [shape: f32[128,128], index: 1, kind: input, shape index: {}]
  %s2 = inlined_call_operand.vmem [shape: f32[128,8], index: 2, kind: input, shape index: {}]
  %s3 = inlined_call_operand.vmem [shape: f32[16,128], index: 3, kind: input, shape index: {}]
  %s4 = inlined_call_operand.vmem [shape: f32[16,128], index: 4, kind: input, shape index: {}]
  %s5 = inlined_call_operand.vmem [shape: f32[1,1,8], index: 5, kind: output, shape index: {}]
  %s6 = sld [smem:[#allocation0]]
  $region30: #{mssim.1} parent=0
    _
  %s8 = ssub.s32 1, %s6
  %s9 = scalar_select 0, %s8, %s6
  // Predicated region
  $region2: #{mssim.1} parent=0 // pred_check
    _
  $region3: #{mssim.1} parent=0 // pred_check_branch
    %11 = sbr.rel (0) target = $region5
  $region4: #{mssim.1} parent=0 // pred_region
    _
  $region5: #{mssim.1} parent=0 // pred_fallthru
    _
  // Predicated region
  $region6: #{mssim.1} parent=0 // pred_check
    _
  $region7: #{mssim.1} parent=0 // pred_check_branch
    %13 = sbr.rel (0) target = $region9
  $region8: #{mssim.1} parent=0 // pred_region
    _
  $region9: #{mssim.1} parent=0 // pred_fallthru
    _
  // Predicated region
  $region10: #{mssim.1} parent=0 // pred_check
    _
  $region11: #{mssim.1} parent=0 // pred_check_branch
    %15 = sbr.rel (0) target = $region13
  $region12: #{mssim.1} parent=0 // pred_region
    _
  $region13: #{mssim.1} parent=0 // pred_fallthru
    _
  // Predicated region
  $region14: #{mssim.1} parent=0 // pred_check
    _
  $region15: #{mssim.1} parent=0 // pred_check_branch
    %17 = sbr.rel (0) target = $region17
  $region16: #{mssim.1} parent=0 // pred_region
    _
  $region17: #{mssim.1} parent=0 // pred_fallthru
    _
  // Predicated region
  $region18: #{mssim.1} parent=0 // pred_check
    _
  $region19: #{mssim.1} parent=0 // pred_check_branch
    %19 = sbr.rel (0) target = $region21
  $region20: #{mssim.1} parent=0 // pred_region
    _
  $region21: #{mssim.1} parent=0 // pred_fallthru
    _
  %v20 = vld [vmem:[%s3] sm:$0xff]
  %v21 = vld [vmem:[%s3 + $0x8] sm:$0xff]
  %v22 = vld [vmem:[%s4] sm:$0xff]
  %v23 = vld [vmem:[%s4 + $0x8] sm:$0xff]
  %v24 = vld [vmem:[%s0] sm:$0xff]
  %v25 = vld [vmem:[%s0 + $0x8] sm:$0xff]
  %v26 = vld [vmem:[%s1] sm:$0xff]
  %v27 = vld [vmem:[%s1 + $0x8] sm:$0xff]
  %v28 = vld [vmem:[%s1 + $0x10] sm:$0xff]
  %v29 = vld [vmem:[%s1 + $0x18] sm:$0xff]
  %v30 = vld [vmem:[%s1 + $0x20] sm:$0xff]
  %v31 = vld [vmem:[%s1 + $0x28] sm:$0xff]
  %v32 = vld [vmem:[%s1 + $0x30] sm:$0xff]
  %v33 = vld [vmem:[%s1 + $0x38] sm:$0xff]
  %v34 = vld [vmem:[%s1 + $0x40] sm:$0xff]
  %v35 = vld [vmem:[%s1 + $0x48] sm:$0xff]
  %v36 = vld [vmem:[%s1 + $0x50] sm:$0xff]
  %v37 = vld [vmem:[%s1 + $0x58] sm:$0xff]
  %v38 = vld [vmem:[%s1 + $0x60] sm:$0xff]
  %v39 = vld [vmem:[%s1 + $0x68] sm:$0xff]
  %v40 = vld [vmem:[%s1 + $0x70] sm:$0xff]
  %v41 = vld [vmem:[%s1 + $0x78] sm:$0xff]
  %v42 = vld [vmem:[%s2] sm:$0xff]
  %v43 = vld [vmem:[%s2 + $0x8] sm:$0xff]
  %v44 = vld [vmem:[%s2 + $0x10] sm:$0xff]
  %v45 = vld [vmem:[%s2 + $0x18] sm:$0xff]
  %v46 = vld [vmem:[%s2 + $0x20] sm:$0xff]
  %v47 = vld [vmem:[%s2 + $0x28] sm:$0xff]
  %v48 = vld [vmem:[%s2 + $0x30] sm:$0xff]
  %v49 = vld [vmem:[%s2 + $0x38] sm:$0xff]
  %v50 = vld [vmem:[%s2 + $0x40] sm:$0xff]
  %v51 = vld [vmem:[%s2 + $0x48] sm:$0xff]
  %v52 = vld [vmem:[%s2 + $0x50] sm:$0xff]
  %v53 = vld [vmem:[%s2 + $0x58] sm:$0xff]
  %v54 = vld [vmem:[%s2 + $0x60] sm:$0xff]
  %v55 = vld [vmem:[%s2 + $0x68] sm:$0xff]
  %v56 = vld [vmem:[%s2 + $0x70] sm:$0xff]
  %v57 = vld [vmem:[%s2 + $0x78] sm:$0xff]
  %v58 = vmul.f32 %v20, %v20
  %v59 = vmul.f32 %v21, %v21
  %v60 = vmul.f32 %v22, %v22
  %v61 = vmul.f32 %v23, %v23
  %v62 = vmul.f32 %v20, %v22
  %v63 = vmul.f32 %v21, %v23
  %64 = vmatprep.subr.mxu0 0.0
  %v65 = vand.u32 %v26, 4294901760
  %66 = vmatpush1.msra.mxu0 %v65
  %67 = vmatprep.subr.mxu0 0.0
  %v68 = vand.u32 %v27, 4294901760
  %69 = vmatpush1.msra.mxu0 %v68
  %70 = vmatprep.subr.mxu0 0.0
  %v71 = vand.u32 %v28, 4294901760
  %72 = vmatpush1.msra.mxu0 %v71
  %73 = vmatprep.subr.mxu0 0.0
  %v74 = vand.u32 %v29, 4294901760
  %75 = vmatpush1.msra.mxu0 %v74
  %76 = vmatprep.subr.mxu0 0.0
  %v77 = vand.u32 %v30, 4294901760
  %78 = vmatpush1.msra.mxu0 %v77
  %79 = vmatprep.subr.mxu0 0.0
  %v80 = vand.u32 %v31, 4294901760
  %81 = vmatpush1.msra.mxu0 %v80
  %82 = vmatprep.subr.mxu0 0.0
  %v83 = vand.u32 %v32, 4294901760
  %84 = vmatpush1.msra.mxu0 %v83
  %85 = vmatprep.subr.mxu0 0.0
  %v86 = vand.u32 %v33, 4294901760
  %87 = vmatpush1.msra.mxu0 %v86
  %88 = vmatprep.subr.mxu0 0.0
  %v89 = vand.u32 %v34, 4294901760
  %90 = vmatpush1.msra.mxu0 %v89
  %91 = vmatprep.subr.mxu0 0.0
  %v92 = vand.u32 %v35, 4294901760
  %93 = vmatpush1.msra.mxu0 %v92
  %94 = vmatprep.subr.mxu0 0.0
  %v95 = vand.u32 %v36, 4294901760
  %96 = vmatpush1.msra.mxu0 %v95
  %97 = vmatprep.subr.mxu0 0.0
  %v98 = vand.u32 %v37, 4294901760
  %99 = vmatpush1.msra.mxu0 %v98
  %100 = vmatprep.subr.mxu0 0.0
  %v101 = vand.u32 %v38, 4294901760
  %102 = vmatpush1.msra.mxu0 %v101
  %103 = vmatprep.subr.mxu0 0.0
  %v104 = vand.u32 %v39, 4294901760
  %105 = vmatpush1.msra.mxu0 %v104
  %106 = vmatprep.subr.mxu0 0.0
  %v107 = vand.u32 %v40, 4294901760
  %108 = vmatpush1.msra.mxu0 %v107
  %109 = vmatprep.subr.mxu0 0.0
  %v110 = vand.u32 %v41, 4294901760
  %111 = vmatpush1.msra.mxu0 %v110
  %112 = vmatprep.subr.mxu0 0.0
  %113 = vmatpush1.msra.mxu0 0.0
  %114 = vmatprep.subr.mxu0 0.0
  %115 = vmatpush1.msra.mxu0 0.0
  %116 = vmatprep.subr.mxu0 0.0
  %117 = vmatpush1.msra.mxu0 0.0
  %118 = vmatprep.subr.mxu0 0.0
  %119 = vmatpush1.msra.mxu0 0.0
  %120 = vmatprep.subr.mxu0 0.0
  %121 = vmatpush1.msra.mxu0 0.0
  %122 = vmatprep.subr.mxu0 0.0
  %123 = vmatpush1.msra.mxu0 0.0
  %124 = vmatprep.subr.mxu0 0.0
  %125 = vmatpush1.msra.mxu0 0.0
  %126 = vmatprep.subr.mxu0 0.0
  %127 = vmatpush1.msra.mxu0 0.0
  %128 = vmatprep.subr.mxu0 0.0
  %129 = vmatpush1.msra.mxu0 0.0
  %130 = vmatprep.subr.mxu0 0.0
  %131 = vmatpush1.msra.mxu0 0.0
  %132 = vmatprep.subr.mxu0 0.0
  %133 = vmatpush1.msra.mxu0 0.0
  %134 = vmatprep.subr.mxu0 0.0
  %135 = vmatpush1.msra.mxu0 0.0
  %136 = vmatprep.subr.mxu0 0.0
  %137 = vmatpush1.msra.mxu0 0.0
  %138 = vmatprep.subr.mxu0 0.0
  %139 = vmatpush1.msra.mxu0 0.0
  %140 = vmatprep.subr.mxu0 0.0
  %141 = vmatpush1.msra.mxu0 0.0
  %142 = vmatprep.subr.mxu0 0.0
  %143 = vmatpush1.msra.mxu0 0.0
  %144 = vmatprep.mubr.f32.mxu0 0.0
  %v145 = vand.u32 %v20, 4294901760
  %v146 = vsub.f32 %v20, %v145
  %v147 = vand.u32 %v146, 4294901760
  %v148 = vsub.f32 %v146, %v147
  %v149 = vand.u32 %v148, 4294901760
  %150 = vmatmul.mubr.f32.gmra.mrb[0].mxu0 %v149
  %v151 = vpop.f32.mrb[0].mxu0
  %v152 = vadd.f32 0.0, %v151
  %v153 = vpop.f32.mrb[0].mxu0
  %154 = vmatprep.mubr.f32.mxu0 0.0
  %v155 = vand.u32 %v21, 4294901760
  %v156 = vsub.f32 %v21, %v155
  %v157 = vand.u32 %v156, 4294901760
  %v158 = vsub.f32 %v156, %v157
  %v159 = vand.u32 %v158, 4294901760
  %160 = vmatmul.mubr.f32.gmra.mrb[0].mxu0 %v159
  %v161 = vpop.f32.mrb[0].mxu0
  %v162 = vadd.f32 0.0, %v161
  %v163 = vpop.f32.mrb[0].mxu0
  %164 = vmatprep.mubr.f32.mxu0 0.0
  %v165 = vand.u32 %v22, 4294901760
  %v166 = vsub.f32 %v22, %v165
  %v167 = vand.u32 %v166, 4294901760
  %v168 = vsub.f32 %v166, %v167
  %v169 = vand.u32 %v168, 4294901760
  %170 = vmatmul.mubr.f32.gmra.mrb[0].mxu0 %v169
  %v171 = vpop.f32.mrb[0].mxu0
  %v172 = vadd.f32 0.0, %v171
  %v173 = vpop.f32.mrb[0].mxu0
  %174 = vmatprep.mubr.f32.mxu0 0.0
  %v175 = vand.u32 %v23, 4294901760
  %v176 = vsub.f32 %v23, %v175
  %v177 = vand.u32 %v176, 4294901760
  %v178 = vsub.f32 %v176, %v177
  %v179 = vand.u32 %v178, 4294901760
  %180 = vmatmul.mubr.f32.gmra.mrb[0].mxu0 %v179
  %v181 = vpop.f32.mrb[0].mxu0
  %v182 = vadd.f32 0.0, %v181
  %v183 = vpop.f32.mrb[0].mxu0
  %184 = vmatprep.mubr.f32.mxu0 0.0
  %v185 = vand.u32 %v58, 4294901760
  %v186 = vsub.f32 %v58, %v185
  %v187 = vand.u32 %v186, 4294901760
  %v188 = vsub.f32 %v186, %v187
  %v189 = vand.u32 %v188, 4294901760
  %190 = vmatmul.mubr.f32.gmra.mrb[0].mxu0 %v189
  %v191 = vpop.f32.mrb[0].mxu0
  %v192 = vadd.f32 0.0, %v191
  %v193 = vpop.f32.mrb[0].mxu0
  %194 = vmatprep.mubr.f32.mxu0 0.0
  %v195 = vand.u32 %v59, 4294901760
  %v196 = vsub.f32 %v59, %v195
  %v197 = vand.u32 %v196, 4294901760
  %v198 = vsub.f32 %v196, %v197
  %v199 = vand.u32 %v198, 4294901760
  %200 = vmatmul.mubr.f32.gmra.mrb[0].mxu0 %v199
  %v201 = vpop.f32.mrb[0].mxu0
  %v202 = vadd.f32 0.0, %v201
  %v203 = vpop.f32.mrb[0].mxu0
  %204 = vmatprep.mubr.f32.mxu0 0.0
  %v205 = vand.u32 %v60, 4294901760
  %v206 = vsub.f32 %v60, %v205
  %v207 = vand.u32 %v206, 4294901760
  %v208 = vsub.f32 %v206, %v207
  %v209 = vand.u32 %v208, 4294901760
  %210 = vmatmul.mubr.f32.gmra.mrb[0].mxu0 %v209
  %v211 = vpop.f32.mrb[0].mxu0
  %v212 = vadd.f32 0.0, %v211
  %v213 = vpop.f32.mrb[0].mxu0
  %214 = vmatprep.mubr.f32.mxu0 0.0
  %v215 = vand.u32 %v61, 4294901760
  %v216 = vsub.f32 %v61, %v215
  %v217 = vand.u32 %v216, 4294901760
  %v218 = vsub.f32 %v216, %v217
  %v219 = vand.u32 %v218, 4294901760
  %220 = vmatmul.mubr.f32.gmra.mrb[0].mxu0 %v219
  %v221 = vpop.f32.mrb[0].mxu0
  %v222 = vadd.f32 0.0, %v221
  %v223 = vpop.f32.mrb[0].mxu0
  %224 = vmatprep.mubr.f32.mxu0 0.0
  %v225 = vand.u32 %v62, 4294901760
  %v226 = vsub.f32 %v62, %v225
  %v227 = vand.u32 %v226, 4294901760
  %v228 = vsub.f32 %v226, %v227
  %v229 = vand.u32 %v228, 4294901760
  %230 = vmatmul.mubr.f32.gmra.mrb[0].mxu0 %v229
  %v231 = vpop.f32.mrb[0].mxu0
  %v232 = vadd.f32 0.0, %v231
  %v233 = vpop.f32.mrb[0].mxu0
  %234 = vmatprep.mubr.f32.mxu0 0.0
  %v235 = vand.u32 %v63, 4294901760
  %v236 = vsub.f32 %v63, %v235
  %v237 = vand.u32 %v236, 4294901760
  %v238 = vsub.f32 %v236, %v237
  %v239 = vand.u32 %v238, 4294901760
  %240 = vmatmul.mubr.f32.gmra.mrb[0].mxu0 %v239
  %v241 = vpop.f32.mrb[0].mxu0
  %v242 = vadd.f32 0.0, %v241
  %v243 = vpop.f32.mrb[0].mxu0
  %244 = vdwg.mxu0
  %245 = vmatprep.subr.mxu0 0.0
  %v246 = vand.u32 %v26, 4294901760
  %v247 = vsub.f32 %v26, %v246
  %v248 = vand.u32 %v247, 4294901760
  %v249 = vsub.f32 %v247, %v248
  %v250 = vand.u32 %v249, 4294901760
  %251 = vmatpush1.msra.mxu0 %v250
  %252 = vmatprep.subr.mxu0 0.0
  %v253 = vand.u32 %v27, 4294901760
  %v254 = vsub.f32 %v27, %v253
  %v255 = vand.u32 %v254, 4294901760
  %v256 = vsub.f32 %v254, %v255
  %v257 = vand.u32 %v256, 4294901760
  %258 = vmatpush1.msra.mxu0 %v257
  %259 = vmatprep.subr.mxu0 0.0
  %v260 = vand.u32 %v28, 4294901760
  %v261 = vsub.f32 %v28, %v260
  %v262 = vand.u32 %v261, 4294901760
  %v263 = vsub.f32 %v261, %v262
  %v264 = vand.u32 %v263, 4294901760
  %265 = vmatpush1.msra.mxu0 %v264
  %266 = vmatprep.subr.mxu0 0.0
  %v267 = vand.u32 %v29, 4294901760
  %v268 = vsub.f32 %v29, %v267
  %v269 = vand.u32 %v268, 4294901760
  %v270 = vsub.f32 %v268, %v269
  %v271 = vand.u32 %v270, 4294901760
  %272 = vmatpush1.msra.mxu0 %v271
  %273 = vmatprep.subr.mxu0 0.0
  %v274 = vand.u32 %v30, 4294901760
  %v275 = vsub.f32 %v30, %v274
  %v276 = vand.u32 %v275, 4294901760
  %v277 = vsub.f32 %v275, %v276
  %v278 = vand.u32 %v277, 4294901760
  %279 = vmatpush1.msra.mxu0 %v278
  %280 = vmatprep.subr.mxu0 0.0
  %v281 = vand.u32 %v31, 4294901760
  %v282 = vsub.f32 %v31, %v281
  %v283 = vand.u32 %v282, 4294901760
  %v284 = vsub.f32 %v282, %v283
  %v285 = vand.u32 %v284, 4294901760
  %286 = vmatpush1.msra.mxu0 %v285
  %287 = vmatprep.subr.mxu0 0.0
  %v288 = vand.u32 %v32, 4294901760
  %v289 = vsub.f32 %v32, %v288
  %v290 = vand.u32 %v289, 4294901760
  %v291 = vsub.f32 %v289, %v290
  %v292 = vand.u32 %v291, 4294901760
  %293 = vmatpush1.msra.mxu0 %v292
  %294 = vmatprep.subr.mxu0 0.0
  %v295 = vand.u32 %v33, 4294901760
  %v296 = vsub.f32 %v33, %v295
  %v297 = vand.u32 %v296, 4294901760
  %v298 = vsub.f32 %v296, %v297
  %v299 = vand.u32 %v298, 4294901760
  %300 = vmatpush1.msra.mxu0 %v299
  %301 = vmatprep.subr.mxu0 0.0
  %v302 = vand.u32 %v34, 4294901760
  %v303 = vsub.f32 %v34, %v302
  %v304 = vand.u32 %v303, 4294901760
  %v305 = vsub.f32 %v303, %v304
  %v306 = vand.u32 %v305, 4294901760
  %307 = vmatpush1.msra.mxu0 %v306
  %308 = vmatprep.subr.mxu0 0.0
  %v309 = vand.u32 %v35, 4294901760
  %v310 = vsub.f32 %v35, %v309
  %v311 = vand.u32 %v310, 4294901760
  %v312 = vsub.f32 %v310, %v311
  %v313 = vand.u32 %v312, 4294901760
  %314 = vmatpush1.msra.mxu0 %v313
  %315 = vmatprep.subr.mxu0 0.0
  %v316 = vand.u32 %v36, 4294901760
  %v317 = vsub.f32 %v36, %v316
  %v318 = vand.u32 %v317, 4294901760
  %v319 = vsub.f32 %v317, %v318
  %v320 = vand.u32 %v319, 4294901760
  %321 = vmatpush1.msra.mxu0 %v320
  %322 = vmatprep.subr.mxu0 0.0
  %v323 = vand.u32 %v37, 4294901760
  %v324 = vsub.f32 %v37, %v323
  %v325 = vand.u32 %v324, 4294901760
  %v326 = vsub.f32 %v324, %v325
  %v327 = vand.u32 %v326, 4294901760
  %328 = vmatpush1.msra.mxu0 %v327
  %329 = vmatprep.subr.mxu0 0.0
  %v330 = vand.u32 %v38, 4294901760
  %v331 = vsub.f32 %v38, %v330
  %v332 = vand.u32 %v331, 4294901760
  %v333 = vsub.f32 %v331, %v332
  %v334 = vand.u32 %v333, 4294901760
  %335 = vmatpush1.msra.mxu0 %v334
  %336 = vmatprep.subr.mxu0 0.0
  %v337 = vand.u32 %v39, 4294901760
  %v338 = vsub.f32 %v39, %v337
  %v339 = vand.u32 %v338, 4294901760
  %v340 = vsub.f32 %v338, %v339
  %v341 = vand.u32 %v340, 4294901760
  %342 = vmatpush1.msra.mxu0 %v341
  %343 = vmatprep.subr.mxu0 0.0
  %v344 = vand.u32 %v40, 4294901760
  %v345 = vsub.f32 %v40, %v344
  %v346 = vand.u32 %v345, 4294901760
  %v347 = vsub.f32 %v345, %v346
  %v348 = vand.u32 %v347, 4294901760
  %349 = vmatpush1.msra.mxu0 %v348
  %350 = vmatprep.subr.mxu0 0.0
  %v351 = vand.u32 %v41, 4294901760
  %v352 = vsub.f32 %v41, %v351
  %v353 = vand.u32 %v352, 4294901760
  %v354 = vsub.f32 %v352, %v353
  %v355 = vand.u32 %v354, 4294901760
  %356 = vmatpush1.msra.mxu0 %v355
  %357 = vmatprep.subr.mxu0 0.0
  %358 = vmatpush1.msra.mxu0 0.0
  %359 = vmatprep.subr.mxu0 0.0
  %360 = vmatpush1.msra.mxu0 0.0
  %361 = vmatprep.subr.mxu0 0.0
  %362 = vmatpush1.msra.mxu0 0.0
  %363 = vmatprep.subr.mxu0 0.0
  %364 = vmatpush1.msra.mxu0 0.0
  %365 = vmatprep.subr.mxu0 0.0
  %366 = vmatpush1.msra.mxu0 0.0
  %367 = vmatprep.subr.mxu0 0.0
  %368 = vmatpush1.msra.mxu0 0.0
  %369 = vmatprep.subr.mxu0 0.0
  %370 = vmatpush1.msra.mxu0 0.0
  %371 = vmatprep.subr.mxu0 0.0
  %372 = vmatpush1.msra.mxu0 0.0
  %373 = vmatprep.subr.mxu0 0.0
  %374 = vmatpush1.msra.mxu0 0.0
  %375 = vmatprep.subr.mxu0 0.0
  %376 = vmatpush1.msra.mxu0 0.0
  %377 = vmatprep.subr.mxu0 0.0
  %378 = vmatpush1.msra.mxu0 0.0
  %379 = vmatprep.subr.mxu0 0.0
  %380 = vmatpush1.msra.mxu0 0.0
  %381 = vmatprep.subr.mxu0 0.0
  %382 = vmatpush1.msra.mxu0 0.0
  %383 = vmatprep.subr.mxu0 0.0
  %384 = vmatpush1.msra.mxu0 0.0
  %385 = vmatprep.subr.mxu0 0.0
  %386 = vmatpush1.msra.mxu0 0.0
  %387 = vmatprep.subr.mxu0 0.0
  %388 = vmatpush1.msra.mxu0 0.0
  %389 = vmatprep.mubr.f32.mxu0 0.0
  %v390 = vand.u32 %v20, 4294901760
  %391 = vmatmul.mubr.f32.gmra.mrb[0].mxu0 %v390
  %v392 = vpop.f32.mrb[0].mxu0
  %v393 = vadd.f32 %v152, %v392
  %v394 = vpop.f32.mrb[0].mxu0
  %395 = vmatprep.mubr.f32.mxu0 0.0
  %v396 = vand.u32 %v21, 4294901760
  %397 = vmatmul.mubr.f32.gmra.mrb[0].mxu0 %v396
  %v398 = vpop.f32.mrb[0].mxu0
  %v399 = vadd.f32 %v162, %v398
  %v400 = vpop.f32.mrb[0].mxu0
  %401 = vmatprep.mubr.f32.mxu0 0.0
  %v402 = vand.u32 %v22, 4294901760
  %403 = vmatmul.mubr.f32.gmra.mrb[0].mxu0 %v402
  %v404 = vpop.f32.mrb[0].mxu0
  %v405 = vadd.f32 %v172, %v404
  %v406 = vpop.f32.mrb[0].mxu0
  %407 = vmatprep.mubr.f32.mxu0 0.0
  %v408 = vand.u32 %v23, 4294901760
  %409 = vmatmul.mubr.f32.gmra.mrb[0].mxu0 %v408
  %v410 = vpop.f32.mrb[0].mxu0
  %v411 = vadd.f32 %v182, %v410
  %v412 = vpop.f32.mrb[0].mxu0
  %413 = vmatprep.mubr.f32.mxu0 0.0
  %v414 = vand.u32 %v58, 4294901760
  %415 = vmatmul.mubr.f32.gmra.mrb[0].mxu0 %v414
  %v416 = vpop.f32.mrb[0].mxu0
  %v417 = vadd.f32 %v192, %v416
  %v418 = vpop.f32.mrb[0].mxu0
  %419 = vmatprep.mubr.f32.mxu0 0.0
  %v420 = vand.u32 %v59, 4294901760
  %421 = vmatmul.mubr.f32.gmra.mrb[0].mxu0 %v420
  %v422 = vpop.f32.mrb[0].mxu0
  %v423 = vadd.f32 %v202, %v422
  %v424 = vpop.f32.mrb[0].mxu0
  %425 = vmatprep.mubr.f32.mxu0 0.0
  %v426 = vand.u32 %v60, 4294901760
  %427 = vmatmul.mubr.f32.gmra.mrb[0].mxu0 %v426
  %v428 = vpop.f32.mrb[0].mxu0
  %v429 = vadd.f32 %v212, %v428
  %v430 = vpop.f32.mrb[0].mxu0
  %431 = vmatprep.mubr.f32.mxu0 0.0
  %v432 = vand.u32 %v61, 4294901760
  %433 = vmatmul.mubr.f32.gmra.mrb[0].mxu0 %v432
  %v434 = vpop.f32.mrb[0].mxu0
  %v435 = vadd.f32 %v222, %v434
  %v436 = vpop.f32.mrb[0].mxu0
  %437 = vmatprep.mubr.f32.mxu0 0.0
  %v438 = vand.u32 %v62, 4294901760
  %439 = vmatmul.mubr.f32.gmra.mrb[0].mxu0 %v438
  %v440 = vpop.f32.mrb[0].mxu0
  %v441 = vadd.f32 %v232, %v440
  %v442 = vpop.f32.mrb[0].mxu0
  %443 = vmatprep.mubr.f32.mxu0 0.0
  %v444 = vand.u32 %v63, 4294901760
  %445 = vmatmul.mubr.f32.gmra.mrb[0].mxu0 %v444
  %v446 = vpop.f32.mrb[0].mxu0
  %v447 = vadd.f32 %v242, %v446
  %v448 = vpop.f32.mrb[0].mxu0
  %449 = vdwg.mxu0
  %450 = vmatprep.subr.mxu0 0.0
  %v451 = vand.u32 %v26, 4294901760
  %v452 = vsub.f32 %v26, %v451
  %453 = vmatpush1.msra.mxu0 %v452
  %454 = vmatprep.subr.mxu0 0.0
  %v455 = vand.u32 %v27, 4294901760
  %v456 = vsub.f32 %v27, %v455
  %457 = vmatpush1.msra.mxu0 %v456
  %458 = vmatprep.subr.mxu0 0.0
  %v459 = vand.u32 %v28, 4294901760
  %v460 = vsub.f32 %v28, %v459
  %461 = vmatpush1.msra.mxu0 %v460
  %462 = vmatprep.subr.mxu0 0.0
  %v463 = vand.u32 %v29, 4294901760
  %v464 = vsub.f32 %v29, %v463
  %465 = vmatpush1.msra.mxu0 %v464
  %466 = vmatprep.subr.mxu0 0.0
  %v467 = vand.u32 %v30, 4294901760
  %v468 = vsub.f32 %v30, %v467
  %469 = vmatpush1.msra.mxu0 %v468
  %470 = vmatprep.subr.mxu0 0.0
  %v471 = vand.u32 %v31, 4294901760
  %v472 = vsub.f32 %v31, %v471
  %473 = vmatpush1.msra.mxu0 %v472
  %474 = vmatprep.subr.mxu0 0.0
  %v475 = vand.u32 %v32, 4294901760
  %v476 = vsub.f32 %v32, %v475
  %477 = vmatpush1.msra.mxu0 %v476
  %478 = vmatprep.subr.mxu0 0.0
  %v479 = vand.u32 %v33, 4294901760
  %v480 = vsub.f32 %v33, %v479
  %481 = vmatpush1.msra.mxu0 %v480
  %482 = vmatprep.subr.mxu0 0.0
  %v483 = vand.u32 %v34, 4294901760
  %v484 = vsub.f32 %v34, %v483
  %485 = vmatpush1.msra.mxu0 %v484
  %486 = vmatprep.subr.mxu0 0.0
  %v487 = vand.u32 %v35, 4294901760
  %v488 = vsub.f32 %v35, %v487
  %489 = vmatpush1.msra.mxu0 %v488
  %490 = vmatprep.subr.mxu0 0.0
  %v491 = vand.u32 %v36, 4294901760
  %v492 = vsub.f32 %v36, %v491
  %493 = vmatpush1.msra.mxu0 %v492
  %494 = vmatprep.subr.mxu0 0.0
  %v495 = vand.u32 %v37, 4294901760
  %v496 = vsub.f32 %v37, %v495
  %497 = vmatpush1.msra.mxu0 %v496
  %498 = vmatprep.subr.mxu0 0.0
  %v499 = vand.u32 %v38, 4294901760
  %v500 = vsub.f32 %v38, %v499
  %501 = vmatpush1.msra.mxu0 %v500
  %502 = vmatprep.subr.mxu0 0.0
  %v503 = vand.u32 %v39, 4294901760
  %v504 = vsub.f32 %v39, %v503
  %505 = vmatpush1.msra.mxu0 %v504
  %506 = vmatprep.subr.mxu0 0.0
  %v507 = vand.u32 %v40, 4294901760
  %v508 = vsub.f32 %v40, %v507
  %509 = vmatpush1.msra.mxu0 %v508
  %510 = vmatprep.subr.mxu0 0.0
  %v511 = vand.u32 %v41, 4294901760
  %v512 = vsub.f32 %v41, %v511
  %513 = vmatpush1.msra.mxu0 %v512
  %514 = vmatprep.subr.mxu0 0.0
  %515 = vmatpush1.msra.mxu0 0.0
  %516 = vmatprep.subr.mxu0 0.0
  %517 = vmatpush1.msra.mxu0 0.0
  %518 = vmatprep.subr.mxu0 0.0
  %519 = vmatpush1.msra.mxu0 0.0
  %520 = vmatprep.subr.mxu0 0.0
  %521 = vmatpush1.msra.mxu0 0.0
  %522 = vmatprep.subr.mxu0 0.0
  %523 = vmatpush1.msra.mxu0 0.0
  %524 = vmatprep.subr.mxu0 0.0
  %525 = vmatpush1.msra.mxu0 0.0
  %526 = vmatprep.subr.mxu0 0.0
  %527 = vmatpush1.msra.mxu0 0.0
  %528 = vmatprep.subr.mxu0 0.0
  %529 = vmatpush1.msra.mxu0 0.0
  %530 = vmatprep.subr.mxu0 0.0
  %531 = vmatpush1.msra.mxu0 0.0
  %532 = vmatprep.subr.mxu0 0.0
  %533 = vmatpush1.msra.mxu0 0.0
  %534 = vmatprep.subr.mxu0 0.0
  %535 = vmatpush1.msra.mxu0 0.0
  %536 = vmatprep.subr.mxu0 0.0
  %537 = vmatpush1.msra.mxu0 0.0
  %538 = vmatprep.subr.mxu0 0.0
  %539 = vmatpush1.msra.mxu0 0.0
  %540 = vmatprep.subr.mxu0 0.0
  %541 = vmatpush1.msra.mxu0 0.0
  %542 = vmatprep.subr.mxu0 0.0
  %543 = vmatpush1.msra.mxu0 0.0
  %544 = vmatprep.subr.mxu0 0.0
  %545 = vmatpush1.msra.mxu0 0.0
  %546 = vmatprep.mubr.f32.mxu0 0.0
  %v547 = vand.u32 %v20, 4294901760
  %v548 = vsub.f32 %v20, %v547
  %549 = vmatmul.mubr.f32.gmra.mrb[0].mxu0 %v548
  %v550 = vpop.f32.mrb[0].mxu0
  %v551 = vadd.f32 %v393, %v550
  %v552 = vpop.f32.mrb[0].mxu0
  %553 = vmatprep.mubr.f32.mxu0 0.0
  %v554 = vand.u32 %v21, 4294901760
  %v555 = vsub.f32 %v21, %v554
  %556 = vmatmul.mubr.f32.gmra.mrb[0].mxu0 %v555
  %v557 = vpop.f32.mrb[0].mxu0
  %v558 = vadd.f32 %v399, %v557
  %v559 = vpop.f32.mrb[0].mxu0
  %560 = vmatprep.mubr.f32.mxu0 0.0
  %v561 = vand.u32 %v22, 4294901760
  %v562 = vsub.f32 %v22, %v561
  %563 = vmatmul.mubr.f32.gmra.mrb[0].mxu0 %v562
  %v564 = vpop.f32.mrb[0].mxu0
  %v565 = vadd.f32 %v405, %v564
  %v566 = vpop.f32.mrb[0].mxu0
  %567 = vmatprep.mubr.f32.mxu0 0.0
  %v568 = vand.u32 %v23, 4294901760
  %v569 = vsub.f32 %v23, %v568
  %570 = vmatmul.mubr.f32.gmra.mrb[0].mxu0 %v569
  %v571 = vpop.f32.mrb[0].mxu0
  %v572 = vadd.f32 %v411, %v571
  %v573 = vpop.f32.mrb[0].mxu0
  %574 = vmatprep.mubr.f32.mxu0 0.0
  %v575 = vand.u32 %v58, 4294901760
  %v576 = vsub.f32 %v58, %v575
  %577 = vmatmul.mubr.f32.gmra.mrb[0].mxu0 %v576
  %v578 = vpop.f32.mrb[0].mxu0
  %v579 = vadd.f32 %v417, %v578
  %v580 = vpop.f32.mrb[0].mxu0
  %581 = vmatprep.mubr.f32.mxu0 0.0
  %v582 = vand.u32 %v59, 4294901760
  %v583 = vsub.f32 %v59, %v582
  %584 = vmatmul.mubr.f32.gmra.mrb[0].mxu0 %v583
  %v585 = vpop.f32.mrb[0].mxu0
  %v586 = vadd.f32 %v423, %v585
  %v587 = vpop.f32.mrb[0].mxu0
  %588 = vmatprep.mubr.f32.mxu0 0.0
  %v589 = vand.u32 %v60, 4294901760
  %v590 = vsub.f32 %v60, %v589
  %591 = vmatmul.mubr.f32.gmra.mrb[0].mxu0 %v590
  %v592 = vpop.f32.mrb[0].mxu0
  %v593 = vadd.f32 %v429, %v592
  %v594 = vpop.f32.mrb[0].mxu0
  %595 = vmatprep.mubr.f32.mxu0 0.0
  %v596 = vand.u32 %v61, 4294901760
  %v597 = vsub.f32 %v61, %v596
  %598 = vmatmul.mubr.f32.gmra.mrb[0].mxu0 %v597
  %v599 = vpop.f32.mrb[0].mxu0
  %v600 = vadd.f32 %v435, %v599
  %v601 = vpop.f32.mrb[0].mxu0
  %602 = vmatprep.mubr.f32.mxu0 0.0
  %v603 = vand.u32 %v62, 4294901760
  %v604 = vsub.f32 %v62, %v603
  %605 = vmatmul.mubr.f32.gmra.mrb[0].mxu0 %v604
  %v606 = vpop.f32.mrb[0].mxu0
  %v607 = vadd.f32 %v441, %v606
  %v608 = vpop.f32.mrb[0].mxu0
  %609 = vmatprep.mubr.f32.mxu0 0.0
  %v610 = vand.u32 %v63, 4294901760
  %v611 = vsub.f32 %v63, %v610
  %612 = vmatmul.mubr.f32.gmra.mrb[0].mxu0 %v611
  %v613 = vpop.f32.mrb[0].mxu0
  %v614 = vadd.f32 %v447, %v613
  %v615 = vpop.f32.mrb[0].mxu0
  %616 = vdwg.mxu0
  %617 = vmatprep.subr.mxu0 0.0
  %v618 = vand.u32 %v26, 4294901760
  %619 = vmatpush1.msra.mxu0 %v618
  %620 = vmatprep.subr.mxu0 0.0
  %v621 = vand.u32 %v27, 4294901760
  %622 = vmatpush1.msra.mxu0 %v621
  %623 = vmatprep.subr.mxu0 0.0
  %v624 = vand.u32 %v28, 4294901760
  %625 = vmatpush1.msra.mxu0 %v624
  %626 = vmatprep.subr.mxu0 0.0
  %v627 = vand.u32 %v29, 4294901760
  %628 = vmatpush1.msra.mxu0 %v627
  %629 = vmatprep.subr.mxu0 0.0
  %v630 = vand.u32 %v30, 4294901760
  %631 = vmatpush1.msra.mxu0 %v630
  %632 = vmatprep.subr.mxu0 0.0
  %v633 = vand.u32 %v31, 4294901760
  %634 = vmatpush1.msra.mxu0 %v633
  %635 = vmatprep.subr.mxu0 0.0
  %v636 = vand.u32 %v32, 4294901760
  %637 = vmatpush1.msra.mxu0 %v636
  %638 = vmatprep.subr.mxu0 0.0
  %v639 = vand.u32 %v33, 4294901760
  %640 = vmatpush1.msra.mxu0 %v639
  %641 = vmatprep.subr.mxu0 0.0
  %v642 = vand.u32 %v34, 4294901760
  %643 = vmatpush1.msra.mxu0 %v642
  %644 = vmatprep.subr.mxu0 0.0
  %v645 = vand.u32 %v35, 4294901760
  %646 = vmatpush1.msra.mxu0 %v645
  %647 = vmatprep.subr.mxu0 0.0
  %v648 = vand.u32 %v36, 4294901760
  %649 = vmatpush1.msra.mxu0 %v648
  %650 = vmatprep.subr.mxu0 0.0
  %v651 = vand.u32 %v37, 4294901760
  %652 = vmatpush1.msra.mxu0 %v651
  %653 = vmatprep.subr.mxu0 0.0
  %v654 = vand.u32 %v38, 4294901760
  %655 = vmatpush1.msra.mxu0 %v654
  %656 = vmatprep.subr.mxu0 0.0
  %v657 = vand.u32 %v39, 4294901760
  %658 = vmatpush1.msra.mxu0 %v657
  %659 = vmatprep.subr.mxu0 0.0
  %v660 = vand.u32 %v40, 4294901760
  %661 = vmatpush1.msra.mxu0 %v660
  %662 = vmatprep.subr.mxu0 0.0
  %v663 = vand.u32 %v41, 4294901760
  %664 = vmatpush1.msra.mxu0 %v663
  %665 = vmatprep.subr.mxu0 0.0
  %666 = vmatpush1.msra.mxu0 0.0
  %667 = vmatprep.subr.mxu0 0.0
  %668 = vmatpush1.msra.mxu0 0.0
  %669 = vmatprep.subr.mxu0 0.0
  %670 = vmatpush1.msra.mxu0 0.0
  %671 = vmatprep.subr.mxu0 0.0
  %672 = vmatpush1.msra.mxu0 0.0
  %673 = vmatprep.subr.mxu0 0.0
  %674 = vmatpush1.msra.mxu0 0.0
  %675 = vmatprep.subr.mxu0 0.0
  %676 = vmatpush1.msra.mxu0 0.0
  %677 = vmatprep.subr.mxu0 0.0
  %678 = vmatpush1.msra.mxu0 0.0
  %679 = vmatprep.subr.mxu0 0.0
  %680 = vmatpush1.msra.mxu0 0.0
  %681 = vmatprep.subr.mxu0 0.0
  %682 = vmatpush1.msra.mxu0 0.0
  %683 = vmatprep.subr.mxu0 0.0
  %684 = vmatpush1.msra.mxu0 0.0
  %685 = vmatprep.subr.mxu0 0.0
  %686 = vmatpush1.msra.mxu0 0.0
  %687 = vmatprep.subr.mxu0 0.0
  %688 = vmatpush1.msra.mxu0 0.0
  %689 = vmatprep.subr.mxu0 0.0
  %690 = vmatpush1.msra.mxu0 0.0
  %691 = vmatprep.subr.mxu0 0.0
  %692 = vmatpush1.msra.mxu0 0.0
  %693 = vmatprep.subr.mxu0 0.0
  %694 = vmatpush1.msra.mxu0 0.0
  %695 = vmatprep.subr.mxu0 0.0
  %696 = vmatpush1.msra.mxu0 0.0
  %697 = vmatprep.mubr.f32.mxu0 0.0
  %v698 = vand.u32 %v20, 4294901760
  %v699 = vsub.f32 %v20, %v698
  %v700 = vand.u32 %v699, 4294901760
  %701 = vmatmul.mubr.f32.gmra.mrb[0].mxu0 %v700
  %v702 = vpop.f32.mrb[0].mxu0
  %v703 = vadd.f32 %v551, %v702
  %v704 = vpop.f32.mrb[0].mxu0
  %705 = vmatprep.mubr.f32.mxu0 0.0
  %v706 = vand.u32 %v21, 4294901760
  %v707 = vsub.f32 %v21, %v706
  %v708 = vand.u32 %v707, 4294901760
  %709 = vmatmul.mubr.f32.gmra.mrb[0].mxu0 %v708
  %v710 = vpop.f32.mrb[0].mxu0
  %v711 = vadd.f32 %v558, %v710
  %v712 = vpop.f32.mrb[0].mxu0
  %713 = vmatprep.mubr.f32.mxu0 0.0
  %v714 = vand.u32 %v22, 4294901760
  %v715 = vsub.f32 %v22, %v714
  %v716 = vand.u32 %v715, 4294901760
  %717 = vmatmul.mubr.f32.gmra.mrb[0].mxu0 %v716
  %v718 = vpop.f32.mrb[0].mxu0
  %v719 = vadd.f32 %v565, %v718
  %v720 = vpop.f32.mrb[0].mxu0
  %721 = vmatprep.mubr.f32.mxu0 0.0
  %v722 = vand.u32 %v23, 4294901760
  %v723 = vsub.f32 %v23, %v722
  %v724 = vand.u32 %v723, 4294901760
  %725 = vmatmul.mubr.f32.gmra.mrb[0].mxu0 %v724
  %v726 = vpop.f32.mrb[0].mxu0
  %v727 = vadd.f32 %v572, %v726
  %v728 = vpop.f32.mrb[0].mxu0
  %729 = vmatprep.mubr.f32.mxu0 0.0
  %v730 = vand.u32 %v58, 4294901760
  %v731 = vsub.f32 %v58, %v730
  %v732 = vand.u32 %v731, 4294901760
  %733 = vmatmul.mubr.f32.gmra.mrb[0].mxu0 %v732
  %v734 = vpop.f32.mrb[0].mxu0
  %v735 = vadd.f32 %v579, %v734
  %v736 = vpop.f32.mrb[0].mxu0
  %737 = vmatprep.mubr.f32.mxu0 0.0
  %v738 = vand.u32 %v59, 4294901760
  %v739 = vsub.f32 %v59, %v738
  %v740 = vand.u32 %v739, 4294901760
  %741 = vmatmul.mubr.f32.gmra.mrb[0].mxu0 %v740
  %v742 = vpop.f32.mrb[0].mxu0
  %v743 = vadd.f32 %v586, %v742
  %v744 = vpop.f32.mrb[0].mxu0
  %745 = vmatprep.mubr.f32.mxu0 0.0
  %v746 = vand.u32 %v60, 4294901760
  %v747 = vsub.f32 %v60, %v746
  %v748 = vand.u32 %v747, 4294901760
  %749 = vmatmul.mubr.f32.gmra.mrb[0].mxu0 %v748
  %v750 = vpop.f32.mrb[0].mxu0
  %v751 = vadd.f32 %v593, %v750
  %v752 = vpop.f32.mrb[0].mxu0
  %753 = vmatprep.mubr.f32.mxu0 0.0
  %v754 = vand.u32 %v61, 4294901760
  %v755 = vsub.f32 %v61, %v754
  %v756 = vand.u32 %v755, 4294901760
  %757 = vmatmul.mubr.f32.gmra.mrb[0].mxu0 %v756
  %v758 = vpop.f32.mrb[0].mxu0
  %v759 = vadd.f32 %v600, %v758
  %v760 = vpop.f32.mrb[0].mxu0
  %761 = vmatprep.mubr.f32.mxu0 0.0
  %v762 = vand.u32 %v62, 4294901760
  %v763 = vsub.f32 %v62, %v762
  %v764 = vand.u32 %v763, 4294901760
  %765 = vmatmul.mubr.f32.gmra.mrb[0].mxu0 %v764
  %v766 = vpop.f32.mrb[0].mxu0
  %v767 = vadd.f32 %v607, %v766
  %v768 = vpop.f32.mrb[0].mxu0
  %769 = vmatprep.mubr.f32.mxu0 0.0
  %v770 = vand.u32 %v63, 4294901760
  %v771 = vsub.f32 %v63, %v770
  %v772 = vand.u32 %v771, 4294901760
  %773 = vmatmul.mubr.f32.gmra.mrb[0].mxu0 %v772
  %v774 = vpop.f32.mrb[0].mxu0
  %v775 = vadd.f32 %v614, %v774
  %v776 = vpop.f32.mrb[0].mxu0
  %777 = vdwg.mxu0
  %778 = vmatprep.subr.mxu0 0.0
  %v779 = vand.u32 %v26, 4294901760
  %v780 = vsub.f32 %v26, %v779
  %v781 = vand.u32 %v780, 4294901760
  %782 = vmatpush1.msra.mxu0 %v781
  %783 = vmatprep.subr.mxu0 0.0
  %v784 = vand.u32 %v27, 4294901760
  %v785 = vsub.f32 %v27, %v784
  %v786 = vand.u32 %v785, 4294901760
  %787 = vmatpush1.msra.mxu0 %v786
  %788 = vmatprep.subr.mxu0 0.0
  %v789 = vand.u32 %v28, 4294901760
  %v790 = vsub.f32 %v28, %v789
  %v791 = vand.u32 %v790, 4294901760
  %792 = vmatpush1.msra.mxu0 %v791
  %793 = vmatprep.subr.mxu0 0.0
  %v794 = vand.u32 %v29, 4294901760
  %v795 = vsub.f32 %v29, %v794
  %v796 = vand.u32 %v795, 4294901760
  %797 = vmatpush1.msra.mxu0 %v796
  %798 = vmatprep.subr.mxu0 0.0
  %v799 = vand.u32 %v30, 4294901760
  %v800 = vsub.f32 %v30, %v799
  %v801 = vand.u32 %v800, 4294901760
  %802 = vmatpush1.msra.mxu0 %v801
  %803 = vmatprep.subr.mxu0 0.0
  %v804 = vand.u32 %v31, 4294901760
  %v805 = vsub.f32 %v31, %v804
  %v806 = vand.u32 %v805, 4294901760
  %807 = vmatpush1.msra.mxu0 %v806
  %808 = vmatprep.subr.mxu0 0.0
  %v809 = vand.u32 %v32, 4294901760
  %v810 = vsub.f32 %v32, %v809
  %v811 = vand.u32 %v810, 4294901760
  %812 = vmatpush1.msra.mxu0 %v811
  %813 = vmatprep.subr.mxu0 0.0
  %v814 = vand.u32 %v33, 4294901760
  %v815 = vsub.f32 %v33, %v814
  %v816 = vand.u32 %v815, 4294901760
  %817 = vmatpush1.msra.mxu0 %v816
  %818 = vmatprep.subr.mxu0 0.0
  %v819 = vand.u32 %v34, 4294901760
  %v820 = vsub.f32 %v34, %v819
  %v821 = vand.u32 %v820, 4294901760
  %822 = vmatpush1.msra.mxu0 %v821
  %823 = vmatprep.subr.mxu0 0.0
  %v824 = vand.u32 %v35, 4294901760
  %v825 = vsub.f32 %v35, %v824
  %v826 = vand.u32 %v825, 4294901760
  %827 = vmatpush1.msra.mxu0 %v826
  %828 = vmatprep.subr.mxu0 0.0
  %v829 = vand.u32 %v36, 4294901760
  %v830 = vsub.f32 %v36, %v829
  %v831 = vand.u32 %v830, 4294901760
  %832 = vmatpush1.msra.mxu0 %v831
  %833 = vmatprep.subr.mxu0 0.0
  %v834 = vand.u32 %v37, 4294901760
  %v835 = vsub.f32 %v37, %v834
  %v836 = vand.u32 %v835, 4294901760
  %837 = vmatpush1.msra.mxu0 %v836
  %838 = vmatprep.subr.mxu0 0.0
  %v839 = vand.u32 %v38, 4294901760
  %v840 = vsub.f32 %v38, %v839
  %v841 = vand.u32 %v840, 4294901760
  %842 = vmatpush1.msra.mxu0 %v841
  %843 = vmatprep.subr.mxu0 0.0
  %v844 = vand.u32 %v39, 4294901760
  %v845 = vsub.f32 %v39, %v844
  %v846 = vand.u32 %v845, 4294901760
  %847 = vmatpush1.msra.mxu0 %v846
  %848 = vmatprep.subr.mxu0 0.0
  %v849 = vand.u32 %v40, 4294901760
  %v850 = vsub.f32 %v40, %v849
  %v851 = vand.u32 %v850, 4294901760
  %852 = vmatpush1.msra.mxu0 %v851
  %853 = vmatprep.subr.mxu0 0.0
  %v854 = vand.u32 %v41, 4294901760
  %v855 = vsub.f32 %v41, %v854
  %v856 = vand.u32 %v855, 4294901760
  %857 = vmatpush1.msra.mxu0 %v856
  %858 = vmatprep.subr.mxu0 0.0
  %859 = vmatpush1.msra.mxu0 0.0
  %860 = vmatprep.subr.mxu0 0.0
  %861 = vmatpush1.msra.mxu0 0.0
  %862 = vmatprep.subr.mxu0 0.0
  %863 = vmatpush1.msra.mxu0 0.0
  %864 = vmatprep.subr.mxu0 0.0
  %865 = vmatpush1.msra.mxu0 0.0
  %866 = vmatprep.subr.mxu0 0.0
  %867 = vmatpush1.msra.mxu0 0.0
  %868 = vmatprep.subr.mxu0 0.0
  %869 = vmatpush1.msra.mxu0 0.0
  %870 = vmatprep.subr.mxu0 0.0
  %871 = vmatpush1.msra.mxu0 0.0
  %872 = vmatprep.subr.mxu0 0.0
  %873 = vmatpush1.msra.mxu0 0.0
  %874 = vmatprep.subr.mxu0 0.0
  %875 = vmatpush1.msra.mxu0 0.0
  %876 = vmatprep.subr.mxu0 0.0
  %877 = vmatpush1.msra.mxu0 0.0
  %878 = vmatprep.subr.mxu0 0.0
  %879 = vmatpush1.msra.mxu0 0.0
  %880 = vmatprep.subr.mxu0 0.0
  %881 = vmatpush1.msra.mxu0 0.0
  %882 = vmatprep.subr.mxu0 0.0
  %883 = vmatpush1.msra.mxu0 0.0
  %884 = vmatprep.subr.mxu0 0.0
  %885 = vmatpush1.msra.mxu0 0.0
  %886 = vmatprep.subr.mxu0 0.0
  %887 = vmatpush1.msra.mxu0 0.0
  %888 = vmatprep.subr.mxu0 0.0
  %889 = vmatpush1.msra.mxu0 0.0
  %890 = vmatprep.mubr.f32.mxu0 0.0
  %v891 = vand.u32 %v20, 4294901760
  %892 = vmatmul.mubr.f32.gmra.mrb[0].mxu0 %v891
  %v893 = vpop.f32.mrb[0].mxu0
  %v894 = vadd.f32 %v703, %v893
  %v895 = vpop.f32.mrb[0].mxu0
  %896 = vmatprep.mubr.f32.mxu0 0.0
  %v897 = vand.u32 %v21, 4294901760
  %898 = vmatmul.mubr.f32.gmra.mrb[0].mxu0 %v897
  %v899 = vpop.f32.mrb[0].mxu0
  %v900 = vadd.f32 %v711, %v899
  %v901 = vpop.f32.mrb[0].mxu0
  %902 = vmatprep.mubr.f32.mxu0 0.0
  %v903 = vand.u32 %v22, 4294901760
  %904 = vmatmul.mubr.f32.gmra.mrb[0].mxu0 %v903
  %v905 = vpop.f32.mrb[0].mxu0
  %v906 = vadd.f32 %v719, %v905
  %v907 = vpop.f32.mrb[0].mxu0
  %908 = vmatprep.mubr.f32.mxu0 0.0
  %v909 = vand.u32 %v23, 4294901760
  %910 = vmatmul.mubr.f32.gmra.mrb[0].mxu0 %v909
  %v911 = vpop.f32.mrb[0].mxu0
  %v912 = vadd.f32 %v727, %v911
  %v913 = vpop.f32.mrb[0].mxu0
  %914 = vmatprep.mubr.f32.mxu0 0.0
  %v915 = vand.u32 %v58, 4294901760
  %916 = vmatmul.mubr.f32.gmra.mrb[0].mxu0 %v915
  %v917 = vpop.f32.mrb[0].mxu0
  %v918 = vadd.f32 %v735, %v917
  %v919 = vpop.f32.mrb[0].mxu0
  %920 = vmatprep.mubr.f32.mxu0 0.0
  %v921 = vand.u32 %v59, 4294901760
  %922 = vmatmul.mubr.f32.gmra.mrb[0].mxu0 %v921
  %v923 = vpop.f32.mrb[0].mxu0
  %v924 = vadd.f32 %v743, %v923
  %v925 = vpop.f32.mrb[0].mxu0
  %926 = vmatprep.mubr.f32.mxu0 0.0
  %v927 = vand.u32 %v60, 4294901760
  %928 = vmatmul.mubr.f32.gmra.mrb[0].mxu0 %v927
  %v929 = vpop.f32.mrb[0].mxu0
  %v930 = vadd.f32 %v751, %v929
  %v931 = vpop.f32.mrb[0].mxu0
  %932 = vmatprep.mubr.f32.mxu0 0.0
  %v933 = vand.u32 %v61, 4294901760
  %934 = vmatmul.mubr.f32.gmra.mrb[0].mxu0 %v933
  %v935 = vpop.f32.mrb[0].mxu0
  %v936 = vadd.f32 %v759, %v935
  %v937 = vpop.f32.mrb[0].mxu0
  %938 = vmatprep.mubr.f32.mxu0 0.0
  %v939 = vand.u32 %v62, 4294901760
  %940 = vmatmul.mubr.f32.gmra.mrb[0].mxu0 %v939
  %v941 = vpop.f32.mrb[0].mxu0
  %v942 = vadd.f32 %v767, %v941
  %v943 = vpop.f32.mrb[0].mxu0
  %944 = vmatprep.mubr.f32.mxu0 0.0
  %v945 = vand.u32 %v63, 4294901760
  %946 = vmatmul.mubr.f32.gmra.mrb[0].mxu0 %v945
  %v947 = vpop.f32.mrb[0].mxu0
  %v948 = vadd.f32 %v775, %v947
  %v949 = vpop.f32.mrb[0].mxu0
  %950 = vdwg.mxu0
  %951 = vmatprep.subr.mxu0 0.0
  %v952 = vand.u32 %v26, 4294901760
  %953 = vmatpush1.msra.mxu0 %v952
  %954 = vmatprep.subr.mxu0 0.0
  %v955 = vand.u32 %v27, 4294901760
  %956 = vmatpush1.msra.mxu0 %v955
  %957 = vmatprep.subr.mxu0 0.0
  %v958 = vand.u32 %v28, 4294901760
  %959 = vmatpush1.msra.mxu0 %v958
  %960 = vmatprep.subr.mxu0 0.0
  %v961 = vand.u32 %v29, 4294901760
  %962 = vmatpush1.msra.mxu0 %v961
  %963 = vmatprep.subr.mxu0 0.0
  %v964 = vand.u32 %v30, 4294901760
  %965 = vmatpush1.msra.mxu0 %v964
  %966 = vmatprep.subr.mxu0 0.0
  %v967 = vand.u32 %v31, 4294901760
  %968 = vmatpush1.msra.mxu0 %v967
  %969 = vmatprep.subr.mxu0 0.0
  %v970 = vand.u32 %v32, 4294901760
  %971 = vmatpush1.msra.mxu0 %v970
  %972 = vmatprep.subr.mxu0 0.0
  %v973 = vand.u32 %v33, 4294901760
  %974 = vmatpush1.msra.mxu0 %v973
  %975 = vmatprep.subr.mxu0 0.0
  %v976 = vand.u32 %v34, 4294901760
  %977 = vmatpush1.msra.mxu0 %v976
  %978 = vmatprep.subr.mxu0 0.0
  %v979 = vand.u32 %v35, 4294901760
  %980 = vmatpush1.msra.mxu0 %v979
  %981 = vmatprep.subr.mxu0 0.0
  %v982 = vand.u32 %v36, 4294901760
  %983 = vmatpush1.msra.mxu0 %v982
  %984 = vmatprep.subr.mxu0 0.0
  %v985 = vand.u32 %v37, 4294901760
  %986 = vmatpush1.msra.mxu0 %v985
  %987 = vmatprep.subr.mxu0 0.0
  %v988 = vand.u32 %v38, 4294901760
  %989 = vmatpush1.msra.mxu0 %v988
  %990 = vmatprep.subr.mxu0 0.0
  %v991 = vand.u32 %v39, 4294901760
  %992 = vmatpush1.msra.mxu0 %v991
  %993 = vmatprep.subr.mxu0 0.0
  %v994 = vand.u32 %v40, 4294901760
  %995 = vmatpush1.msra.mxu0 %v994
  %996 = vmatprep.subr.mxu0 0.0
  %v997 = vand.u32 %v41, 4294901760
  %998 = vmatpush1.msra.mxu0 %v997
  %999 = vmatprep.subr.mxu0 0.0
  %1000 = vmatpush1.msra.mxu0 0.0
  %1001 = vmatprep.subr.mxu0 0.0
  %1002 = vmatpush1.msra.mxu0 0.0
  %1003 = vmatprep.subr.mxu0 0.0
  %1004 = vmatpush1.msra.mxu0 0.0
  %1005 = vmatprep.subr.mxu0 0.0
  %1006 = vmatpush1.msra.mxu0 0.0
  %1007 = vmatprep.subr.mxu0 0.0
  %1008 = vmatpush1.msra.mxu0 0.0
  %1009 = vmatprep.subr.mxu0 0.0
  %1010 = vmatpush1.msra.mxu0 0.0
  %1011 = vmatprep.subr.mxu0 0.0
  %1012 = vmatpush1.msra.mxu0 0.0
  %1013 = vmatprep.subr.mxu0 0.0
  %1014 = vmatpush1.msra.mxu0 0.0
  %1015 = vmatprep.subr.mxu0 0.0
  %1016 = vmatpush1.msra.mxu0 0.0
  %1017 = vmatprep.subr.mxu0 0.0
  %1018 = vmatpush1.msra.mxu0 0.0
  %1019 = vmatprep.subr.mxu0 0.0
  %1020 = vmatpush1.msra.mxu0 0.0
  %1021 = vmatprep.subr.mxu0 0.0
  %1022 = vmatpush1.msra.mxu0 0.0
  %1023 = vmatprep.subr.mxu0 0.0
  %1024 = vmatpush1.msra.mxu0 0.0
  %1025 = vmatprep.subr.mxu0 0.0
  %1026 = vmatpush1.msra.mxu0 0.0
  %1027 = vmatprep.subr.mxu0 0.0
  %1028 = vmatpush1.msra.mxu0 0.0
  %1029 = vmatprep.subr.mxu0 0.0
  %1030 = vmatpush1.msra.mxu0 0.0
  %1031 = vmatprep.mubr.f32.mxu0 0.0
  %v1032 = vand.u32 %v20, 4294901760
  %1033 = vmatmul.mubr.f32.gmra.mrb[0].mxu0 %v1032
  %v1034 = vpop.f32.mrb[0].mxu0
  %v1035 = vadd.f32 %v894, %v1034
  %v1036 = vpop.f32.mrb[0].mxu0
  %1037 = vmatprep.mubr.f32.mxu0 0.0
  %v1038 = vand.u32 %v21, 4294901760
  %1039 = vmatmul.mubr.f32.gmra.mrb[0].mxu0 %v1038
  %v1040 = vpop.f32.mrb[0].mxu0
  %v1041 = vadd.f32 %v900, %v1040
  %v1042 = vpop.f32.mrb[0].mxu0
  %1043 = vmatprep.mubr.f32.mxu0 0.0
  %v1044 = vand.u32 %v22, 4294901760
  %1045 = vmatmul.mubr.f32.gmra.mrb[0].mxu0 %v1044
  %v1046 = vpop.f32.mrb[0].mxu0
  %v1047 = vadd.f32 %v906, %v1046
  %v1048 = vpop.f32.mrb[0].mxu0
  %1049 = vmatprep.mubr.f32.mxu0 0.0
  %v1050 = vand.u32 %v23, 4294901760
  %1051 = vmatmul.mubr.f32.gmra.mrb[0].mxu0 %v1050
  %v1052 = vpop.f32.mrb[0].mxu0
  %v1053 = vadd.f32 %v912, %v1052
  %v1054 = vpop.f32.mrb[0].mxu0
  %1055 = vmatprep.mubr.f32.mxu0 0.0
  %v1056 = vand.u32 %v58, 4294901760
  %1057 = vmatmul.mubr.f32.gmra.mrb[0].mxu0 %v1056
  %v1058 = vpop.f32.mrb[0].mxu0
  %v1059 = vadd.f32 %v918, %v1058
  %v1060 = vpop.f32.mrb[0].mxu0
  %1061 = vmatprep.mubr.f32.mxu0 0.0
  %v1062 = vand.u32 %v59, 4294901760
  %1063 = vmatmul.mubr.f32.gmra.mrb[0].mxu0 %v1062
  %v1064 = vpop.f32.mrb[0].mxu0
  %v1065 = vadd.f32 %v924, %v1064
  %v1066 = vpop.f32.mrb[0].mxu0
  %1067 = vmatprep.mubr.f32.mxu0 0.0
  %v1068 = vand.u32 %v60, 4294901760
  %1069 = vmatmul.mubr.f32.gmra.mrb[0].mxu0 %v1068
  %v1070 = vpop.f32.mrb[0].mxu0
  %v1071 = vadd.f32 %v930, %v1070
  %v1072 = vpop.f32.mrb[0].mxu0
  %1073 = vmatprep.mubr.f32.mxu0 0.0
  %v1074 = vand.u32 %v61, 4294901760
  %1075 = vmatmul.mubr.f32.gmra.mrb[0].mxu0 %v1074
  %v1076 = vpop.f32.mrb[0].mxu0
  %v1077 = vadd.f32 %v936, %v1076
  %v1078 = vpop.f32.mrb[0].mxu0
  %1079 = vmatprep.mubr.f32.mxu0 0.0
  %v1080 = vand.u32 %v62, 4294901760
  %1081 = vmatmul.mubr.f32.gmra.mrb[0].mxu0 %v1080
  %v1082 = vpop.f32.mrb[0].mxu0
  %v1083 = vadd.f32 %v942, %v1082
  %v1084 = vpop.f32.mrb[0].mxu0
  %1085 = vmatprep.mubr.f32.mxu0 0.0
  %v1086 = vand.u32 %v63, 4294901760
  %1087 = vmatmul.mubr.f32.gmra.mrb[0].mxu0 %v1086
  %v1088 = vpop.f32.mrb[0].mxu0
  %v1089 = vadd.f32 %v948, %v1088
  %v1090 = vpop.f32.mrb[0].mxu0
  %1091 = vdwg.mxu0
  %vm1092 = vcmask 130048
  %v1094 = vsel %vm1092, %v24, 0
  %v1097 = vsel %vm1092, %v25, 0
  %1099 = vmatprep.subr.mxu0 0.0
  %v1100 = vand.u32 %v1035, 4294901760
  %1101 = vmatpush1.msra.mxu0 %v1100
  %1102 = vmatprep.subr.mxu0 0.0
  %v1103 = vand.u32 %v1041, 4294901760
  %1104 = vmatpush1.msra.mxu0 %v1103
  %1105 = vmatprep.subr.mxu0 0.0
  %1106 = vmatpush1.msra.mxu0 0.0
  %1107 = vmatprep.subr.mxu0 0.0
  %1108 = vmatpush1.msra.mxu0 0.0
  %1109 = vmatprep.subr.mxu0 0.0
  %1110 = vmatpush1.msra.mxu0 0.0
  %1111 = vmatprep.subr.mxu0 0.0
  %1112 = vmatpush1.msra.mxu0 0.0
  %1113 = vmatprep.subr.mxu0 0.0
  %1114 = vmatpush1.msra.mxu0 0.0
  %1115 = vmatprep.subr.mxu0 0.0
  %1116 = vmatpush1.msra.mxu0 0.0
  %1117 = vmatprep.subr.mxu0 0.0
  %1118 = vmatpush1.msra.mxu0 0.0
  %1119 = vmatprep.subr.mxu0 0.0
  %1120 = vmatpush1.msra.mxu0 0.0
  %1121 = vmatprep.subr.mxu0 0.0
  %1122 = vmatpush1.msra.mxu0 0.0
  %1123 = vmatprep.subr.mxu0 0.0
  %1124 = vmatpush1.msra.mxu0 0.0
  %1125 = vmatprep.subr.mxu0 0.0
  %1126 = vmatpush1.msra.mxu0 0.0
  %1127 = vmatprep.subr.mxu0 0.0
  %1128 = vmatpush1.msra.mxu0 0.0
  %1129 = vmatprep.subr.mxu0 0.0
  %1130 = vmatpush1.msra.mxu0 0.0
  %1131 = vmatprep.subr.mxu0 0.0
  %1132 = vmatpush1.msra.mxu0 0.0
  %1133 = vmatprep.subr.mxu0 0.0
  %1134 = vmatpush1.msra.mxu0 0.0
  %1135 = vmatprep.subr.mxu0 0.0
  %1136 = vmatpush1.msra.mxu0 0.0
  %1137 = vmatprep.subr.mxu0 0.0
  %1138 = vmatpush1.msra.mxu0 0.0
  %1139 = vmatprep.subr.mxu0 0.0
  %1140 = vmatpush1.msra.mxu0 0.0
  %1141 = vmatprep.subr.mxu0 0.0
  %1142 = vmatpush1.msra.mxu0 0.0
  %1143 = vmatprep.subr.mxu0 0.0
  %1144 = vmatpush1.msra.mxu0 0.0
  %1145 = vmatprep.subr.mxu0 0.0
  %1146 = vmatpush1.msra.mxu0 0.0
  %1147 = vmatprep.subr.mxu0 0.0
  %1148 = vmatpush1.msra.mxu0 0.0
  %1149 = vmatprep.subr.mxu0 0.0
  %1150 = vmatpush1.msra.mxu0 0.0
  %1151 = vmatprep.subr.mxu0 0.0
  %1152 = vmatpush1.msra.mxu0 0.0
  %1153 = vmatprep.subr.mxu0 0.0
  %1154 = vmatpush1.msra.mxu0 0.0
  %1155 = vmatprep.subr.mxu0 0.0
  %1156 = vmatpush1.msra.mxu0 0.0
  %1157 = vmatprep.subr.mxu0 0.0
  %1158 = vmatpush1.msra.mxu0 0.0
  %1159 = vmatprep.subr.mxu0 0.0
  %1160 = vmatpush1.msra.mxu0 0.0
  %1161 = vmatprep.subr.mxu0 0.0
  %1162 = vmatpush1.msra.mxu0 0.0
  %1163 = vmatprep.subr.mxu0 0.0
  %1164 = vmatpush1.msra.mxu0 0.0
  %1165 = vmatprep.mubr.f32.mxu0 0.0
  %v1166 = vand.u32 %v1094, 4294901760
  %v1167 = vsub.f32 %v1094, %v1166
  %v1168 = vand.u32 %v1167, 4294901760
  %v1169 = vsub.f32 %v1167, %v1168
  %v1170 = vand.u32 %v1169, 4294901760
  %1171 = vmatmul.mubr.f32.gmra.mrb[0].mxu0 %v1170
  %v1172 = vpop.f32.mrb[0].mxu0
  %v1173 = vadd.f32 0.0, %v1172
  %v1174 = vpop.f32.mrb[0].mxu0
  %1175 = vmatprep.mubr.f32.mxu0 0.0
  %v1176 = vand.u32 %v1097, 4294901760
  %v1177 = vsub.f32 %v1097, %v1176
  %v1178 = vand.u32 %v1177, 4294901760
  %v1179 = vsub.f32 %v1177, %v1178
  %v1180 = vand.u32 %v1179, 4294901760
  %1181 = vmatmul.mubr.f32.gmra.mrb[0].mxu0 %v1180
  %v1182 = vpop.f32.mrb[0].mxu0
  %v1183 = vadd.f32 0.0, %v1182
  %v1184 = vpop.f32.mrb[0].mxu0
  %1185 = vdwg.mxu0
  %1186 = vmatprep.subr.mxu0 0.0
  %v1187 = vand.u32 %v1035, 4294901760
  %v1188 = vsub.f32 %v1035, %v1187
  %v1189 = vand.u32 %v1188, 4294901760
  %v1190 = vsub.f32 %v1188, %v1189
  %v1191 = vand.u32 %v1190, 4294901760
  %1192 = vmatpush1.msra.mxu0 %v1191
  %1193 = vmatprep.subr.mxu0 0.0
  %v1194 = vand.u32 %v1041, 4294901760
  %v1195 = vsub.f32 %v1041, %v1194
  %v1196 = vand.u32 %v1195, 4294901760
  %v1197 = vsub.f32 %v1195, %v1196
  %v1198 = vand.u32 %v1197, 4294901760
  %1199 = vmatpush1.msra.mxu0 %v1198
  %1200 = vmatprep.subr.mxu0 0.0
  %1201 = vmatpush1.msra.mxu0 0.0
  %1202 = vmatprep.subr.mxu0 0.0
  %1203 = vmatpush1.msra.mxu0 0.0
  %1204 = vmatprep.subr.mxu0 0.0
  %1205 = vmatpush1.msra.mxu0 0.0
  %1206 = vmatprep.subr.mxu0 0.0
  %1207 = vmatpush1.msra.mxu0 0.0
  %1208 = vmatprep.subr.mxu0 0.0
  %1209 = vmatpush1.msra.mxu0 0.0
  %1210 = vmatprep.subr.mxu0 0.0
  %1211 = vmatpush1.msra.mxu0 0.0
  %1212 = vmatprep.subr.mxu0 0.0
  %1213 = vmatpush1.msra.mxu0 0.0
  %1214 = vmatprep.subr.mxu0 0.0
  %1215 = vmatpush1.msra.mxu0 0.0
  %1216 = vmatprep.subr.mxu0 0.0
  %1217 = vmatpush1.msra.mxu0 0.0
  %1218 = vmatprep.subr.mxu0 0.0
  %1219 = vmatpush1.msra.mxu0 0.0
  %1220 = vmatprep.subr.mxu0 0.0
  %1221 = vmatpush1.msra.mxu0 0.0
  %1222 = vmatprep.subr.mxu0 0.0
  %1223 = vmatpush1.msra.mxu0 0.0
  %1224 = vmatprep.subr.mxu0 0.0
  %1225 = vmatpush1.msra.mxu0 0.0
  %1226 = vmatprep.subr.mxu0 0.0
  %1227 = vmatpush1.msra.mxu0 0.0
  %1228 = vmatprep.subr.mxu0 0.0
  %1229 = vmatpush1.msra.mxu0 0.0
  %1230 = vmatprep.subr.mxu0 0.0
  %1231 = vmatpush1.msra.mxu0 0.0
  %1232 = vmatprep.subr.mxu0 0.0
  %1233 = vmatpush1.msra.mxu0 0.0
  %1234 = vmatprep.subr.mxu0 0.0
  %1235 = vmatpush1.msra.mxu0 0.0
  %1236 = vmatprep.subr.mxu0 0.0
  %1237 = vmatpush1.msra.mxu0 0.0
  %1238 = vmatprep.subr.mxu0 0.0
  %1239 = vmatpush1.msra.mxu0 0.0
  %1240 = vmatprep.subr.mxu0 0.0
  %1241 = vmatpush1.msra.mxu0 0.0
  %1242 = vmatprep.subr.mxu0 0.0
  %1243 = vmatpush1.msra.mxu0 0.0
  %1244 = vmatprep.subr.mxu0 0.0
  %1245 = vmatpush1.msra.mxu0 0.0
  %1246 = vmatprep.subr.mxu0 0.0
  %1247 = vmatpush1.msra.mxu0 0.0
  %1248 = vmatprep.subr.mxu0 0.0
  %1249 = vmatpush1.msra.mxu0 0.0
  %1250 = vmatprep.subr.mxu0 0.0
  %1251 = vmatpush1.msra.mxu0 0.0
  %1252 = vmatprep.subr.mxu0 0.0
  %1253 = vmatpush1.msra.mxu0 0.0
  %1254 = vmatprep.subr.mxu0 0.0
  %1255 = vmatpush1.msra.mxu0 0.0
  %1256 = vmatprep.subr.mxu0 0.0
  %1257 = vmatpush1.msra.mxu0 0.0
  %1258 = vmatprep.subr.mxu0 0.0
  %1259 = vmatpush1.msra.mxu0 0.0
  %1260 = vmatprep.mubr.f32.mxu0 0.0
  %v1261 = vand.u32 %v1094, 4294901760
  %1262 = vmatmul.mubr.f32.gmra.mrb[0].mxu0 %v1261
  %v1263 = vpop.f32.mrb[0].mxu0
  %v1264 = vadd.f32 %v1173, %v1263
  %v1265 = vpop.f32.mrb[0].mxu0
  %1266 = vmatprep.mubr.f32.mxu0 0.0
  %v1267 = vand.u32 %v1097, 4294901760
  %1268 = vmatmul.mubr.f32.gmra.mrb[0].mxu0 %v1267
  %v1269 = vpop.f32.mrb[0].mxu0
  %v1270 = vadd.f32 %v1183, %v1269
  %v1271 = vpop.f32.mrb[0].mxu0
  %1272 = vdwg.mxu0
  %1273 = vmatprep.subr.mxu0 0.0
  %v1274 = vand.u32 %v1035, 4294901760
  %v1275 = vsub.f32 %v1035, %v1274
  %1276 = vmatpush1.msra.mxu0 %v1275
  %1277 = vmatprep.subr.mxu0 0.0
  %v1278 = vand.u32 %v1041, 4294901760
  %v1279 = vsub.f32 %v1041, %v1278
  %1280 = vmatpush1.msra.mxu0 %v1279
  %1281 = vmatprep.subr.mxu0 0.0
  %1282 = vmatpush1.msra.mxu0 0.0
  %1283 = vmatprep.subr.mxu0 0.0
  %1284 = vmatpush1.msra.mxu0 0.0
  %1285 = vmatprep.subr.mxu0 0.0
  %1286 = vmatpush1.msra.mxu0 0.0
  %1287 = vmatprep.subr.mxu0 0.0
  %1288 = vmatpush1.msra.mxu0 0.0
  %1289 = vmatprep.subr.mxu0 0.0
  %1290 = vmatpush1.msra.mxu0 0.0
  %1291 = vmatprep.subr.mxu0 0.0
  %1292 = vmatpush1.msra.mxu0 0.0
  %1293 = vmatprep.subr.mxu0 0.0
  %1294 = vmatpush1.msra.mxu0 0.0
  %1295 = vmatprep.subr.mxu0 0.0
  %1296 = vmatpush1.msra.mxu0 0.0
  %1297 = vmatprep.subr.mxu0 0.0
  %1298 = vmatpush1.msra.mxu0 0.0
  %1299 = vmatprep.subr.mxu0 0.0
  %1300 = vmatpush1.msra.mxu0 0.0
  %1301 = vmatprep.subr.mxu0 0.0
  %1302 = vmatpush1.msra.mxu0 0.0
  %1303 = vmatprep.subr.mxu0 0.0
  %1304 = vmatpush1.msra.mxu0 0.0
  %1305 = vmatprep.subr.mxu0 0.0
  %1306 = vmatpush1.msra.mxu0 0.0
  %1307 = vmatprep.subr.mxu0 0.0
  %1308 = vmatpush1.msra.mxu0 0.0
  %1309 = vmatprep.subr.mxu0 0.0
  %1310 = vmatpush1.msra.mxu0 0.0
  %1311 = vmatprep.subr.mxu0 0.0
  %1312 = vmatpush1.msra.mxu0 0.0
  %1313 = vmatprep.subr.mxu0 0.0
  %1314 = vmatpush1.msra.mxu0 0.0
  %1315 = vmatprep.subr.mxu0 0.0
  %1316 = vmatpush1.msra.mxu0 0.0
  %1317 = vmatprep.subr.mxu0 0.0
  %1318 = vmatpush1.msra.mxu0 0.0
  %1319 = vmatprep.subr.mxu0 0.0
  %1320 = vmatpush1.msra.mxu0 0.0
  %1321 = vmatprep.subr.mxu0 0.0
  %1322 = vmatpush1.msra.mxu0 0.0
  %1323 = vmatprep.subr.mxu0 0.0
  %1324 = vmatpush1.msra.mxu0 0.0
  %1325 = vmatprep.subr.mxu0 0.0
  %1326 = vmatpush1.msra.mxu0 0.0
  %1327 = vmatprep.subr.mxu0 0.0
  %1328 = vmatpush1.msra.mxu0 0.0
  %1329 = vmatprep.subr.mxu0 0.0
  %1330 = vmatpush1.msra.mxu0 0.0
  %1331 = vmatprep.subr.mxu0 0.0
  %1332 = vmatpush1.msra.mxu0 0.0
  %1333 = vmatprep.subr.mxu0 0.0
  %1334 = vmatpush1.msra.mxu0 0.0
  %1335 = vmatprep.subr.mxu0 0.0
  %1336 = vmatpush1.msra.mxu0 0.0
  %1337 = vmatprep.subr.mxu0 0.0
  %1338 = vmatpush1.msra.mxu0 0.0
  %1339 = vmatprep.subr.mxu0 0.0
  %1340 = vmatpush1.msra.mxu0 0.0
  %1341 = vmatprep.mubr.f32.mxu0 0.0
  %v1342 = vand.u32 %v1094, 4294901760
  %v1343 = vsub.f32 %v1094, %v1342
  %1344 = vmatmul.mubr.f32.gmra.mrb[0].mxu0 %v1343
  %v1345 = vpop.f32.mrb[0].mxu0
  %v1346 = vadd.f32 %v1264, %v1345
  %v1347 = vpop.f32.mrb[0].mxu0
  %1348 = vmatprep.mubr.f32.mxu0 0.0
  %v1349 = vand.u32 %v1097, 4294901760
  %v1350 = vsub.f32 %v1097, %v1349
  %1351 = vmatmul.mubr.f32.gmra.mrb[0].mxu0 %v1350
  %v1352 = vpop.f32.mrb[0].mxu0
  %v1353 = vadd.f32 %v1270, %v1352
  %v1354 = vpop.f32.mrb[0].mxu0
  %1355 = vdwg.mxu0
  %1356 = vmatprep.subr.mxu0 0.0
  %v1357 = vand.u32 %v1035, 4294901760
  %1358 = vmatpush1.msra.mxu0 %v1357
  %1359 = vmatprep.subr.mxu0 0.0
  %v1360 = vand.u32 %v1041, 4294901760
  %1361 = vmatpush1.msra.mxu0 %v1360
  %1362 = vmatprep.subr.mxu0 0.0
  %1363 = vmatpush1.msra.mxu0 0.0
  %1364 = vmatprep.subr.mxu0 0.0
  %1365 = vmatpush1.msra.mxu0 0.0
  %1366 = vmatprep.subr.mxu0 0.0
  %1367 = vmatpush1.msra.mxu0 0.0
  %1368 = vmatprep.subr.mxu0 0.0
  %1369 = vmatpush1.msra.mxu0 0.0
  %1370 = vmatprep.subr.mxu0 0.0
  %1371 = vmatpush1.msra.mxu0 0.0
  %1372 = vmatprep.subr.mxu0 0.0
  %1373 = vmatpush1.msra.mxu0 0.0
  %1374 = vmatprep.subr.mxu0 0.0
  %1375 = vmatpush1.msra.mxu0 0.0
  %1376 = vmatprep.subr.mxu0 0.0
  %1377 = vmatpush1.msra.mxu0 0.0
  %1378 = vmatprep.subr.mxu0 0.0
  %1379 = vmatpush1.msra.mxu0 0.0
  %1380 = vmatprep.subr.mxu0 0.0
  %1381 = vmatpush1.msra.mxu0 0.0
  %1382 = vmatprep.subr.mxu0 0.0
  %1383 = vmatpush1.msra.mxu0 0.0
  %1384 = vmatprep.subr.mxu0 0.0
  %1385 = vmatpush1.msra.mxu0 0.0
  %1386 = vmatprep.subr.mxu0 0.0
  %1387 = vmatpush1.msra.mxu0 0.0
  %1388 = vmatprep.subr.mxu0 0.0
  %1389 = vmatpush1.msra.mxu0 0.0
  %1390 = vmatprep.subr.mxu0 0.0
  %1391 = vmatpush1.msra.mxu0 0.0
  %1392 = vmatprep.subr.mxu0 0.0
  %1393 = vmatpush1.msra.mxu0 0.0
  %1394 = vmatprep.subr.mxu0 0.0
  %1395 = vmatpush1.msra.mxu0 0.0
  %1396 = vmatprep.subr.mxu0 0.0
  %1397 = vmatpush1.msra.mxu0 0.0
  %1398 = vmatprep.subr.mxu0 0.0
  %1399 = vmatpush1.msra.mxu0 0.0
  %1400 = vmatprep.subr.mxu0 0.0
  %1401 = vmatpush1.msra.mxu0 0.0
  %1402 = vmatprep.subr.mxu0 0.0
  %1403 = vmatpush1.msra.mxu0 0.0
  %1404 = vmatprep.subr.mxu0 0.0
  %1405 = vmatpush1.msra.mxu0 0.0
  %1406 = vmatprep.subr.mxu0 0.0
  %1407 = vmatpush1.msra.mxu0 0.0
  %1408 = vmatprep.subr.mxu0 0.0
  %1409 = vmatpush1.msra.mxu0 0.0
  %1410 = vmatprep.subr.mxu0 0.0
  %1411 = vmatpush1.msra.mxu0 0.0
  %1412 = vmatprep.subr.mxu0 0.0
  %1413 = vmatpush1.msra.mxu0 0.0
  %1414 = vmatprep.subr.mxu0 0.0
  %1415 = vmatpush1.msra.mxu0 0.0
  %1416 = vmatprep.subr.mxu0 0.0
  %1417 = vmatpush1.msra.mxu0 0.0
  %1418 = vmatprep.subr.mxu0 0.0
  %1419 = vmatpush1.msra.mxu0 0.0
  %1420 = vmatprep.subr.mxu0 0.0
  %1421 = vmatpush1.msra.mxu0 0.0
  %1422 = vmatprep.mubr.f32.mxu0 0.0
  %v1423 = vand.u32 %v1094, 4294901760
  %v1424 = vsub.f32 %v1094, %v1423
  %v1425 = vand.u32 %v1424, 4294901760
  %1426 = vmatmul.mubr.f32.gmra.mrb[0].mxu0 %v1425
  %v1427 = vpop.f32.mrb[0].mxu0
  %v1428 = vadd.f32 %v1346, %v1427
  %v1429 = vpop.f32.mrb[0].mxu0
  %1430 = vmatprep.mubr.f32.mxu0 0.0
  %v1431 = vand.u32 %v1097, 4294901760
  %v1432 = vsub.f32 %v1097, %v1431
  %v1433 = vand.u32 %v1432, 4294901760
  %1434 = vmatmul.mubr.f32.gmra.mrb[0].mxu0 %v1433
  %v1435 = vpop.f32.mrb[0].mxu0
  %v1436 = vadd.f32 %v1353, %v1435
  %v1437 = vpop.f32.mrb[0].mxu0
  %1438 = vdwg.mxu0
  %1439 = vmatprep.subr.mxu0 0.0
  %v1440 = vand.u32 %v1035, 4294901760
  %v1441 = vsub.f32 %v1035, %v1440
  %v1442 = vand.u32 %v1441, 4294901760
  %1443 = vmatpush1.msra.mxu0 %v1442
  %1444 = vmatprep.subr.mxu0 0.0
  %v1445 = vand.u32 %v1041, 4294901760
  %v1446 = vsub.f32 %v1041, %v1445
  %v1447 = vand.u32 %v1446, 4294901760
  %1448 = vmatpush1.msra.mxu0 %v1447
  %1449 = vmatprep.subr.mxu0 0.0
  %1450 = vmatpush1.msra.mxu0 0.0
  %1451 = vmatprep.subr.mxu0 0.0
  %1452 = vmatpush1.msra.mxu0 0.0
  %1453 = vmatprep.subr.mxu0 0.0
  %1454 = vmatpush1.msra.mxu0 0.0
  %1455 = vmatprep.subr.mxu0 0.0
  %1456 = vmatpush1.msra.mxu0 0.0
  %1457 = vmatprep.subr.mxu0 0.0
  %1458 = vmatpush1.msra.mxu0 0.0
  %1459 = vmatprep.subr.mxu0 0.0
  %1460 = vmatpush1.msra.mxu0 0.0
  %1461 = vmatprep.subr.mxu0 0.0
  %1462 = vmatpush1.msra.mxu0 0.0
  %1463 = vmatprep.subr.mxu0 0.0
  %1464 = vmatpush1.msra.mxu0 0.0
  %1465 = vmatprep.subr.mxu0 0.0
  %1466 = vmatpush1.msra.mxu0 0.0
  %1467 = vmatprep.subr.mxu0 0.0
  %1468 = vmatpush1.msra.mxu0 0.0
  %1469 = vmatprep.subr.mxu0 0.0
  %1470 = vmatpush1.msra.mxu0 0.0
  %1471 = vmatprep.subr.mxu0 0.0
  %1472 = vmatpush1.msra.mxu0 0.0
  %1473 = vmatprep.subr.mxu0 0.0
  %1474 = vmatpush1.msra.mxu0 0.0
  %1475 = vmatprep.subr.mxu0 0.0
  %1476 = vmatpush1.msra.mxu0 0.0
  %1477 = vmatprep.subr.mxu0 0.0
  %1478 = vmatpush1.msra.mxu0 0.0
  %1479 = vmatprep.subr.mxu0 0.0
  %1480 = vmatpush1.msra.mxu0 0.0
  %1481 = vmatprep.subr.mxu0 0.0
  %1482 = vmatpush1.msra.mxu0 0.0
  %1483 = vmatprep.subr.mxu0 0.0
  %1484 = vmatpush1.msra.mxu0 0.0
  %1485 = vmatprep.subr.mxu0 0.0
  %1486 = vmatpush1.msra.mxu0 0.0
  %1487 = vmatprep.subr.mxu0 0.0
  %1488 = vmatpush1.msra.mxu0 0.0
  %1489 = vmatprep.subr.mxu0 0.0
  %1490 = vmatpush1.msra.mxu0 0.0
  %1491 = vmatprep.subr.mxu0 0.0
  %1492 = vmatpush1.msra.mxu0 0.0
  %1493 = vmatprep.subr.mxu0 0.0
  %1494 = vmatpush1.msra.mxu0 0.0
  %1495 = vmatprep.subr.mxu0 0.0
  %1496 = vmatpush1.msra.mxu0 0.0
  %1497 = vmatprep.subr.mxu0 0.0
  %1498 = vmatpush1.msra.mxu0 0.0
  %1499 = vmatprep.subr.mxu0 0.0
  %1500 = vmatpush1.msra.mxu0 0.0
  %1501 = vmatprep.subr.mxu0 0.0
  %1502 = vmatpush1.msra.mxu0 0.0
  %1503 = vmatprep.subr.mxu0 0.0
  %1504 = vmatpush1.msra.mxu0 0.0
  %1505 = vmatprep.subr.mxu0 0.0
  %1506 = vmatpush1.msra.mxu0 0.0
  %1507 = vmatprep.subr.mxu0 0.0
  %1508 = vmatpush1.msra.mxu0 0.0
  %1509 = vmatprep.mubr.f32.mxu0 0.0
  %v1510 = vand.u32 %v1094, 4294901760
  %1511 = vmatmul.mubr.f32.gmra.mrb[0].mxu0 %v1510
  %v1512 = vpop.f32.mrb[0].mxu0
  %v1513 = vadd.f32 %v1428, %v1512
  %v1514 = vpop.f32.mrb[0].mxu0
  %1515 = vmatprep.mubr.f32.mxu0 0.0
  %v1516 = vand.u32 %v1097, 4294901760
  %1517 = vmatmul.mubr.f32.gmra.mrb[0].mxu0 %v1516
  %v1518 = vpop.f32.mrb[0].mxu0
  %v1519 = vadd.f32 %v1436, %v1518
  %v1520 = vpop.f32.mrb[0].mxu0
  %1521 = vdwg.mxu0
  %1522 = vmatprep.subr.mxu0 0.0
  %v1523 = vand.u32 %v1035, 4294901760
  %1524 = vmatpush1.msra.mxu0 %v1523
  %1525 = vmatprep.subr.mxu0 0.0
  %v1526 = vand.u32 %v1041, 4294901760
  %1527 = vmatpush1.msra.mxu0 %v1526
  %1528 = vmatprep.subr.mxu0 0.0
  %1529 = vmatpush1.msra.mxu0 0.0
  %1530 = vmatprep.subr.mxu0 0.0
  %1531 = vmatpush1.msra.mxu0 0.0
  %1532 = vmatprep.subr.mxu0 0.0
  %1533 = vmatpush1.msra.mxu0 0.0
  %1534 = vmatprep.subr.mxu0 0.0
  %1535 = vmatpush1.msra.mxu0 0.0
  %1536 = vmatprep.subr.mxu0 0.0
  %1537 = vmatpush1.msra.mxu0 0.0
  %1538 = vmatprep.subr.mxu0 0.0
  %1539 = vmatpush1.msra.mxu0 0.0
  %1540 = vmatprep.subr.mxu0 0.0
  %1541 = vmatpush1.msra.mxu0 0.0
  %1542 = vmatprep.subr.mxu0 0.0
  %1543 = vmatpush1.msra.mxu0 0.0
  %1544 = vmatprep.subr.mxu0 0.0
  %1545 = vmatpush1.msra.mxu0 0.0
  %1546 = vmatprep.subr.mxu0 0.0
  %1547 = vmatpush1.msra.mxu0 0.0
  %1548 = vmatprep.subr.mxu0 0.0
  %1549 = vmatpush1.msra.mxu0 0.0
  %1550 = vmatprep.subr.mxu0 0.0
  %1551 = vmatpush1.msra.mxu0 0.0
  %1552 = vmatprep.subr.mxu0 0.0
  %1553 = vmatpush1.msra.mxu0 0.0
  %1554 = vmatprep.subr.mxu0 0.0
  %1555 = vmatpush1.msra.mxu0 0.0
  %1556 = vmatprep.subr.mxu0 0.0
  %1557 = vmatpush1.msra.mxu0 0.0
  %1558 = vmatprep.subr.mxu0 0.0
  %1559 = vmatpush1.msra.mxu0 0.0
  %1560 = vmatprep.subr.mxu0 0.0
  %1561 = vmatpush1.msra.mxu0 0.0
  %1562 = vmatprep.subr.mxu0 0.0
  %1563 = vmatpush1.msra.mxu0 0.0
  %1564 = vmatprep.subr.mxu0 0.0
  %1565 = vmatpush1.msra.mxu0 0.0
  %1566 = vmatprep.subr.mxu0 0.0
  %1567 = vmatpush1.msra.mxu0 0.0
  %1568 = vmatprep.subr.mxu0 0.0
  %1569 = vmatpush1.msra.mxu0 0.0
  %1570 = vmatprep.subr.mxu0 0.0
  %1571 = vmatpush1.msra.mxu0 0.0
  %1572 = vmatprep.subr.mxu0 0.0
  %1573 = vmatpush1.msra.mxu0 0.0
  %1574 = vmatprep.subr.mxu0 0.0
  %1575 = vmatpush1.msra.mxu0 0.0
  %1576 = vmatprep.subr.mxu0 0.0
  %1577 = vmatpush1.msra.mxu0 0.0
  %1578 = vmatprep.subr.mxu0 0.0
  %1579 = vmatpush1.msra.mxu0 0.0
  %1580 = vmatprep.subr.mxu0 0.0
  %1581 = vmatpush1.msra.mxu0 0.0
  %1582 = vmatprep.subr.mxu0 0.0
  %1583 = vmatpush1.msra.mxu0 0.0
  %1584 = vmatprep.subr.mxu0 0.0
  %1585 = vmatpush1.msra.mxu0 0.0
  %1586 = vmatprep.subr.mxu0 0.0
  %1587 = vmatpush1.msra.mxu0 0.0
  %1588 = vmatprep.mubr.f32.mxu0 0.0
  %v1589 = vand.u32 %v1094, 4294901760
  %1590 = vmatmul.mubr.f32.gmra.mrb[0].mxu0 %v1589
  %v1591 = vpop.f32.mrb[0].mxu0
  %v1592 = vadd.f32 %v1513, %v1591
  %v1593 = vpop.f32.mrb[0].mxu0
  %1594 = vmatprep.mubr.f32.mxu0 0.0
  %v1595 = vand.u32 %v1097, 4294901760
  %1596 = vmatmul.mubr.f32.gmra.mrb[0].mxu0 %v1595
  %v1597 = vpop.f32.mrb[0].mxu0
  %v1598 = vadd.f32 %v1519, %v1597
  %v1599 = vpop.f32.mrb[0].mxu0
  %1600 = vdwg.mxu0
  %1601 = vmatprep.subr.mxu0 0.0
  %v1602 = vand.u32 %v1047, 4294901760
  %1603 = vmatpush1.msra.mxu0 %v1602
  %1604 = vmatprep.subr.mxu0 0.0
  %v1605 = vand.u32 %v1053, 4294901760
  %1606 = vmatpush1.msra.mxu0 %v1605
  %1607 = vmatprep.subr.mxu0 0.0
  %1608 = vmatpush1.msra.mxu0 0.0
  %1609 = vmatprep.subr.mxu0 0.0
  %1610 = vmatpush1.msra.mxu0 0.0
  %1611 = vmatprep.subr.mxu0 0.0
  %1612 = vmatpush1.msra.mxu0 0.0
  %1613 = vmatprep.subr.mxu0 0.0
  %1614 = vmatpush1.msra.mxu0 0.0
  %1615 = vmatprep.subr.mxu0 0.0
  %1616 = vmatpush1.msra.mxu0 0.0
  %1617 = vmatprep.subr.mxu0 0.0
  %1618 = vmatpush1.msra.mxu0 0.0
  %1619 = vmatprep.subr.mxu0 0.0
  %1620 = vmatpush1.msra.mxu0 0.0
  %1621 = vmatprep.subr.mxu0 0.0
  %1622 = vmatpush1.msra.mxu0 0.0
  %1623 = vmatprep.subr.mxu0 0.0
  %1624 = vmatpush1.msra.mxu0 0.0
  %1625 = vmatprep.subr.mxu0 0.0
  %1626 = vmatpush1.msra.mxu0 0.0
  %1627 = vmatprep.subr.mxu0 0.0
  %1628 = vmatpush1.msra.mxu0 0.0
  %1629 = vmatprep.subr.mxu0 0.0
  %1630 = vmatpush1.msra.mxu0 0.0
  %1631 = vmatprep.subr.mxu0 0.0
  %1632 = vmatpush1.msra.mxu0 0.0
  %1633 = vmatprep.subr.mxu0 0.0
  %1634 = vmatpush1.msra.mxu0 0.0
  %1635 = vmatprep.subr.mxu0 0.0
  %1636 = vmatpush1.msra.mxu0 0.0
  %1637 = vmatprep.subr.mxu0 0.0
  %1638 = vmatpush1.msra.mxu0 0.0
  %1639 = vmatprep.subr.mxu0 0.0
  %1640 = vmatpush1.msra.mxu0 0.0
  %1641 = vmatprep.subr.mxu0 0.0
  %1642 = vmatpush1.msra.mxu0 0.0
  %1643 = vmatprep.subr.mxu0 0.0
  %1644 = vmatpush1.msra.mxu0 0.0
  %1645 = vmatprep.subr.mxu0 0.0
  %1646 = vmatpush1.msra.mxu0 0.0
  %1647 = vmatprep.subr.mxu0 0.0
  %1648 = vmatpush1.msra.mxu0 0.0
  %1649 = vmatprep.subr.mxu0 0.0
  %1650 = vmatpush1.msra.mxu0 0.0
  %1651 = vmatprep.subr.mxu0 0.0
  %1652 = vmatpush1.msra.mxu0 0.0
  %1653 = vmatprep.subr.mxu0 0.0
  %1654 = vmatpush1.msra.mxu0 0.0
  %1655 = vmatprep.subr.mxu0 0.0
  %1656 = vmatpush1.msra.mxu0 0.0
  %1657 = vmatprep.subr.mxu0 0.0
  %1658 = vmatpush1.msra.mxu0 0.0
  %1659 = vmatprep.subr.mxu0 0.0
  %1660 = vmatpush1.msra.mxu0 0.0
  %1661 = vmatprep.subr.mxu0 0.0
  %1662 = vmatpush1.msra.mxu0 0.0
  %1663 = vmatprep.subr.mxu0 0.0
  %1664 = vmatpush1.msra.mxu0 0.0
  %1665 = vmatprep.subr.mxu0 0.0
  %1666 = vmatpush1.msra.mxu0 0.0
  %1667 = vmatprep.mubr.f32.mxu0 0.0
  %v1668 = vand.u32 %v1094, 4294901760
  %v1669 = vsub.f32 %v1094, %v1668
  %v1670 = vand.u32 %v1669, 4294901760
  %v1671 = vsub.f32 %v1669, %v1670
  %v1672 = vand.u32 %v1671, 4294901760
  %1673 = vmatmul.mubr.f32.gmra.mrb[0].mxu0 %v1672
  %v1674 = vpop.f32.mrb[0].mxu0
  %v1675 = vadd.f32 0.0, %v1674
  %v1676 = vpop.f32.mrb[0].mxu0
  %1677 = vmatprep.mubr.f32.mxu0 0.0
  %v1678 = vand.u32 %v1097, 4294901760
  %v1679 = vsub.f32 %v1097, %v1678
  %v1680 = vand.u32 %v1679, 4294901760
  %v1681 = vsub.f32 %v1679, %v1680
  %v1682 = vand.u32 %v1681, 4294901760
  %1683 = vmatmul.mubr.f32.gmra.mrb[0].mxu0 %v1682
  %v1684 = vpop.f32.mrb[0].mxu0
  %v1685 = vadd.f32 0.0, %v1684
  %v1686 = vpop.f32.mrb[0].mxu0
  %1687 = vdwg.mxu0
  %1688 = vmatprep.subr.mxu0 0.0
  %v1689 = vand.u32 %v1047, 4294901760
  %v1690 = vsub.f32 %v1047, %v1689
  %v1691 = vand.u32 %v1690, 4294901760
  %v1692 = vsub.f32 %v1690, %v1691
  %v1693 = vand.u32 %v1692, 4294901760
  %1694 = vmatpush1.msra.mxu0 %v1693
  %1695 = vmatprep.subr.mxu0 0.0
  %v1696 = vand.u32 %v1053, 4294901760
  %v1697 = vsub.f32 %v1053, %v1696
  %v1698 = vand.u32 %v1697, 4294901760
  %v1699 = vsub.f32 %v1697, %v1698
  %v1700 = vand.u32 %v1699, 4294901760
  %1701 = vmatpush1.msra.mxu0 %v1700
  %1702 = vmatprep.subr.mxu0 0.0
  %1703 = vmatpush1.msra.mxu0 0.0
  %1704 = vmatprep.subr.mxu0 0.0
  %1705 = vmatpush1.msra.mxu0 0.0
  %1706 = vmatprep.subr.mxu0 0.0
  %1707 = vmatpush1.msra.mxu0 0.0
  %1708 = vmatprep.subr.mxu0 0.0
  %1709 = vmatpush1.msra.mxu0 0.0
  %1710 = vmatprep.subr.mxu0 0.0
  %1711 = vmatpush1.msra.mxu0 0.0
  %1712 = vmatprep.subr.mxu0 0.0
  %1713 = vmatpush1.msra.mxu0 0.0
  %1714 = vmatprep.subr.mxu0 0.0
  %1715 = vmatpush1.msra.mxu0 0.0
  %1716 = vmatprep.subr.mxu0 0.0
  %1717 = vmatpush1.msra.mxu0 0.0
  %1718 = vmatprep.subr.mxu0 0.0
  %1719 = vmatpush1.msra.mxu0 0.0
  %1720 = vmatprep.subr.mxu0 0.0
  %1721 = vmatpush1.msra.mxu0 0.0
  %1722 = vmatprep.subr.mxu0 0.0
  %1723 = vmatpush1.msra.mxu0 0.0
  %1724 = vmatprep.subr.mxu0 0.0
  %1725 = vmatpush1.msra.mxu0 0.0
  %1726 = vmatprep.subr.mxu0 0.0
  %1727 = vmatpush1.msra.mxu0 0.0
  %1728 = vmatprep.subr.mxu0 0.0
  %1729 = vmatpush1.msra.mxu0 0.0
  %1730 = vmatprep.subr.mxu0 0.0
  %1731 = vmatpush1.msra.mxu0 0.0
  %1732 = vmatprep.subr.mxu0 0.0
  %1733 = vmatpush1.msra.mxu0 0.0
  %1734 = vmatprep.subr.mxu0 0.0
  %1735 = vmatpush1.msra.mxu0 0.0
  %1736 = vmatprep.subr.mxu0 0.0
  %1737 = vmatpush1.msra.mxu0 0.0
  %1738 = vmatprep.subr.mxu0 0.0
  %1739 = vmatpush1.msra.mxu0 0.0
  %1740 = vmatprep.subr.mxu0 0.0
  %1741 = vmatpush1.msra.mxu0 0.0
  %1742 = vmatprep.subr.mxu0 0.0
  %1743 = vmatpush1.msra.mxu0 0.0
  %1744 = vmatprep.subr.mxu0 0.0
  %1745 = vmatpush1.msra.mxu0 0.0
  %1746 = vmatprep.subr.mxu0 0.0
  %1747 = vmatpush1.msra.mxu0 0.0
  %1748 = vmatprep.subr.mxu0 0.0
  %1749 = vmatpush1.msra.mxu0 0.0
  %1750 = vmatprep.subr.mxu0 0.0
  %1751 = vmatpush1.msra.mxu0 0.0
  %1752 = vmatprep.subr.mxu0 0.0
  %1753 = vmatpush1.msra.mxu0 0.0
  %1754 = vmatprep.subr.mxu0 0.0
  %1755 = vmatpush1.msra.mxu0 0.0
  %1756 = vmatprep.subr.mxu0 0.0
  %1757 = vmatpush1.msra.mxu0 0.0
  %1758 = vmatprep.subr.mxu0 0.0
  %1759 = vmatpush1.msra.mxu0 0.0
  %1760 = vmatprep.subr.mxu0 0.0
  %1761 = vmatpush1.msra.mxu0 0.0
  %1762 = vmatprep.mubr.f32.mxu0 0.0
  %v1763 = vand.u32 %v1094, 4294901760
  %1764 = vmatmul.mubr.f32.gmra.mrb[0].mxu0 %v1763
  %v1765 = vpop.f32.mrb[0].mxu0
  %v1766 = vadd.f32 %v1675, %v1765
  %v1767 = vpop.f32.mrb[0].mxu0
  %1768 = vmatprep.mubr.f32.mxu0 0.0
  %v1769 = vand.u32 %v1097, 4294901760
  %1770 = vmatmul.mubr.f32.gmra.mrb[0].mxu0 %v1769
  %v1771 = vpop.f32.mrb[0].mxu0
  %v1772 = vadd.f32 %v1685, %v1771
  %v1773 = vpop.f32.mrb[0].mxu0
  %1774 = vdwg.mxu0
  %1775 = vmatprep.subr.mxu0 0.0
  %v1776 = vand.u32 %v1047, 4294901760
  %v1777 = vsub.f32 %v1047, %v1776
  %1778 = vmatpush1.msra.mxu0 %v1777
  %1779 = vmatprep.subr.mxu0 0.0
  %v1780 = vand.u32 %v1053, 4294901760
  %v1781 = vsub.f32 %v1053, %v1780
  %1782 = vmatpush1.msra.mxu0 %v1781
  %1783 = vmatprep.subr.mxu0 0.0
  %1784 = vmatpush1.msra.mxu0 0.0
  %1785 = vmatprep.subr.mxu0 0.0
  %1786 = vmatpush1.msra.mxu0 0.0
  %1787 = vmatprep.subr.mxu0 0.0
  %1788 = vmatpush1.msra.mxu0 0.0
  %1789 = vmatprep.subr.mxu0 0.0
  %1790 = vmatpush1.msra.mxu0 0.0
  %1791 = vmatprep.subr.mxu0 0.0
  %1792 = vmatpush1.msra.mxu0 0.0
  %1793 = vmatprep.subr.mxu0 0.0
  %1794 = vmatpush1.msra.mxu0 0.0
  %1795 = vmatprep.subr.mxu0 0.0
  %1796 = vmatpush1.msra.mxu0 0.0
  %1797 = vmatprep.subr.mxu0 0.0
  %1798 = vmatpush1.msra.mxu0 0.0
  %1799 = vmatprep.subr.mxu0 0.0
  %1800 = vmatpush1.msra.mxu0 0.0
  %1801 = vmatprep.subr.mxu0 0.0
  %1802 = vmatpush1.msra.mxu0 0.0
  %1803 = vmatprep.subr.mxu0 0.0
  %1804 = vmatpush1.msra.mxu0 0.0
  %1805 = vmatprep.subr.mxu0 0.0
  %1806 = vmatpush1.msra.mxu0 0.0
  %1807 = vmatprep.subr.mxu0 0.0
  %1808 = vmatpush1.msra.mxu0 0.0
  %1809 = vmatprep.subr.mxu0 0.0
  %1810 = vmatpush1.msra.mxu0 0.0
  %1811 = vmatprep.subr.mxu0 0.0
  %1812 = vmatpush1.msra.mxu0 0.0
  %1813 = vmatprep.subr.mxu0 0.0
  %1814 = vmatpush1.msra.mxu0 0.0
  %1815 = vmatprep.subr.mxu0 0.0
  %1816 = vmatpush1.msra.mxu0 0.0
  %1817 = vmatprep.subr.mxu0 0.0
  %1818 = vmatpush1.msra.mxu0 0.0
  %1819 = vmatprep.subr.mxu0 0.0
  %1820 = vmatpush1.msra.mxu0 0.0
  %1821 = vmatprep.subr.mxu0 0.0
  %1822 = vmatpush1.msra.mxu0 0.0
  %1823 = vmatprep.subr.mxu0 0.0
  %1824 = vmatpush1.msra.mxu0 0.0
  %1825 = vmatprep.subr.mxu0 0.0
  %1826 = vmatpush1.msra.mxu0 0.0
  %1827 = vmatprep.subr.mxu0 0.0
  %1828 = vmatpush1.msra.mxu0 0.0
  %1829 = vmatprep.subr.mxu0 0.0
  %1830 = vmatpush1.msra.mxu0 0.0
  %1831 = vmatprep.subr.mxu0 0.0
  %1832 = vmatpush1.msra.mxu0 0.0
  %1833 = vmatprep.subr.mxu0 0.0
  %1834 = vmatpush1.msra.mxu0 0.0
  %1835 = vmatprep.subr.mxu0 0.0
  %1836 = vmatpush1.msra.mxu0 0.0
  %1837 = vmatprep.subr.mxu0 0.0
  %1838 = vmatpush1.msra.mxu0 0.0
  %1839 = vmatprep.subr.mxu0 0.0
  %1840 = vmatpush1.msra.mxu0 0.0
  %1841 = vmatprep.subr.mxu0 0.0
  %1842 = vmatpush1.msra.mxu0 0.0
  %1843 = vmatprep.mubr.f32.mxu0 0.0
  %v1844 = vand.u32 %v1094, 4294901760
  %v1845 = vsub.f32 %v1094, %v1844
  %1846 = vmatmul.mubr.f32.gmra.mrb[0].mxu0 %v1845
  %v1847 = vpop.f32.mrb[0].mxu0
  %v1848 = vadd.f32 %v1766, %v1847
  %v1849 = vpop.f32.mrb[0].mxu0
  %1850 = vmatprep.mubr.f32.mxu0 0.0
  %v1851 = vand.u32 %v1097, 4294901760
  %v1852 = vsub.f32 %v1097, %v1851
  %1853 = vmatmul.mubr.f32.gmra.mrb[0].mxu0 %v1852
  %v1854 = vpop.f32.mrb[0].mxu0
  %v1855 = vadd.f32 %v1772, %v1854
  %v1856 = vpop.f32.mrb[0].mxu0
  %1857 = vdwg.mxu0
  %1858 = vmatprep.subr.mxu0 0.0
  %v1859 = vand.u32 %v1047, 4294901760
  %1860 = vmatpush1.msra.mxu0 %v1859
  %1861 = vmatprep.subr.mxu0 0.0
  %v1862 = vand.u32 %v1053, 4294901760
  %1863 = vmatpush1.msra.mxu0 %v1862
  %1864 = vmatprep.subr.mxu0 0.0
  %1865 = vmatpush1.msra.mxu0 0.0
  %1866 = vmatprep.subr.mxu0 0.0
  %1867 = vmatpush1.msra.mxu0 0.0
  %1868 = vmatprep.subr.mxu0 0.0
  %1869 = vmatpush1.msra.mxu0 0.0
  %1870 = vmatprep.subr.mxu0 0.0
  %1871 = vmatpush1.msra.mxu0 0.0
  %1872 = vmatprep.subr.mxu0 0.0
  %1873 = vmatpush1.msra.mxu0 0.0
  %1874 = vmatprep.subr.mxu0 0.0
  %1875 = vmatpush1.msra.mxu0 0.0
  %1876 = vmatprep.subr.mxu0 0.0
  %1877 = vmatpush1.msra.mxu0 0.0
  %1878 = vmatprep.subr.mxu0 0.0
  %1879 = vmatpush1.msra.mxu0 0.0
  %1880 = vmatprep.subr.mxu0 0.0
  %1881 = vmatpush1.msra.mxu0 0.0
  %1882 = vmatprep.subr.mxu0 0.0
  %1883 = vmatpush1.msra.mxu0 0.0
  %1884 = vmatprep.subr.mxu0 0.0
  %1885 = vmatpush1.msra.mxu0 0.0
  %1886 = vmatprep.subr.mxu0 0.0
  %1887 = vmatpush1.msra.mxu0 0.0
  %1888 = vmatprep.subr.mxu0 0.0
  %1889 = vmatpush1.msra.mxu0 0.0
  %1890 = vmatprep.subr.mxu0 0.0
  %1891 = vmatpush1.msra.mxu0 0.0
  %1892 = vmatprep.subr.mxu0 0.0
  %1893 = vmatpush1.msra.mxu0 0.0
  %1894 = vmatprep.subr.mxu0 0.0
  %1895 = vmatpush1.msra.mxu0 0.0
  %1896 = vmatprep.subr.mxu0 0.0
  %1897 = vmatpush1.msra.mxu0 0.0
  %1898 = vmatprep.subr.mxu0 0.0
  %1899 = vmatpush1.msra.mxu0 0.0
  %1900 = vmatprep.subr.mxu0 0.0
  %1901 = vmatpush1.msra.mxu0 0.0
  %1902 = vmatprep.subr.mxu0 0.0
  %1903 = vmatpush1.msra.mxu0 0.0
  %1904 = vmatprep.subr.mxu0 0.0
  %1905 = vmatpush1.msra.mxu0 0.0
  %1906 = vmatprep.subr.mxu0 0.0
  %1907 = vmatpush1.msra.mxu0 0.0
  %1908 = vmatprep.subr.mxu0 0.0
  %1909 = vmatpush1.msra.mxu0 0.0
  %1910 = vmatprep.subr.mxu0 0.0
  %1911 = vmatpush1.msra.mxu0 0.0
  %1912 = vmatprep.subr.mxu0 0.0
  %1913 = vmatpush1.msra.mxu0 0.0
  %1914 = vmatprep.subr.mxu0 0.0
  %1915 = vmatpush1.msra.mxu0 0.0
  %1916 = vmatprep.subr.mxu0 0.0
  %1917 = vmatpush1.msra.mxu0 0.0
  %1918 = vmatprep.subr.mxu0 0.0
  %1919 = vmatpush1.msra.mxu0 0.0
  %1920 = vmatprep.subr.mxu0 0.0
  %1921 = vmatpush1.msra.mxu0 0.0
  %1922 = vmatprep.subr.mxu0 0.0
  %1923 = vmatpush1.msra.mxu0 0.0
  %1924 = vmatprep.mubr.f32.mxu0 0.0
  %v1925 = vand.u32 %v1094, 4294901760
  %v1926 = vsub.f32 %v1094, %v1925
  %v1927 = vand.u32 %v1926, 4294901760
  %1928 = vmatmul.mubr.f32.gmra.mrb[0].mxu0 %v1927
  %v1929 = vpop.f32.mrb[0].mxu0
  %v1930 = vadd.f32 %v1848, %v1929
  %v1931 = vpop.f32.mrb[0].mxu0
  %1932 = vmatprep.mubr.f32.mxu0 0.0
  %v1933 = vand.u32 %v1097, 4294901760
  %v1934 = vsub.f32 %v1097, %v1933
  %v1935 = vand.u32 %v1934, 4294901760
  %1936 = vmatmul.mubr.f32.gmra.mrb[0].mxu0 %v1935
  %v1937 = vpop.f32.mrb[0].mxu0
  %v1938 = vadd.f32 %v1855, %v1937
  %v1939 = vpop.f32.mrb[0].mxu0
  %1940 = vdwg.mxu0
  %1941 = vmatprep.subr.mxu0 0.0
  %v1942 = vand.u32 %v1047, 4294901760
  %v1943 = vsub.f32 %v1047, %v1942
  %v1944 = vand.u32 %v1943, 4294901760
  %1945 = vmatpush1.msra.mxu0 %v1944
  %1946 = vmatprep.subr.mxu0 0.0
  %v1947 = vand.u32 %v1053, 4294901760
  %v1948 = vsub.f32 %v1053, %v1947
  %v1949 = vand.u32 %v1948, 4294901760
  %1950 = vmatpush1.msra.mxu0 %v1949
  %1951 = vmatprep.subr.mxu0 0.0
  %1952 = vmatpush1.msra.mxu0 0.0
  %1953 = vmatprep.subr.mxu0 0.0
  %1954 = vmatpush1.msra.mxu0 0.0
  %1955 = vmatprep.subr.mxu0 0.0
  %1956 = vmatpush1.msra.mxu0 0.0
  %1957 = vmatprep.subr.mxu0 0.0
  %1958 = vmatpush1.msra.mxu0 0.0
  %1959 = vmatprep.subr.mxu0 0.0
  %1960 = vmatpush1.msra.mxu0 0.0
  %1961 = vmatprep.subr.mxu0 0.0
  %1962 = vmatpush1.msra.mxu0 0.0
  %1963 = vmatprep.subr.mxu0 0.0
  %1964 = vmatpush1.msra.mxu0 0.0
  %1965 = vmatprep.subr.mxu0 0.0
  %1966 = vmatpush1.msra.mxu0 0.0
  %1967 = vmatprep.subr.mxu0 0.0
  %1968 = vmatpush1.msra.mxu0 0.0
  %1969 = vmatprep.subr.mxu0 0.0
  %1970 = vmatpush1.msra.mxu0 0.0
  %1971 = vmatprep.subr.mxu0 0.0
  %1972 = vmatpush1.msra.mxu0 0.0
  %1973 = vmatprep.subr.mxu0 0.0
  %1974 = vmatpush1.msra.mxu0 0.0
  %1975 = vmatprep.subr.mxu0 0.0
  %1976 = vmatpush1.msra.mxu0 0.0
  %1977 = vmatprep.subr.mxu0 0.0
  %1978 = vmatpush1.msra.mxu0 0.0
  %1979 = vmatprep.subr.mxu0 0.0
  %1980 = vmatpush1.msra.mxu0 0.0
  %1981 = vmatprep.subr.mxu0 0.0
  %1982 = vmatpush1.msra.mxu0 0.0
  %1983 = vmatprep.subr.mxu0 0.0
  %1984 = vmatpush1.msra.mxu0 0.0
  %1985 = vmatprep.subr.mxu0 0.0
  %1986 = vmatpush1.msra.mxu0 0.0
  %1987 = vmatprep.subr.mxu0 0.0
  %1988 = vmatpush1.msra.mxu0 0.0
  %1989 = vmatprep.subr.mxu0 0.0
  %1990 = vmatpush1.msra.mxu0 0.0
  %1991 = vmatprep.subr.mxu0 0.0
  %1992 = vmatpush1.msra.mxu0 0.0
  %1993 = vmatprep.subr.mxu0 0.0
  %1994 = vmatpush1.msra.mxu0 0.0
  %1995 = vmatprep.subr.mxu0 0.0
  %1996 = vmatpush1.msra.mxu0 0.0
  %1997 = vmatprep.subr.mxu0 0.0
  %1998 = vmatpush1.msra.mxu0 0.0
  %1999 = vmatprep.subr.mxu0 0.0
  %2000 = vmatpush1.msra.mxu0 0.0
  %2001 = vmatprep.subr.mxu0 0.0
  %2002 = vmatpush1.msra.mxu0 0.0
  %2003 = vmatprep.subr.mxu0 0.0
  %2004 = vmatpush1.msra.mxu0 0.0
  %2005 = vmatprep.subr.mxu0 0.0
  %2006 = vmatpush1.msra.mxu0 0.0
  %2007 = vmatprep.subr.mxu0 0.0
  %2008 = vmatpush1.msra.mxu0 0.0
  %2009 = vmatprep.subr.mxu0 0.0
  %2010 = vmatpush1.msra.mxu0 0.0
  %2011 = vmatprep.mubr.f32.mxu0 0.0
  %v2012 = vand.u32 %v1094, 4294901760
  %2013 = vmatmul.mubr.f32.gmra.mrb[0].mxu0 %v2012
  %v2014 = vpop.f32.mrb[0].mxu0
  %v2015 = vadd.f32 %v1930, %v2014
  %v2016 = vpop.f32.mrb[0].mxu0
  %2017 = vmatprep.mubr.f32.mxu0 0.0
  %v2018 = vand.u32 %v1097, 4294901760
  %2019 = vmatmul.mubr.f32.gmra.mrb[0].mxu0 %v2018
  %v2020 = vpop.f32.mrb[0].mxu0
  %v2021 = vadd.f32 %v1938, %v2020
  %v2022 = vpop.f32.mrb[0].mxu0
  %2023 = vdwg.mxu0
  %2024 = vmatprep.subr.mxu0 0.0
  %v2025 = vand.u32 %v1047, 4294901760
  %2026 = vmatpush1.msra.mxu0 %v2025
  %2027 = vmatprep.subr.mxu0 0.0
  %v2028 = vand.u32 %v1053, 4294901760
  %2029 = vmatpush1.msra.mxu0 %v2028
  %2030 = vmatprep.subr.mxu0 0.0
  %2031 = vmatpush1.msra.mxu0 0.0
  %2032 = vmatprep.subr.mxu0 0.0
  %2033 = vmatpush1.msra.mxu0 0.0
  %2034 = vmatprep.subr.mxu0 0.0
  %2035 = vmatpush1.msra.mxu0 0.0
  %2036 = vmatprep.subr.mxu0 0.0
  %2037 = vmatpush1.msra.mxu0 0.0
  %2038 = vmatprep.subr.mxu0 0.0
  %2039 = vmatpush1.msra.mxu0 0.0
  %2040 = vmatprep.subr.mxu0 0.0
  %2041 = vmatpush1.msra.mxu0 0.0
  %2042 = vmatprep.subr.mxu0 0.0
  %2043 = vmatpush1.msra.mxu0 0.0
  %2044 = vmatprep.subr.mxu0 0.0
  %2045 = vmatpush1.msra.mxu0 0.0
  %2046 = vmatprep.subr.mxu0 0.0
  %2047 = vmatpush1.msra.mxu0 0.0
  %2048 = vmatprep.subr.mxu0 0.0
  %2049 = vmatpush1.msra.mxu0 0.0
  %2050 = vmatprep.subr.mxu0 0.0
  %2051 = vmatpush1.msra.mxu0 0.0
  %2052 = vmatprep.subr.mxu0 0.0
  %2053 = vmatpush1.msra.mxu0 0.0
  %2054 = vmatprep.subr.mxu0 0.0
  %2055 = vmatpush1.msra.mxu0 0.0
  %2056 = vmatprep.subr.mxu0 0.0
  %2057 = vmatpush1.msra.mxu0 0.0
  %2058 = vmatprep.subr.mxu0 0.0
  %2059 = vmatpush1.msra.mxu0 0.0
  %2060 = vmatprep.subr.mxu0 0.0
  %2061 = vmatpush1.msra.mxu0 0.0
  %2062 = vmatprep.subr.mxu0 0.0
  %2063 = vmatpush1.msra.mxu0 0.0
  %2064 = vmatprep.subr.mxu0 0.0
  %2065 = vmatpush1.msra.mxu0 0.0
  %2066 = vmatprep.subr.mxu0 0.0
  %2067 = vmatpush1.msra.mxu0 0.0
  %2068 = vmatprep.subr.mxu0 0.0
  %2069 = vmatpush1.msra.mxu0 0.0
  %2070 = vmatprep.subr.mxu0 0.0
  %2071 = vmatpush1.msra.mxu0 0.0
  %2072 = vmatprep.subr.mxu0 0.0
  %2073 = vmatpush1.msra.mxu0 0.0
  %2074 = vmatprep.subr.mxu0 0.0
  %2075 = vmatpush1.msra.mxu0 0.0
  %2076 = vmatprep.subr.mxu0 0.0
  %2077 = vmatpush1.msra.mxu0 0.0
  %2078 = vmatprep.subr.mxu0 0.0
  %2079 = vmatpush1.msra.mxu0 0.0
  %2080 = vmatprep.subr.mxu0 0.0
  %2081 = vmatpush1.msra.mxu0 0.0
  %2082 = vmatprep.subr.mxu0 0.0
  %2083 = vmatpush1.msra.mxu0 0.0
  %2084 = vmatprep.subr.mxu0 0.0
  %2085 = vmatpush1.msra.mxu0 0.0
  %2086 = vmatprep.subr.mxu0 0.0
  %2087 = vmatpush1.msra.mxu0 0.0
  %2088 = vmatprep.subr.mxu0 0.0
  %2089 = vmatpush1.msra.mxu0 0.0
  %2090 = vmatprep.mubr.f32.mxu0 0.0
  %v2091 = vand.u32 %v1094, 4294901760
  %2092 = vmatmul.mubr.f32.gmra.mrb[0].mxu0 %v2091
  %v2093 = vpop.f32.mrb[0].mxu0
  %v2094 = vadd.f32 %v2015, %v2093
  %v2095 = vpop.f32.mrb[0].mxu0
  %2096 = vmatprep.mubr.f32.mxu0 0.0
  %v2097 = vand.u32 %v1097, 4294901760
  %2098 = vmatmul.mubr.f32.gmra.mrb[0].mxu0 %v2097
  %v2099 = vpop.f32.mrb[0].mxu0
  %v2100 = vadd.f32 %v2021, %v2099
  %v2101 = vpop.f32.mrb[0].mxu0
  %2102 = vdwg.mxu0
  %2103 = vmatprep.subr.mxu0 0.0
  %v2104 = vand.u32 %v1059, 4294901760
  %2105 = vmatpush1.msra.mxu0 %v2104
  %2106 = vmatprep.subr.mxu0 0.0
  %v2107 = vand.u32 %v1065, 4294901760
  %2108 = vmatpush1.msra.mxu0 %v2107
  %2109 = vmatprep.subr.mxu0 0.0
  %2110 = vmatpush1.msra.mxu0 0.0
  %2111 = vmatprep.subr.mxu0 0.0
  %2112 = vmatpush1.msra.mxu0 0.0
  %2113 = vmatprep.subr.mxu0 0.0
  %2114 = vmatpush1.msra.mxu0 0.0
  %2115 = vmatprep.subr.mxu0 0.0
  %2116 = vmatpush1.msra.mxu0 0.0
  %2117 = vmatprep.subr.mxu0 0.0
  %2118 = vmatpush1.msra.mxu0 0.0
  %2119 = vmatprep.subr.mxu0 0.0
  %2120 = vmatpush1.msra.mxu0 0.0
  %2121 = vmatprep.subr.mxu0 0.0
  %2122 = vmatpush1.msra.mxu0 0.0
  %2123 = vmatprep.subr.mxu0 0.0
  %2124 = vmatpush1.msra.mxu0 0.0
  %2125 = vmatprep.subr.mxu0 0.0
  %2126 = vmatpush1.msra.mxu0 0.0
  %2127 = vmatprep.subr.mxu0 0.0
  %2128 = vmatpush1.msra.mxu0 0.0
  %2129 = vmatprep.subr.mxu0 0.0
  %2130 = vmatpush1.msra.mxu0 0.0
  %2131 = vmatprep.subr.mxu0 0.0
  %2132 = vmatpush1.msra.mxu0 0.0
  %2133 = vmatprep.subr.mxu0 0.0
  %2134 = vmatpush1.msra.mxu0 0.0
  %2135 = vmatprep.subr.mxu0 0.0
  %2136 = vmatpush1.msra.mxu0 0.0
  %2137 = vmatprep.subr.mxu0 0.0
  %2138 = vmatpush1.msra.mxu0 0.0
  %2139 = vmatprep.subr.mxu0 0.0
  %2140 = vmatpush1.msra.mxu0 0.0
  %2141 = vmatprep.subr.mxu0 0.0
  %2142 = vmatpush1.msra.mxu0 0.0
  %2143 = vmatprep.subr.mxu0 0.0
  %2144 = vmatpush1.msra.mxu0 0.0
  %2145 = vmatprep.subr.mxu0 0.0
  %2146 = vmatpush1.msra.mxu0 0.0
  %2147 = vmatprep.subr.mxu0 0.0
  %2148 = vmatpush1.msra.mxu0 0.0
  %2149 = vmatprep.subr.mxu0 0.0
  %2150 = vmatpush1.msra.mxu0 0.0
  %2151 = vmatprep.subr.mxu0 0.0
  %2152 = vmatpush1.msra.mxu0 0.0
  %2153 = vmatprep.subr.mxu0 0.0
  %2154 = vmatpush1.msra.mxu0 0.0
  %2155 = vmatprep.subr.mxu0 0.0
  %2156 = vmatpush1.msra.mxu0 0.0
  %2157 = vmatprep.subr.mxu0 0.0
  %2158 = vmatpush1.msra.mxu0 0.0
  %2159 = vmatprep.subr.mxu0 0.0
  %2160 = vmatpush1.msra.mxu0 0.0
  %2161 = vmatprep.subr.mxu0 0.0
  %2162 = vmatpush1.msra.mxu0 0.0
  %2163 = vmatprep.subr.mxu0 0.0
  %2164 = vmatpush1.msra.mxu0 0.0
  %2165 = vmatprep.subr.mxu0 0.0
  %2166 = vmatpush1.msra.mxu0 0.0
  %2167 = vmatprep.subr.mxu0 0.0
  %2168 = vmatpush1.msra.mxu0 0.0
  %2169 = vmatprep.mubr.f32.mxu0 0.0
  %v2170 = vand.u32 %v1094, 4294901760
  %v2171 = vsub.f32 %v1094, %v2170
  %v2172 = vand.u32 %v2171, 4294901760
  %v2173 = vsub.f32 %v2171, %v2172
  %v2174 = vand.u32 %v2173, 4294901760
  %2175 = vmatmul.mubr.f32.gmra.mrb[0].mxu0 %v2174
  %v2176 = vpop.f32.mrb[0].mxu0
  %v2177 = vadd.f32 0.0, %v2176
  %v2178 = vpop.f32.mrb[0].mxu0
  %2179 = vmatprep.mubr.f32.mxu0 0.0
  %v2180 = vand.u32 %v1097, 4294901760
  %v2181 = vsub.f32 %v1097, %v2180
  %v2182 = vand.u32 %v2181, 4294901760
  %v2183 = vsub.f32 %v2181, %v2182
  %v2184 = vand.u32 %v2183, 4294901760
  %2185 = vmatmul.mubr.f32.gmra.mrb[0].mxu0 %v2184
  %v2186 = vpop.f32.mrb[0].mxu0
  %v2187 = vadd.f32 0.0, %v2186
  %v2188 = vpop.f32.mrb[0].mxu0
  %2189 = vdwg.mxu0
  %2190 = vmatprep.subr.mxu0 0.0
  %v2191 = vand.u32 %v1059, 4294901760
  %v2192 = vsub.f32 %v1059, %v2191
  %v2193 = vand.u32 %v2192, 4294901760
  %v2194 = vsub.f32 %v2192, %v2193
  %v2195 = vand.u32 %v2194, 4294901760
  %2196 = vmatpush1.msra.mxu0 %v2195
  %2197 = vmatprep.subr.mxu0 0.0
  %v2198 = vand.u32 %v1065, 4294901760
  %v2199 = vsub.f32 %v1065, %v2198
  %v2200 = vand.u32 %v2199, 4294901760
  %v2201 = vsub.f32 %v2199, %v2200
  %v2202 = vand.u32 %v2201, 4294901760
  %2203 = vmatpush1.msra.mxu0 %v2202
  %2204 = vmatprep.subr.mxu0 0.0
  %2205 = vmatpush1.msra.mxu0 0.0
  %2206 = vmatprep.subr.mxu0 0.0
  %2207 = vmatpush1.msra.mxu0 0.0
  %2208 = vmatprep.subr.mxu0 0.0
  %2209 = vmatpush1.msra.mxu0 0.0
  %2210 = vmatprep.subr.mxu0 0.0
  %2211 = vmatpush1.msra.mxu0 0.0
  %2212 = vmatprep.subr.mxu0 0.0
  %2213 = vmatpush1.msra.mxu0 0.0
  %2214 = vmatprep.subr.mxu0 0.0
  %2215 = vmatpush1.msra.mxu0 0.0
  %2216 = vmatprep.subr.mxu0 0.0
  %2217 = vmatpush1.msra.mxu0 0.0
  %2218 = vmatprep.subr.mxu0 0.0
  %2219 = vmatpush1.msra.mxu0 0.0
  %2220 = vmatprep.subr.mxu0 0.0
  %2221 = vmatpush1.msra.mxu0 0.0
  %2222 = vmatprep.subr.mxu0 0.0
  %2223 = vmatpush1.msra.mxu0 0.0
  %2224 = vmatprep.subr.mxu0 0.0
  %2225 = vmatpush1.msra.mxu0 0.0
  %2226 = vmatprep.subr.mxu0 0.0
  %2227 = vmatpush1.msra.mxu0 0.0
  %2228 = vmatprep.subr.mxu0 0.0
  %2229 = vmatpush1.msra.mxu0 0.0
  %2230 = vmatprep.subr.mxu0 0.0
  %2231 = vmatpush1.msra.mxu0 0.0
  %2232 = vmatprep.subr.mxu0 0.0
  %2233 = vmatpush1.msra.mxu0 0.0
  %2234 = vmatprep.subr.mxu0 0.0
  %2235 = vmatpush1.msra.mxu0 0.0
  %2236 = vmatprep.subr.mxu0 0.0
  %2237 = vmatpush1.msra.mxu0 0.0
  %2238 = vmatprep.subr.mxu0 0.0
  %2239 = vmatpush1.msra.mxu0 0.0
  %2240 = vmatprep.subr.mxu0 0.0
  %2241 = vmatpush1.msra.mxu0 0.0
  %2242 = vmatprep.subr.mxu0 0.0
  %2243 = vmatpush1.msra.mxu0 0.0
  %2244 = vmatprep.subr.mxu0 0.0
  %2245 = vmatpush1.msra.mxu0 0.0
  %2246 = vmatprep.subr.mxu0 0.0
  %2247 = vmatpush1.msra.mxu0 0.0
  %2248 = vmatprep.subr.mxu0 0.0
  %2249 = vmatpush1.msra.mxu0 0.0
  %2250 = vmatprep.subr.mxu0 0.0
  %2251 = vmatpush1.msra.mxu0 0.0
  %2252 = vmatprep.subr.mxu0 0.0
  %2253 = vmatpush1.msra.mxu0 0.0
  %2254 = vmatprep.subr.mxu0 0.0
  %2255 = vmatpush1.msra.mxu0 0.0
  %2256 = vmatprep.subr.mxu0 0.0
  %2257 = vmatpush1.msra.mxu0 0.0
  %2258 = vmatprep.subr.mxu0 0.0
  %2259 = vmatpush1.msra.mxu0 0.0
  %2260 = vmatprep.subr.mxu0 0.0
  %2261 = vmatpush1.msra.mxu0 0.0
  %2262 = vmatprep.subr.mxu0 0.0
  %2263 = vmatpush1.msra.mxu0 0.0
  %2264 = vmatprep.mubr.f32.mxu0 0.0
  %v2265 = vand.u32 %v1094, 4294901760
  %2266 = vmatmul.mubr.f32.gmra.mrb[0].mxu0 %v2265
  %v2267 = vpop.f32.mrb[0].mxu0
  %v2268 = vadd.f32 %v2177, %v2267
  %v2269 = vpop.f32.mrb[0].mxu0
  %2270 = vmatprep.mubr.f32.mxu0 0.0
  %v2271 = vand.u32 %v1097, 4294901760
  %2272 = vmatmul.mubr.f32.gmra.mrb[0].mxu0 %v2271
  %v2273 = vpop.f32.mrb[0].mxu0
  %v2274 = vadd.f32 %v2187, %v2273
  %v2275 = vpop.f32.mrb[0].mxu0
  %2276 = vdwg.mxu0
  %2277 = vmatprep.subr.mxu0 0.0
  %v2278 = vand.u32 %v1059, 4294901760
  %v2279 = vsub.f32 %v1059, %v2278
  %2280 = vmatpush1.msra.mxu0 %v2279
  %2281 = vmatprep.subr.mxu0 0.0
  %v2282 = vand.u32 %v1065, 4294901760
  %v2283 = vsub.f32 %v1065, %v2282
  %2284 = vmatpush1.msra.mxu0 %v2283
  %2285 = vmatprep.subr.mxu0 0.0
  %2286 = vmatpush1.msra.mxu0 0.0
  %2287 = vmatprep.subr.mxu0 0.0
  %2288 = vmatpush1.msra.mxu0 0.0
  %2289 = vmatprep.subr.mxu0 0.0
  %2290 = vmatpush1.msra.mxu0 0.0
  %2291 = vmatprep.subr.mxu0 0.0
  %2292 = vmatpush1.msra.mxu0 0.0
  %2293 = vmatprep.subr.mxu0 0.0
  %2294 = vmatpush1.msra.mxu0 0.0
  %2295 = vmatprep.subr.mxu0 0.0
  %2296 = vmatpush1.msra.mxu0 0.0
  %2297 = vmatprep.subr.mxu0 0.0
  %2298 = vmatpush1.msra.mxu0 0.0
  %2299 = vmatprep.subr.mxu0 0.0
  %2300 = vmatpush1.msra.mxu0 0.0
  %2301 = vmatprep.subr.mxu0 0.0
  %2302 = vmatpush1.msra.mxu0 0.0
  %2303 = vmatprep.subr.mxu0 0.0
  %2304 = vmatpush1.msra.mxu0 0.0
  %2305 = vmatprep.subr.mxu0 0.0
  %2306 = vmatpush1.msra.mxu0 0.0
  %2307 = vmatprep.subr.mxu0 0.0
  %2308 = vmatpush1.msra.mxu0 0.0
  %2309 = vmatprep.subr.mxu0 0.0
  %2310 = vmatpush1.msra.mxu0 0.0
  %2311 = vmatprep.subr.mxu0 0.0
  %2312 = vmatpush1.msra.mxu0 0.0
  %2313 = vmatprep.subr.mxu0 0.0
  %2314 = vmatpush1.msra.mxu0 0.0
  %2315 = vmatprep.subr.mxu0 0.0
  %2316 = vmatpush1.msra.mxu0 0.0
  %2317 = vmatprep.subr.mxu0 0.0
  %2318 = vmatpush1.msra.mxu0 0.0
  %2319 = vmatprep.subr.mxu0 0.0
  %2320 = vmatpush1.msra.mxu0 0.0
  %2321 = vmatprep.subr.mxu0 0.0
  %2322 = vmatpush1.msra.mxu0 0.0
  %2323 = vmatprep.subr.mxu0 0.0
  %2324 = vmatpush1.msra.mxu0 0.0
  %2325 = vmatprep.subr.mxu0 0.0
  %2326 = vmatpush1.msra.mxu0 0.0
  %2327 = vmatprep.subr.mxu0 0.0
  %2328 = vmatpush1.msra.mxu0 0.0
  %2329 = vmatprep.subr.mxu0 0.0
  %2330 = vmatpush1.msra.mxu0 0.0
  %2331 = vmatprep.subr.mxu0 0.0
  %2332 = vmatpush1.msra.mxu0 0.0
  %2333 = vmatprep.subr.mxu0 0.0
  %2334 = vmatpush1.msra.mxu0 0.0
  %2335 = vmatprep.subr.mxu0 0.0
  %2336 = vmatpush1.msra.mxu0 0.0
  %2337 = vmatprep.subr.mxu0 0.0
  %2338 = vmatpush1.msra.mxu0 0.0
  %2339 = vmatprep.subr.mxu0 0.0
  %2340 = vmatpush1.msra.mxu0 0.0
  %2341 = vmatprep.subr.mxu0 0.0
  %2342 = vmatpush1.msra.mxu0 0.0
  %2343 = vmatprep.subr.mxu0 0.0
  %2344 = vmatpush1.msra.mxu0 0.0
  %2345 = vmatprep.mubr.f32.mxu0 0.0
  %v2346 = vand.u32 %v1094, 4294901760
  %v2347 = vsub.f32 %v1094, %v2346
  %2348 = vmatmul.mubr.f32.gmra.mrb[0].mxu0 %v2347
  %v2349 = vpop.f32.mrb[0].mxu0
  %v2350 = vadd.f32 %v2268, %v2349
  %v2351 = vpop.f32.mrb[0].mxu0
  %2352 = vmatprep.mubr.f32.mxu0 0.0
  %v2353 = vand.u32 %v1097, 4294901760
  %v2354 = vsub.f32 %v1097, %v2353
  %2355 = vmatmul.mubr.f32.gmra.mrb[0].mxu0 %v2354
  %v2356 = vpop.f32.mrb[0].mxu0
  %v2357 = vadd.f32 %v2274, %v2356
  %v2358 = vpop.f32.mrb[0].mxu0
  %2359 = vdwg.mxu0
  %2360 = vmatprep.subr.mxu0 0.0
  %v2361 = vand.u32 %v1059, 4294901760
  %2362 = vmatpush1.msra.mxu0 %v2361
  %2363 = vmatprep.subr.mxu0 0.0
  %v2364 = vand.u32 %v1065, 4294901760
  %2365 = vmatpush1.msra.mxu0 %v2364
  %2366 = vmatprep.subr.mxu0 0.0
  %2367 = vmatpush1.msra.mxu0 0.0
  %2368 = vmatprep.subr.mxu0 0.0
  %2369 = vmatpush1.msra.mxu0 0.0
  %2370 = vmatprep.subr.mxu0 0.0
  %2371 = vmatpush1.msra.mxu0 0.0
  %2372 = vmatprep.subr.mxu0 0.0
  %2373 = vmatpush1.msra.mxu0 0.0
  %2374 = vmatprep.subr.mxu0 0.0
  %2375 = vmatpush1.msra.mxu0 0.0
  %2376 = vmatprep.subr.mxu0 0.0
  %2377 = vmatpush1.msra.mxu0 0.0
  %2378 = vmatprep.subr.mxu0 0.0
  %2379 = vmatpush1.msra.mxu0 0.0
  %2380 = vmatprep.subr.mxu0 0.0
  %2381 = vmatpush1.msra.mxu0 0.0
  %2382 = vmatprep.subr.mxu0 0.0
  %2383 = vmatpush1.msra.mxu0 0.0
  %2384 = vmatprep.subr.mxu0 0.0
  %2385 = vmatpush1.msra.mxu0 0.0
  %2386 = vmatprep.subr.mxu0 0.0
  %2387 = vmatpush1.msra.mxu0 0.0
  %2388 = vmatprep.subr.mxu0 0.0
  %2389 = vmatpush1.msra.mxu0 0.0
  %2390 = vmatprep.subr.mxu0 0.0
  %2391 = vmatpush1.msra.mxu0 0.0
  %2392 = vmatprep.subr.mxu0 0.0
  %2393 = vmatpush1.msra.mxu0 0.0
  %2394 = vmatprep.subr.mxu0 0.0
  %2395 = vmatpush1.msra.mxu0 0.0
  %2396 = vmatprep.subr.mxu0 0.0
  %2397 = vmatpush1.msra.mxu0 0.0
  %2398 = vmatprep.subr.mxu0 0.0
  %2399 = vmatpush1.msra.mxu0 0.0
  %2400 = vmatprep.subr.mxu0 0.0
  %2401 = vmatpush1.msra.mxu0 0.0
  %2402 = vmatprep.subr.mxu0 0.0
  %2403 = vmatpush1.msra.mxu0 0.0
  %2404 = vmatprep.subr.mxu0 0.0
  %2405 = vmatpush1.msra.mxu0 0.0
  %2406 = vmatprep.subr.mxu0 0.0
  %2407 = vmatpush1.msra.mxu0 0.0
  %2408 = vmatprep.subr.mxu0 0.0
  %2409 = vmatpush1.msra.mxu0 0.0
  %2410 = vmatprep.subr.mxu0 0.0
  %2411 = vmatpush1.msra.mxu0 0.0
  %2412 = vmatprep.subr.mxu0 0.0
  %2413 = vmatpush1.msra.mxu0 0.0
  %2414 = vmatprep.subr.mxu0 0.0
  %2415 = vmatpush1.msra.mxu0 0.0
  %2416 = vmatprep.subr.mxu0 0.0
  %2417 = vmatpush1.msra.mxu0 0.0
  %2418 = vmatprep.subr.mxu0 0.0
  %2419 = vmatpush1.msra.mxu0 0.0
  %2420 = vmatprep.subr.mxu0 0.0
  %2421 = vmatpush1.msra.mxu0 0.0
  %2422 = vmatprep.subr.mxu0 0.0
  %2423 = vmatpush1.msra.mxu0 0.0
  %2424 = vmatprep.subr.mxu0 0.0
  %2425 = vmatpush1.msra.mxu0 0.0
  %2426 = vmatprep.mubr.f32.mxu0 0.0
  %v2427 = vand.u32 %v1094, 4294901760
  %v2428 = vsub.f32 %v1094, %v2427
  %v2429 = vand.u32 %v2428, 4294901760
  %2430 = vmatmul.mubr.f32.gmra.mrb[0].mxu0 %v2429
  %v2431 = vpop.f32.mrb[0].mxu0
  %v2432 = vadd.f32 %v2350, %v2431
  %v2433 = vpop.f32.mrb[0].mxu0
  %2434 = vmatprep.mubr.f32.mxu0 0.0
  %v2435 = vand.u32 %v1097, 4294901760
  %v2436 = vsub.f32 %v1097, %v2435
  %v2437 = vand.u32 %v2436, 4294901760
  %2438 = vmatmul.mubr.f32.gmra.mrb[0].mxu0 %v2437
  %v2439 = vpop.f32.mrb[0].mxu0
  %v2440 = vadd.f32 %v2357, %v2439
  %v2441 = vpop.f32.mrb[0].mxu0
  %2442 = vdwg.mxu0
  %2443 = vmatprep.subr.mxu0 0.0
  %v2444 = vand.u32 %v1059, 4294901760
  %v2445 = vsub.f32 %v1059, %v2444
  %v2446 = vand.u32 %v2445, 4294901760
  %2447 = vmatpush1.msra.mxu0 %v2446
  %2448 = vmatprep.subr.mxu0 0.0
  %v2449 = vand.u32 %v1065, 4294901760
  %v2450 = vsub.f32 %v1065, %v2449
  %v2451 = vand.u32 %v2450, 4294901760
  %2452 = vmatpush1.msra.mxu0 %v2451
  %2453 = vmatprep.subr.mxu0 0.0
  %2454 = vmatpush1.msra.mxu0 0.0
  %2455 = vmatprep.subr.mxu0 0.0
  %2456 = vmatpush1.msra.mxu0 0.0
  %2457 = vmatprep.subr.mxu0 0.0
  %2458 = vmatpush1.msra.mxu0 0.0
  %2459 = vmatprep.subr.mxu0 0.0
  %2460 = vmatpush1.msra.mxu0 0.0
  %2461 = vmatprep.subr.mxu0 0.0
  %2462 = vmatpush1.msra.mxu0 0.0
  %2463 = vmatprep.subr.mxu0 0.0
  %2464 = vmatpush1.msra.mxu0 0.0
  %2465 = vmatprep.subr.mxu0 0.0
  %2466 = vmatpush1.msra.mxu0 0.0
  %2467 = vmatprep.subr.mxu0 0.0
  %2468 = vmatpush1.msra.mxu0 0.0
  %2469 = vmatprep.subr.mxu0 0.0
  %2470 = vmatpush1.msra.mxu0 0.0
  %2471 = vmatprep.subr.mxu0 0.0
  %2472 = vmatpush1.msra.mxu0 0.0
  %2473 = vmatprep.subr.mxu0 0.0
  %2474 = vmatpush1.msra.mxu0 0.0
  %2475 = vmatprep.subr.mxu0 0.0
  %2476 = vmatpush1.msra.mxu0 0.0
  %2477 = vmatprep.subr.mxu0 0.0
  %2478 = vmatpush1.msra.mxu0 0.0
  %2479 = vmatprep.subr.mxu0 0.0
  %2480 = vmatpush1.msra.mxu0 0.0
  %2481 = vmatprep.subr.mxu0 0.0
  %2482 = vmatpush1.msra.mxu0 0.0
  %2483 = vmatprep.subr.mxu0 0.0
  %2484 = vmatpush1.msra.mxu0 0.0
  %2485 = vmatprep.subr.mxu0 0.0
  %2486 = vmatpush1.msra.mxu0 0.0
  %2487 = vmatprep.subr.mxu0 0.0
  %2488 = vmatpush1.msra.mxu0 0.0
  %2489 = vmatprep.subr.mxu0 0.0
  %2490 = vmatpush1.msra.mxu0 0.0
  %2491 = vmatprep.subr.mxu0 0.0
  %2492 = vmatpush1.msra.mxu0 0.0
  %2493 = vmatprep.subr.mxu0 0.0
  %2494 = vmatpush1.msra.mxu0 0.0
  %2495 = vmatprep.subr.mxu0 0.0
  %2496 = vmatpush1.msra.mxu0 0.0
  %2497 = vmatprep.subr.mxu0 0.0
  %2498 = vmatpush1.msra.mxu0 0.0
  %2499 = vmatprep.subr.mxu0 0.0
  %2500 = vmatpush1.msra.mxu0 0.0
  %2501 = vmatprep.subr.mxu0 0.0
  %2502 = vmatpush1.msra.mxu0 0.0
  %2503 = vmatprep.subr.mxu0 0.0
  %2504 = vmatpush1.msra.mxu0 0.0
  %2505 = vmatprep.subr.mxu0 0.0
  %2506 = vmatpush1.msra.mxu0 0.0
  %2507 = vmatprep.subr.mxu0 0.0
  %2508 = vmatpush1.msra.mxu0 0.0
  %2509 = vmatprep.subr.mxu0 0.0
  %2510 = vmatpush1.msra.mxu0 0.0
  %2511 = vmatprep.subr.mxu0 0.0
  %2512 = vmatpush1.msra.mxu0 0.0
  %2513 = vmatprep.mubr.f32.mxu0 0.0
  %v2514 = vand.u32 %v1094, 4294901760
  %2515 = vmatmul.mubr.f32.gmra.mrb[0].mxu0 %v2514
  %v2516 = vpop.f32.mrb[0].mxu0
  %v2517 = vadd.f32 %v2432, %v2516
  %v2518 = vpop.f32.mrb[0].mxu0
  %2519 = vmatprep.mubr.f32.mxu0 0.0
  %v2520 = vand.u32 %v1097, 4294901760
  %2521 = vmatmul.mubr.f32.gmra.mrb[0].mxu0 %v2520
  %v2522 = vpop.f32.mrb[0].mxu0
  %v2523 = vadd.f32 %v2440, %v2522
  %v2524 = vpop.f32.mrb[0].mxu0
  %2525 = vdwg.mxu0
  %2526 = vmatprep.subr.mxu0 0.0
  %v2527 = vand.u32 %v1059, 4294901760
  %2528 = vmatpush1.msra.mxu0 %v2527
  %2529 = vmatprep.subr.mxu0 0.0
  %v2530 = vand.u32 %v1065, 4294901760
  %2531 = vmatpush1.msra.mxu0 %v2530
  %2532 = vmatprep.subr.mxu0 0.0
  %2533 = vmatpush1.msra.mxu0 0.0
  %2534 = vmatprep.subr.mxu0 0.0
  %2535 = vmatpush1.msra.mxu0 0.0
  %2536 = vmatprep.subr.mxu0 0.0
  %2537 = vmatpush1.msra.mxu0 0.0
  %2538 = vmatprep.subr.mxu0 0.0
  %2539 = vmatpush1.msra.mxu0 0.0
  %2540 = vmatprep.subr.mxu0 0.0
  %2541 = vmatpush1.msra.mxu0 0.0
  %2542 = vmatprep.subr.mxu0 0.0
  %2543 = vmatpush1.msra.mxu0 0.0
  %2544 = vmatprep.subr.mxu0 0.0
  %2545 = vmatpush1.msra.mxu0 0.0
  %2546 = vmatprep.subr.mxu0 0.0
  %2547 = vmatpush1.msra.mxu0 0.0
  %2548 = vmatprep.subr.mxu0 0.0
  %2549 = vmatpush1.msra.mxu0 0.0
  %2550 = vmatprep.subr.mxu0 0.0
  %2551 = vmatpush1.msra.mxu0 0.0
  %2552 = vmatprep.subr.mxu0 0.0
  %2553 = vmatpush1.msra.mxu0 0.0
  %2554 = vmatprep.subr.mxu0 0.0
  %2555 = vmatpush1.msra.mxu0 0.0
  %2556 = vmatprep.subr.mxu0 0.0
  %2557 = vmatpush1.msra.mxu0 0.0
  %2558 = vmatprep.subr.mxu0 0.0
  %2559 = vmatpush1.msra.mxu0 0.0
  %2560 = vmatprep.subr.mxu0 0.0
  %2561 = vmatpush1.msra.mxu0 0.0
  %2562 = vmatprep.subr.mxu0 0.0
  %2563 = vmatpush1.msra.mxu0 0.0
  %2564 = vmatprep.subr.mxu0 0.0
  %2565 = vmatpush1.msra.mxu0 0.0
  %2566 = vmatprep.subr.mxu0 0.0
  %2567 = vmatpush1.msra.mxu0 0.0
  %2568 = vmatprep.subr.mxu0 0.0
  %2569 = vmatpush1.msra.mxu0 0.0
  %2570 = vmatprep.subr.mxu0 0.0
  %2571 = vmatpush1.msra.mxu0 0.0
  %2572 = vmatprep.subr.mxu0 0.0
  %2573 = vmatpush1.msra.mxu0 0.0
  %2574 = vmatprep.subr.mxu0 0.0
  %2575 = vmatpush1.msra.mxu0 0.0
  %2576 = vmatprep.subr.mxu0 0.0
  %2577 = vmatpush1.msra.mxu0 0.0
  %2578 = vmatprep.subr.mxu0 0.0
  %2579 = vmatpush1.msra.mxu0 0.0
  %2580 = vmatprep.subr.mxu0 0.0
  %2581 = vmatpush1.msra.mxu0 0.0
  %2582 = vmatprep.subr.mxu0 0.0
  %2583 = vmatpush1.msra.mxu0 0.0
  %2584 = vmatprep.subr.mxu0 0.0
  %2585 = vmatpush1.msra.mxu0 0.0
  %2586 = vmatprep.subr.mxu0 0.0
  %2587 = vmatpush1.msra.mxu0 0.0
  %2588 = vmatprep.subr.mxu0 0.0
  %2589 = vmatpush1.msra.mxu0 0.0
  %2590 = vmatprep.subr.mxu0 0.0
  %2591 = vmatpush1.msra.mxu0 0.0
  %2592 = vmatprep.mubr.f32.mxu0 0.0
  %v2593 = vand.u32 %v1094, 4294901760
  %2594 = vmatmul.mubr.f32.gmra.mrb[0].mxu0 %v2593
  %v2595 = vpop.f32.mrb[0].mxu0
  %v2596 = vadd.f32 %v2517, %v2595
  %v2597 = vpop.f32.mrb[0].mxu0
  %2598 = vmatprep.mubr.f32.mxu0 0.0
  %v2599 = vand.u32 %v1097, 4294901760
  %2600 = vmatmul.mubr.f32.gmra.mrb[0].mxu0 %v2599
  %v2601 = vpop.f32.mrb[0].mxu0
  %v2602 = vadd.f32 %v2523, %v2601
  %v2603 = vpop.f32.mrb[0].mxu0
  %2604 = vdwg.mxu0
  %2605 = vmatprep.subr.mxu0 0.0
  %v2606 = vand.u32 %v1071, 4294901760
  %2607 = vmatpush1.msra.mxu0 %v2606
  %2608 = vmatprep.subr.mxu0 0.0
  %v2609 = vand.u32 %v1077, 4294901760
  %2610 = vmatpush1.msra.mxu0 %v2609
  %2611 = vmatprep.subr.mxu0 0.0
  %2612 = vmatpush1.msra.mxu0 0.0
  %2613 = vmatprep.subr.mxu0 0.0
  %2614 = vmatpush1.msra.mxu0 0.0
  %2615 = vmatprep.subr.mxu0 0.0
  %2616 = vmatpush1.msra.mxu0 0.0
  %2617 = vmatprep.subr.mxu0 0.0
  %2618 = vmatpush1.msra.mxu0 0.0
  %2619 = vmatprep.subr.mxu0 0.0
  %2620 = vmatpush1.msra.mxu0 0.0
  %2621 = vmatprep.subr.mxu0 0.0
  %2622 = vmatpush1.msra.mxu0 0.0
  %2623 = vmatprep.subr.mxu0 0.0
  %2624 = vmatpush1.msra.mxu0 0.0
  %2625 = vmatprep.subr.mxu0 0.0
  %2626 = vmatpush1.msra.mxu0 0.0
  %2627 = vmatprep.subr.mxu0 0.0
  %2628 = vmatpush1.msra.mxu0 0.0
  %2629 = vmatprep.subr.mxu0 0.0
  %2630 = vmatpush1.msra.mxu0 0.0
  %2631 = vmatprep.subr.mxu0 0.0
  %2632 = vmatpush1.msra.mxu0 0.0
  %2633 = vmatprep.subr.mxu0 0.0
  %2634 = vmatpush1.msra.mxu0 0.0
  %2635 = vmatprep.subr.mxu0 0.0
  %2636 = vmatpush1.msra.mxu0 0.0
  %2637 = vmatprep.subr.mxu0 0.0
  %2638 = vmatpush1.msra.mxu0 0.0
  %2639 = vmatprep.subr.mxu0 0.0
  %2640 = vmatpush1.msra.mxu0 0.0
  %2641 = vmatprep.subr.mxu0 0.0
  %2642 = vmatpush1.msra.mxu0 0.0
  %2643 = vmatprep.subr.mxu0 0.0
  %2644 = vmatpush1.msra.mxu0 0.0
  %2645 = vmatprep.subr.mxu0 0.0
  %2646 = vmatpush1.msra.mxu0 0.0
  %2647 = vmatprep.subr.mxu0 0.0
  %2648 = vmatpush1.msra.mxu0 0.0
  %2649 = vmatprep.subr.mxu0 0.0
  %2650 = vmatpush1.msra.mxu0 0.0
  %2651 = vmatprep.subr.mxu0 0.0
  %2652 = vmatpush1.msra.mxu0 0.0
  %2653 = vmatprep.subr.mxu0 0.0
  %2654 = vmatpush1.msra.mxu0 0.0
  %2655 = vmatprep.subr.mxu0 0.0
  %2656 = vmatpush1.msra.mxu0 0.0
  %2657 = vmatprep.subr.mxu0 0.0
  %2658 = vmatpush1.msra.mxu0 0.0
  %2659 = vmatprep.subr.mxu0 0.0
  %2660 = vmatpush1.msra.mxu0 0.0
  %2661 = vmatprep.subr.mxu0 0.0
  %2662 = vmatpush1.msra.mxu0 0.0
  %2663 = vmatprep.subr.mxu0 0.0
  %2664 = vmatpush1.msra.mxu0 0.0
  %2665 = vmatprep.subr.mxu0 0.0
  %2666 = vmatpush1.msra.mxu0 0.0
  %2667 = vmatprep.subr.mxu0 0.0
  %2668 = vmatpush1.msra.mxu0 0.0
  %2669 = vmatprep.subr.mxu0 0.0
  %2670 = vmatpush1.msra.mxu0 0.0
  %2671 = vmatprep.mubr.f32.mxu0 0.0
  %v2672 = vand.u32 %v1094, 4294901760
  %v2673 = vsub.f32 %v1094, %v2672
  %v2674 = vand.u32 %v2673, 4294901760
  %v2675 = vsub.f32 %v2673, %v2674
  %v2676 = vand.u32 %v2675, 4294901760
  %2677 = vmatmul.mubr.f32.gmra.mrb[0].mxu0 %v2676
  %v2678 = vpop.f32.mrb[0].mxu0
  %v2679 = vadd.f32 0.0, %v2678
  %v2680 = vpop.f32.mrb[0].mxu0
  %2681 = vmatprep.mubr.f32.mxu0 0.0
  %v2682 = vand.u32 %v1097, 4294901760
  %v2683 = vsub.f32 %v1097, %v2682
  %v2684 = vand.u32 %v2683, 4294901760
  %v2685 = vsub.f32 %v2683, %v2684
  %v2686 = vand.u32 %v2685, 4294901760
  %2687 = vmatmul.mubr.f32.gmra.mrb[0].mxu0 %v2686
  %v2688 = vpop.f32.mrb[0].mxu0
  %v2689 = vadd.f32 0.0, %v2688
  %v2690 = vpop.f32.mrb[0].mxu0
  %2691 = vdwg.mxu0
  %2692 = vmatprep.subr.mxu0 0.0
  %v2693 = vand.u32 %v1071, 4294901760
  %v2694 = vsub.f32 %v1071, %v2693
  %v2695 = vand.u32 %v2694, 4294901760
  %v2696 = vsub.f32 %v2694, %v2695
  %v2697 = vand.u32 %v2696, 4294901760
  %2698 = vmatpush1.msra.mxu0 %v2697
  %2699 = vmatprep.subr.mxu0 0.0
  %v2700 = vand.u32 %v1077, 4294901760
  %v2701 = vsub.f32 %v1077, %v2700
  %v2702 = vand.u32 %v2701, 4294901760
  %v2703 = vsub.f32 %v2701, %v2702
  %v2704 = vand.u32 %v2703, 4294901760
  %2705 = vmatpush1.msra.mxu0 %v2704
  %2706 = vmatprep.subr.mxu0 0.0
  %2707 = vmatpush1.msra.mxu0 0.0
  %2708 = vmatprep.subr.mxu0 0.0
  %2709 = vmatpush1.msra.mxu0 0.0
  %2710 = vmatprep.subr.mxu0 0.0
  %2711 = vmatpush1.msra.mxu0 0.0
  %2712 = vmatprep.subr.mxu0 0.0
  %2713 = vmatpush1.msra.mxu0 0.0
  %2714 = vmatprep.subr.mxu0 0.0
  %2715 = vmatpush1.msra.mxu0 0.0
  %2716 = vmatprep.subr.mxu0 0.0
  %2717 = vmatpush1.msra.mxu0 0.0
  %2718 = vmatprep.subr.mxu0 0.0
  %2719 = vmatpush1.msra.mxu0 0.0
  %2720 = vmatprep.subr.mxu0 0.0
  %2721 = vmatpush1.msra.mxu0 0.0
  %2722 = vmatprep.subr.mxu0 0.0
  %2723 = vmatpush1.msra.mxu0 0.0
  %2724 = vmatprep.subr.mxu0 0.0
  %2725 = vmatpush1.msra.mxu0 0.0
  %2726 = vmatprep.subr.mxu0 0.0
  %2727 = vmatpush1.msra.mxu0 0.0
  %2728 = vmatprep.subr.mxu0 0.0
  %2729 = vmatpush1.msra.mxu0 0.0
  %2730 = vmatprep.subr.mxu0 0.0
  %2731 = vmatpush1.msra.mxu0 0.0
  %2732 = vmatprep.subr.mxu0 0.0
  %2733 = vmatpush1.msra.mxu0 0.0
  %2734 = vmatprep.subr.mxu0 0.0
  %2735 = vmatpush1.msra.mxu0 0.0
  %2736 = vmatprep.subr.mxu0 0.0
  %2737 = vmatpush1.msra.mxu0 0.0
  %2738 = vmatprep.subr.mxu0 0.0
  %2739 = vmatpush1.msra.mxu0 0.0
  %2740 = vmatprep.subr.mxu0 0.0
  %2741 = vmatpush1.msra.mxu0 0.0
  %2742 = vmatprep.subr.mxu0 0.0
  %2743 = vmatpush1.msra.mxu0 0.0
  %2744 = vmatprep.subr.mxu0 0.0
  %2745 = vmatpush1.msra.mxu0 0.0
  %2746 = vmatprep.subr.mxu0 0.0
  %2747 = vmatpush1.msra.mxu0 0.0
  %2748 = vmatprep.subr.mxu0 0.0
  %2749 = vmatpush1.msra.mxu0 0.0
  %2750 = vmatprep.subr.mxu0 0.0
  %2751 = vmatpush1.msra.mxu0 0.0
  %2752 = vmatprep.subr.mxu0 0.0
  %2753 = vmatpush1.msra.mxu0 0.0
  %2754 = vmatprep.subr.mxu0 0.0
  %2755 = vmatpush1.msra.mxu0 0.0
  %2756 = vmatprep.subr.mxu0 0.0
  %2757 = vmatpush1.msra.mxu0 0.0
  %2758 = vmatprep.subr.mxu0 0.0
  %2759 = vmatpush1.msra.mxu0 0.0
  %2760 = vmatprep.subr.mxu0 0.0
  %2761 = vmatpush1.msra.mxu0 0.0
  %2762 = vmatprep.subr.mxu0 0.0
  %2763 = vmatpush1.msra.mxu0 0.0
  %2764 = vmatprep.subr.mxu0 0.0
  %2765 = vmatpush1.msra.mxu0 0.0
  %2766 = vmatprep.mubr.f32.mxu0 0.0
  %v2767 = vand.u32 %v1094, 4294901760
  %2768 = vmatmul.mubr.f32.gmra.mrb[0].mxu0 %v2767
  %v2769 = vpop.f32.mrb[0].mxu0
  %v2770 = vadd.f32 %v2679, %v2769
  %v2771 = vpop.f32.mrb[0].mxu0
  %2772 = vmatprep.mubr.f32.mxu0 0.0
  %v2773 = vand.u32 %v1097, 4294901760
  %2774 = vmatmul.mubr.f32.gmra.mrb[0].mxu0 %v2773
  %v2775 = vpop.f32.mrb[0].mxu0
  %v2776 = vadd.f32 %v2689, %v2775
  %v2777 = vpop.f32.mrb[0].mxu0
  %2778 = vdwg.mxu0
  %2779 = vmatprep.subr.mxu0 0.0
  %v2780 = vand.u32 %v1071, 4294901760
  %v2781 = vsub.f32 %v1071, %v2780
  %2782 = vmatpush1.msra.mxu0 %v2781
  %2783 = vmatprep.subr.mxu0 0.0
  %v2784 = vand.u32 %v1077, 4294901760
  %v2785 = vsub.f32 %v1077, %v2784
  %2786 = vmatpush1.msra.mxu0 %v2785
  %2787 = vmatprep.subr.mxu0 0.0
  %2788 = vmatpush1.msra.mxu0 0.0
  %2789 = vmatprep.subr.mxu0 0.0
  %2790 = vmatpush1.msra.mxu0 0.0
  %2791 = vmatprep.subr.mxu0 0.0
  %2792 = vmatpush1.msra.mxu0 0.0
  %2793 = vmatprep.subr.mxu0 0.0
  %2794 = vmatpush1.msra.mxu0 0.0
  %2795 = vmatprep.subr.mxu0 0.0
  %2796 = vmatpush1.msra.mxu0 0.0
  %2797 = vmatprep.subr.mxu0 0.0
  %2798 = vmatpush1.msra.mxu0 0.0
  %2799 = vmatprep.subr.mxu0 0.0
  %2800 = vmatpush1.msra.mxu0 0.0
  %2801 = vmatprep.subr.mxu0 0.0
  %2802 = vmatpush1.msra.mxu0 0.0
  %2803 = vmatprep.subr.mxu0 0.0
  %2804 = vmatpush1.msra.mxu0 0.0
  %2805 = vmatprep.subr.mxu0 0.0
  %2806 = vmatpush1.msra.mxu0 0.0
  %2807 = vmatprep.subr.mxu0 0.0
  %2808 = vmatpush1.msra.mxu0 0.0
  %2809 = vmatprep.subr.mxu0 0.0
  %2810 = vmatpush1.msra.mxu0 0.0
  %2811 = vmatprep.subr.mxu0 0.0
  %2812 = vmatpush1.msra.mxu0 0.0
  %2813 = vmatprep.subr.mxu0 0.0
  %2814 = vmatpush1.msra.mxu0 0.0
  %2815 = vmatprep.subr.mxu0 0.0
  %2816 = vmatpush1.msra.mxu0 0.0
  %2817 = vmatprep.subr.mxu0 0.0
  %2818 = vmatpush1.msra.mxu0 0.0
  %2819 = vmatprep.subr.mxu0 0.0
  %2820 = vmatpush1.msra.mxu0 0.0
  %2821 = vmatprep.subr.mxu0 0.0
  %2822 = vmatpush1.msra.mxu0 0.0
  %2823 = vmatprep.subr.mxu0 0.0
  %2824 = vmatpush1.msra.mxu0 0.0
  %2825 = vmatprep.subr.mxu0 0.0
  %2826 = vmatpush1.msra.mxu0 0.0
  %2827 = vmatprep.subr.mxu0 0.0
  %2828 = vmatpush1.msra.mxu0 0.0
  %2829 = vmatprep.subr.mxu0 0.0
  %2830 = vmatpush1.msra.mxu0 0.0
  %2831 = vmatprep.subr.mxu0 0.0
  %2832 = vmatpush1.msra.mxu0 0.0
  %2833 = vmatprep.subr.mxu0 0.0
  %2834 = vmatpush1.msra.mxu0 0.0
  %2835 = vmatprep.subr.mxu0 0.0
  %2836 = vmatpush1.msra.mxu0 0.0
  %2837 = vmatprep.subr.mxu0 0.0
  %2838 = vmatpush1.msra.mxu0 0.0
  %2839 = vmatprep.subr.mxu0 0.0
  %2840 = vmatpush1.msra.mxu0 0.0
  %2841 = vmatprep.subr.mxu0 0.0
  %2842 = vmatpush1.msra.mxu0 0.0
  %2843 = vmatprep.subr.mxu0 0.0
  %2844 = vmatpush1.msra.mxu0 0.0
  %2845 = vmatprep.subr.mxu0 0.0
  %2846 = vmatpush1.msra.mxu0 0.0
  %2847 = vmatprep.mubr.f32.mxu0 0.0
  %v2848 = vand.u32 %v1094, 4294901760
  %v2849 = vsub.f32 %v1094, %v2848
  %2850 = vmatmul.mubr.f32.gmra.mrb[0].mxu0 %v2849
  %v2851 = vpop.f32.mrb[0].mxu0
  %v2852 = vadd.f32 %v2770, %v2851
  %v2853 = vpop.f32.mrb[0].mxu0
  %2854 = vmatprep.mubr.f32.mxu0 0.0
  %v2855 = vand.u32 %v1097, 4294901760
  %v2856 = vsub.f32 %v1097, %v2855
  %2857 = vmatmul.mubr.f32.gmra.mrb[0].mxu0 %v2856
  %v2858 = vpop.f32.mrb[0].mxu0
  %v2859 = vadd.f32 %v2776, %v2858
  %v2860 = vpop.f32.mrb[0].mxu0
  %2861 = vdwg.mxu0
  %2862 = vmatprep.subr.mxu0 0.0
  %v2863 = vand.u32 %v1071, 4294901760
  %2864 = vmatpush1.msra.mxu0 %v2863
  %2865 = vmatprep.subr.mxu0 0.0
  %v2866 = vand.u32 %v1077, 4294901760
  %2867 = vmatpush1.msra.mxu0 %v2866
  %2868 = vmatprep.subr.mxu0 0.0
  %2869 = vmatpush1.msra.mxu0 0.0
  %2870 = vmatprep.subr.mxu0 0.0
  %2871 = vmatpush1.msra.mxu0 0.0
  %2872 = vmatprep.subr.mxu0 0.0
  %2873 = vmatpush1.msra.mxu0 0.0
  %2874 = vmatprep.subr.mxu0 0.0
  %2875 = vmatpush1.msra.mxu0 0.0
  %2876 = vmatprep.subr.mxu0 0.0
  %2877 = vmatpush1.msra.mxu0 0.0
  %2878 = vmatprep.subr.mxu0 0.0
  %2879 = vmatpush1.msra.mxu0 0.0
  %2880 = vmatprep.subr.mxu0 0.0
  %2881 = vmatpush1.msra.mxu0 0.0
  %2882 = vmatprep.subr.mxu0 0.0
  %2883 = vmatpush1.msra.mxu0 0.0
  %2884 = vmatprep.subr.mxu0 0.0
  %2885 = vmatpush1.msra.mxu0 0.0
  %2886 = vmatprep.subr.mxu0 0.0
  %2887 = vmatpush1.msra.mxu0 0.0
  %2888 = vmatprep.subr.mxu0 0.0
  %2889 = vmatpush1.msra.mxu0 0.0
  %2890 = vmatprep.subr.mxu0 0.0
  %2891 = vmatpush1.msra.mxu0 0.0
  %2892 = vmatprep.subr.mxu0 0.0
  %2893 = vmatpush1.msra.mxu0 0.0
  %2894 = vmatprep.subr.mxu0 0.0
  %2895 = vmatpush1.msra.mxu0 0.0
  %2896 = vmatprep.subr.mxu0 0.0
  %2897 = vmatpush1.msra.mxu0 0.0
  %2898 = vmatprep.subr.mxu0 0.0
  %2899 = vmatpush1.msra.mxu0 0.0
  %2900 = vmatprep.subr.mxu0 0.0
  %2901 = vmatpush1.msra.mxu0 0.0
  %2902 = vmatprep.subr.mxu0 0.0
  %2903 = vmatpush1.msra.mxu0 0.0
  %2904 = vmatprep.subr.mxu0 0.0
  %2905 = vmatpush1.msra.mxu0 0.0
  %2906 = vmatprep.subr.mxu0 0.0
  %2907 = vmatpush1.msra.mxu0 0.0
  %2908 = vmatprep.subr.mxu0 0.0
  %2909 = vmatpush1.msra.mxu0 0.0
  %2910 = vmatprep.subr.mxu0 0.0
  %2911 = vmatpush1.msra.mxu0 0.0
  %2912 = vmatprep.subr.mxu0 0.0
  %2913 = vmatpush1.msra.mxu0 0.0
  %2914 = vmatprep.subr.mxu0 0.0
  %2915 = vmatpush1.msra.mxu0 0.0
  %2916 = vmatprep.subr.mxu0 0.0
  %2917 = vmatpush1.msra.mxu0 0.0
  %2918 = vmatprep.subr.mxu0 0.0
  %2919 = vmatpush1.msra.mxu0 0.0
  %2920 = vmatprep.subr.mxu0 0.0
  %2921 = vmatpush1.msra.mxu0 0.0
  %2922 = vmatprep.subr.mxu0 0.0
  %2923 = vmatpush1.msra.mxu0 0.0
  %2924 = vmatprep.subr.mxu0 0.0
  %2925 = vmatpush1.msra.mxu0 0.0
  %2926 = vmatprep.subr.mxu0 0.0
  %2927 = vmatpush1.msra.mxu0 0.0
  %2928 = vmatprep.mubr.f32.mxu0 0.0
  %v2929 = vand.u32 %v1094, 4294901760
  %v2930 = vsub.f32 %v1094, %v2929
  %v2931 = vand.u32 %v2930, 4294901760
  %2932 = vmatmul.mubr.f32.gmra.mrb[0].mxu0 %v2931
  %v2933 = vpop.f32.mrb[0].mxu0
  %v2934 = vadd.f32 %v2852, %v2933
  %v2935 = vpop.f32.mrb[0].mxu0
  %2936 = vmatprep.mubr.f32.mxu0 0.0
  %v2937 = vand.u32 %v1097, 4294901760
  %v2938 = vsub.f32 %v1097, %v2937
  %v2939 = vand.u32 %v2938, 4294901760
  %2940 = vmatmul.mubr.f32.gmra.mrb[0].mxu0 %v2939
  %v2941 = vpop.f32.mrb[0].mxu0
  %v2942 = vadd.f32 %v2859, %v2941
  %v2943 = vpop.f32.mrb[0].mxu0
  %2944 = vdwg.mxu0
  %2945 = vmatprep.subr.mxu0 0.0
  %v2946 = vand.u32 %v1071, 4294901760
  %v2947 = vsub.f32 %v1071, %v2946
  %v2948 = vand.u32 %v2947, 4294901760
  %2949 = vmatpush1.msra.mxu0 %v2948
  %2950 = vmatprep.subr.mxu0 0.0
  %v2951 = vand.u32 %v1077, 4294901760
  %v2952 = vsub.f32 %v1077, %v2951
  %v2953 = vand.u32 %v2952, 4294901760
  %2954 = vmatpush1.msra.mxu0 %v2953
  %2955 = vmatprep.subr.mxu0 0.0
  %2956 = vmatpush1.msra.mxu0 0.0
  %2957 = vmatprep.subr.mxu0 0.0
  %2958 = vmatpush1.msra.mxu0 0.0
  %2959 = vmatprep.subr.mxu0 0.0
  %2960 = vmatpush1.msra.mxu0 0.0
  %2961 = vmatprep.subr.mxu0 0.0
  %2962 = vmatpush1.msra.mxu0 0.0
  %2963 = vmatprep.subr.mxu0 0.0
  %2964 = vmatpush1.msra.mxu0 0.0
  %2965 = vmatprep.subr.mxu0 0.0
  %2966 = vmatpush1.msra.mxu0 0.0
  %2967 = vmatprep.subr.mxu0 0.0
  %2968 = vmatpush1.msra.mxu0 0.0
  %2969 = vmatprep.subr.mxu0 0.0
  %2970 = vmatpush1.msra.mxu0 0.0
  %2971 = vmatprep.subr.mxu0 0.0
  %2972 = vmatpush1.msra.mxu0 0.0
  %2973 = vmatprep.subr.mxu0 0.0
  %2974 = vmatpush1.msra.mxu0 0.0
  %2975 = vmatprep.subr.mxu0 0.0
  %2976 = vmatpush1.msra.mxu0 0.0
  %2977 = vmatprep.subr.mxu0 0.0
  %2978 = vmatpush1.msra.mxu0 0.0
  %2979 = vmatprep.subr.mxu0 0.0
  %2980 = vmatpush1.msra.mxu0 0.0
  %2981 = vmatprep.subr.mxu0 0.0
  %2982 = vmatpush1.msra.mxu0 0.0
  %2983 = vmatprep.subr.mxu0 0.0
  %2984 = vmatpush1.msra.mxu0 0.0
  %2985 = vmatprep.subr.mxu0 0.0
  %2986 = vmatpush1.msra.mxu0 0.0
  %2987 = vmatprep.subr.mxu0 0.0
  %2988 = vmatpush1.msra.mxu0 0.0
  %2989 = vmatprep.subr.mxu0 0.0
  %2990 = vmatpush1.msra.mxu0 0.0
  %2991 = vmatprep.subr.mxu0 0.0
  %2992 = vmatpush1.msra.mxu0 0.0
  %2993 = vmatprep.subr.mxu0 0.0
  %2994 = vmatpush1.msra.mxu0 0.0
  %2995 = vmatprep.subr.mxu0 0.0
  %2996 = vmatpush1.msra.mxu0 0.0
  %2997 = vmatprep.subr.mxu0 0.0
  %2998 = vmatpush1.msra.mxu0 0.0
  %2999 = vmatprep.subr.mxu0 0.0
  %3000 = vmatpush1.msra.mxu0 0.0
  %3001 = vmatprep.subr.mxu0 0.0
  %3002 = vmatpush1.msra.mxu0 0.0
  %3003 = vmatprep.subr.mxu0 0.0
  %3004 = vmatpush1.msra.mxu0 0.0
  %3005 = vmatprep.subr.mxu0 0.0
  %3006 = vmatpush1.msra.mxu0 0.0
  %3007 = vmatprep.subr.mxu0 0.0
  %3008 = vmatpush1.msra.mxu0 0.0
  %3009 = vmatprep.subr.mxu0 0.0
  %3010 = vmatpush1.msra.mxu0 0.0
  %3011 = vmatprep.subr.mxu0 0.0
  %3012 = vmatpush1.msra.mxu0 0.0
  %3013 = vmatprep.subr.mxu0 0.0
  %3014 = vmatpush1.msra.mxu0 0.0
  %3015 = vmatprep.mubr.f32.mxu0 0.0
  %v3016 = vand.u32 %v1094, 4294901760
  %3017 = vmatmul.mubr.f32.gmra.mrb[0].mxu0 %v3016
  %v3018 = vpop.f32.mrb[0].mxu0
  %v3019 = vadd.f32 %v2934, %v3018
  %v3020 = vpop.f32.mrb[0].mxu0
  %3021 = vmatprep.mubr.f32.mxu0 0.0
  %v3022 = vand.u32 %v1097, 4294901760
  %3023 = vmatmul.mubr.f32.gmra.mrb[0].mxu0 %v3022
  %v3024 = vpop.f32.mrb[0].mxu0
  %v3025 = vadd.f32 %v2942, %v3024
  %v3026 = vpop.f32.mrb[0].mxu0
  %3027 = vdwg.mxu0
  %3028 = vmatprep.subr.mxu0 0.0
  %v3029 = vand.u32 %v1071, 4294901760
  %3030 = vmatpush1.msra.mxu0 %v3029
  %3031 = vmatprep.subr.mxu0 0.0
  %v3032 = vand.u32 %v1077, 4294901760
  %3033 = vmatpush1.msra.mxu0 %v3032
  %3034 = vmatprep.subr.mxu0 0.0
  %3035 = vmatpush1.msra.mxu0 0.0
  %3036 = vmatprep.subr.mxu0 0.0
  %3037 = vmatpush1.msra.mxu0 0.0
  %3038 = vmatprep.subr.mxu0 0.0
  %3039 = vmatpush1.msra.mxu0 0.0
  %3040 = vmatprep.subr.mxu0 0.0
  %3041 = vmatpush1.msra.mxu0 0.0
  %3042 = vmatprep.subr.mxu0 0.0
  %3043 = vmatpush1.msra.mxu0 0.0
  %3044 = vmatprep.subr.mxu0 0.0
  %3045 = vmatpush1.msra.mxu0 0.0
  %3046 = vmatprep.subr.mxu0 0.0
  %3047 = vmatpush1.msra.mxu0 0.0
  %3048 = vmatprep.subr.mxu0 0.0
  %3049 = vmatpush1.msra.mxu0 0.0
  %3050 = vmatprep.subr.mxu0 0.0
  %3051 = vmatpush1.msra.mxu0 0.0
  %3052 = vmatprep.subr.mxu0 0.0
  %3053 = vmatpush1.msra.mxu0 0.0
  %3054 = vmatprep.subr.mxu0 0.0
  %3055 = vmatpush1.msra.mxu0 0.0
  %3056 = vmatprep.subr.mxu0 0.0
  %3057 = vmatpush1.msra.mxu0 0.0
  %3058 = vmatprep.subr.mxu0 0.0
  %3059 = vmatpush1.msra.mxu0 0.0
  %3060 = vmatprep.subr.mxu0 0.0
  %3061 = vmatpush1.msra.mxu0 0.0
  %3062 = vmatprep.subr.mxu0 0.0
  %3063 = vmatpush1.msra.mxu0 0.0
  %3064 = vmatprep.subr.mxu0 0.0
  %3065 = vmatpush1.msra.mxu0 0.0
  %3066 = vmatprep.subr.mxu0 0.0
  %3067 = vmatpush1.msra.mxu0 0.0
  %3068 = vmatprep.subr.mxu0 0.0
  %3069 = vmatpush1.msra.mxu0 0.0
  %3070 = vmatprep.subr.mxu0 0.0
  %3071 = vmatpush1.msra.mxu0 0.0
  %3072 = vmatprep.subr.mxu0 0.0
  %3073 = vmatpush1.msra.mxu0 0.0
  %3074 = vmatprep.subr.mxu0 0.0
  %3075 = vmatpush1.msra.mxu0 0.0
  %3076 = vmatprep.subr.mxu0 0.0
  %3077 = vmatpush1.msra.mxu0 0.0
  %3078 = vmatprep.subr.mxu0 0.0
  %3079 = vmatpush1.msra.mxu0 0.0
  %3080 = vmatprep.subr.mxu0 0.0
  %3081 = vmatpush1.msra.mxu0 0.0
  %3082 = vmatprep.subr.mxu0 0.0
  %3083 = vmatpush1.msra.mxu0 0.0
  %3084 = vmatprep.subr.mxu0 0.0
  %3085 = vmatpush1.msra.mxu0 0.0
  %3086 = vmatprep.subr.mxu0 0.0
  %3087 = vmatpush1.msra.mxu0 0.0
  %3088 = vmatprep.subr.mxu0 0.0
  %3089 = vmatpush1.msra.mxu0 0.0
  %3090 = vmatprep.subr.mxu0 0.0
  %3091 = vmatpush1.msra.mxu0 0.0
  %3092 = vmatprep.subr.mxu0 0.0
  %3093 = vmatpush1.msra.mxu0 0.0
  %3094 = vmatprep.mubr.f32.mxu0 0.0
  %v3095 = vand.u32 %v1094, 4294901760
  %3096 = vmatmul.mubr.f32.gmra.mrb[0].mxu0 %v3095
  %v3097 = vpop.f32.mrb[0].mxu0
  %v3098 = vadd.f32 %v3019, %v3097
  %v3099 = vpop.f32.mrb[0].mxu0
  %3100 = vmatprep.mubr.f32.mxu0 0.0
  %v3101 = vand.u32 %v1097, 4294901760
  %3102 = vmatmul.mubr.f32.gmra.mrb[0].mxu0 %v3101
  %v3103 = vpop.f32.mrb[0].mxu0
  %v3104 = vadd.f32 %v3025, %v3103
  %v3105 = vpop.f32.mrb[0].mxu0
  %3106 = vdwg.mxu0
  %3107 = vmatprep.subr.mxu0 0.0
  %v3108 = vand.u32 %v1083, 4294901760
  %3109 = vmatpush1.msra.mxu0 %v3108
  %3110 = vmatprep.subr.mxu0 0.0
  %v3111 = vand.u32 %v1089, 4294901760
  %3112 = vmatpush1.msra.mxu0 %v3111
  %3113 = vmatprep.subr.mxu0 0.0
  %3114 = vmatpush1.msra.mxu0 0.0
  %3115 = vmatprep.subr.mxu0 0.0
  %3116 = vmatpush1.msra.mxu0 0.0
  %3117 = vmatprep.subr.mxu0 0.0
  %3118 = vmatpush1.msra.mxu0 0.0
  %3119 = vmatprep.subr.mxu0 0.0
  %3120 = vmatpush1.msra.mxu0 0.0
  %3121 = vmatprep.subr.mxu0 0.0
  %3122 = vmatpush1.msra.mxu0 0.0
  %3123 = vmatprep.subr.mxu0 0.0
  %3124 = vmatpush1.msra.mxu0 0.0
  %3125 = vmatprep.subr.mxu0 0.0
  %3126 = vmatpush1.msra.mxu0 0.0
  %3127 = vmatprep.subr.mxu0 0.0
  %3128 = vmatpush1.msra.mxu0 0.0
  %3129 = vmatprep.subr.mxu0 0.0
  %3130 = vmatpush1.msra.mxu0 0.0
  %3131 = vmatprep.subr.mxu0 0.0
  %3132 = vmatpush1.msra.mxu0 0.0
  %3133 = vmatprep.subr.mxu0 0.0
  %3134 = vmatpush1.msra.mxu0 0.0
  %3135 = vmatprep.subr.mxu0 0.0
  %3136 = vmatpush1.msra.mxu0 0.0
  %3137 = vmatprep.subr.mxu0 0.0
  %3138 = vmatpush1.msra.mxu0 0.0
  %3139 = vmatprep.subr.mxu0 0.0
  %3140 = vmatpush1.msra.mxu0 0.0
  %3141 = vmatprep.subr.mxu0 0.0
  %3142 = vmatpush1.msra.mxu0 0.0
  %3143 = vmatprep.subr.mxu0 0.0
  %3144 = vmatpush1.msra.mxu0 0.0
  %3145 = vmatprep.subr.mxu0 0.0
  %3146 = vmatpush1.msra.mxu0 0.0
  %3147 = vmatprep.subr.mxu0 0.0
  %3148 = vmatpush1.msra.mxu0 0.0
  %3149 = vmatprep.subr.mxu0 0.0
  %3150 = vmatpush1.msra.mxu0 0.0
  %3151 = vmatprep.subr.mxu0 0.0
  %3152 = vmatpush1.msra.mxu0 0.0
  %3153 = vmatprep.subr.mxu0 0.0
  %3154 = vmatpush1.msra.mxu0 0.0
  %3155 = vmatprep.subr.mxu0 0.0
  %3156 = vmatpush1.msra.mxu0 0.0
  %3157 = vmatprep.subr.mxu0 0.0
  %3158 = vmatpush1.msra.mxu0 0.0
  %3159 = vmatprep.subr.mxu0 0.0
  %3160 = vmatpush1.msra.mxu0 0.0
  %3161 = vmatprep.subr.mxu0 0.0
  %3162 = vmatpush1.msra.mxu0 0.0
  %3163 = vmatprep.subr.mxu0 0.0
  %3164 = vmatpush1.msra.mxu0 0.0
  %3165 = vmatprep.subr.mxu0 0.0
  %3166 = vmatpush1.msra.mxu0 0.0
  %3167 = vmatprep.subr.mxu0 0.0
  %3168 = vmatpush1.msra.mxu0 0.0
  %3169 = vmatprep.subr.mxu0 0.0
  %3170 = vmatpush1.msra.mxu0 0.0
  %3171 = vmatprep.subr.mxu0 0.0
  %3172 = vmatpush1.msra.mxu0 0.0
  %3173 = vmatprep.mubr.f32.mxu0 0.0
  %v3174 = vand.u32 %v1094, 4294901760
  %v3175 = vsub.f32 %v1094, %v3174
  %v3176 = vand.u32 %v3175, 4294901760
  %v3177 = vsub.f32 %v3175, %v3176
  %v3178 = vand.u32 %v3177, 4294901760
  %3179 = vmatmul.mubr.f32.gmra.mrb[0].mxu0 %v3178
  %v3180 = vpop.f32.mrb[0].mxu0
  %v3181 = vadd.f32 0.0, %v3180
  %v3182 = vpop.f32.mrb[0].mxu0
  %3183 = vmatprep.mubr.f32.mxu0 0.0
  %v3184 = vand.u32 %v1097, 4294901760
  %v3185 = vsub.f32 %v1097, %v3184
  %v3186 = vand.u32 %v3185, 4294901760
  %v3187 = vsub.f32 %v3185, %v3186
  %v3188 = vand.u32 %v3187, 4294901760
  %3189 = vmatmul.mubr.f32.gmra.mrb[0].mxu0 %v3188
  %v3190 = vpop.f32.mrb[0].mxu0
  %v3191 = vadd.f32 0.0, %v3190
  %v3192 = vpop.f32.mrb[0].mxu0
  %3193 = vdwg.mxu0
  %3194 = vmatprep.subr.mxu0 0.0
  %v3195 = vand.u32 %v1083, 4294901760
  %v3196 = vsub.f32 %v1083, %v3195
  %v3197 = vand.u32 %v3196, 4294901760
  %v3198 = vsub.f32 %v3196, %v3197
  %v3199 = vand.u32 %v3198, 4294901760
  %3200 = vmatpush1.msra.mxu0 %v3199
  %3201 = vmatprep.subr.mxu0 0.0
  %v3202 = vand.u32 %v1089, 4294901760
  %v3203 = vsub.f32 %v1089, %v3202
  %v3204 = vand.u32 %v3203, 4294901760
  %v3205 = vsub.f32 %v3203, %v3204
  %v3206 = vand.u32 %v3205, 4294901760
  %3207 = vmatpush1.msra.mxu0 %v3206
  %3208 = vmatprep.subr.mxu0 0.0
  %3209 = vmatpush1.msra.mxu0 0.0
  %3210 = vmatprep.subr.mxu0 0.0
  %3211 = vmatpush1.msra.mxu0 0.0
  %3212 = vmatprep.subr.mxu0 0.0
  %3213 = vmatpush1.msra.mxu0 0.0
  %3214 = vmatprep.subr.mxu0 0.0
  %3215 = vmatpush1.msra.mxu0 0.0
  %3216 = vmatprep.subr.mxu0 0.0
  %3217 = vmatpush1.msra.mxu0 0.0
  %3218 = vmatprep.subr.mxu0 0.0
  %3219 = vmatpush1.msra.mxu0 0.0
  %3220 = vmatprep.subr.mxu0 0.0
  %3221 = vmatpush1.msra.mxu0 0.0
  %3222 = vmatprep.subr.mxu0 0.0
  %3223 = vmatpush1.msra.mxu0 0.0
  %3224 = vmatprep.subr.mxu0 0.0
  %3225 = vmatpush1.msra.mxu0 0.0
  %3226 = vmatprep.subr.mxu0 0.0
  %3227 = vmatpush1.msra.mxu0 0.0
  %3228 = vmatprep.subr.mxu0 0.0
  %3229 = vmatpush1.msra.mxu0 0.0
  %3230 = vmatprep.subr.mxu0 0.0
  %3231 = vmatpush1.msra.mxu0 0.0
  %3232 = vmatprep.subr.mxu0 0.0
  %3233 = vmatpush1.msra.mxu0 0.0
  %3234 = vmatprep.subr.mxu0 0.0
  %3235 = vmatpush1.msra.mxu0 0.0
  %3236 = vmatprep.subr.mxu0 0.0
  %3237 = vmatpush1.msra.mxu0 0.0
  %3238 = vmatprep.subr.mxu0 0.0
  %3239 = vmatpush1.msra.mxu0 0.0
  %3240 = vmatprep.subr.mxu0 0.0
  %3241 = vmatpush1.msra.mxu0 0.0
  %3242 = vmatprep.subr.mxu0 0.0
  %3243 = vmatpush1.msra.mxu0 0.0
  %3244 = vmatprep.subr.mxu0 0.0
  %3245 = vmatpush1.msra.mxu0 0.0
  %3246 = vmatprep.subr.mxu0 0.0
  %3247 = vmatpush1.msra.mxu0 0.0
  %3248 = vmatprep.subr.mxu0 0.0
  %3249 = vmatpush1.msra.mxu0 0.0
  %3250 = vmatprep.subr.mxu0 0.0
  %3251 = vmatpush1.msra.mxu0 0.0
  %3252 = vmatprep.subr.mxu0 0.0
  %3253 = vmatpush1.msra.mxu0 0.0
  %3254 = vmatprep.subr.mxu0 0.0
  %3255 = vmatpush1.msra.mxu0 0.0
  %3256 = vmatprep.subr.mxu0 0.0
  %3257 = vmatpush1.msra.mxu0 0.0
  %3258 = vmatprep.subr.mxu0 0.0
  %3259 = vmatpush1.msra.mxu0 0.0
  %3260 = vmatprep.subr.mxu0 0.0
  %3261 = vmatpush1.msra.mxu0 0.0
  %3262 = vmatprep.subr.mxu0 0.0
  %3263 = vmatpush1.msra.mxu0 0.0
  %3264 = vmatprep.subr.mxu0 0.0
  %3265 = vmatpush1.msra.mxu0 0.0
  %3266 = vmatprep.subr.mxu0 0.0
  %3267 = vmatpush1.msra.mxu0 0.0
  %3268 = vmatprep.mubr.f32.mxu0 0.0
  %v3269 = vand.u32 %v1094, 4294901760
  %3270 = vmatmul.mubr.f32.gmra.mrb[0].mxu0 %v3269
  %v3271 = vpop.f32.mrb[0].mxu0
  %v3272 = vadd.f32 %v3181, %v3271
  %v3273 = vpop.f32.mrb[0].mxu0
  %3274 = vmatprep.mubr.f32.mxu0 0.0
  %v3275 = vand.u32 %v1097, 4294901760
  %3276 = vmatmul.mubr.f32.gmra.mrb[0].mxu0 %v3275
  %v3277 = vpop.f32.mrb[0].mxu0
  %v3278 = vadd.f32 %v3191, %v3277
  %v3279 = vpop.f32.mrb[0].mxu0
  %3280 = vdwg.mxu0
  %3281 = vmatprep.subr.mxu0 0.0
  %v3282 = vand.u32 %v1083, 4294901760
  %v3283 = vsub.f32 %v1083, %v3282
  %3284 = vmatpush1.msra.mxu0 %v3283
  %3285 = vmatprep.subr.mxu0 0.0
  %v3286 = vand.u32 %v1089, 4294901760
  %v3287 = vsub.f32 %v1089, %v3286
  %3288 = vmatpush1.msra.mxu0 %v3287
  %3289 = vmatprep.subr.mxu0 0.0
  %3290 = vmatpush1.msra.mxu0 0.0
  %3291 = vmatprep.subr.mxu0 0.0
  %3292 = vmatpush1.msra.mxu0 0.0
  %3293 = vmatprep.subr.mxu0 0.0
  %3294 = vmatpush1.msra.mxu0 0.0
  %3295 = vmatprep.subr.mxu0 0.0
  %3296 = vmatpush1.msra.mxu0 0.0
  %3297 = vmatprep.subr.mxu0 0.0
  %3298 = vmatpush1.msra.mxu0 0.0
  %3299 = vmatprep.subr.mxu0 0.0
  %3300 = vmatpush1.msra.mxu0 0.0
  %3301 = vmatprep.subr.mxu0 0.0
  %3302 = vmatpush1.msra.mxu0 0.0
  %3303 = vmatprep.subr.mxu0 0.0
  %3304 = vmatpush1.msra.mxu0 0.0
  %3305 = vmatprep.subr.mxu0 0.0
  %3306 = vmatpush1.msra.mxu0 0.0
  %3307 = vmatprep.subr.mxu0 0.0
  %3308 = vmatpush1.msra.mxu0 0.0
  %3309 = vmatprep.subr.mxu0 0.0
  %3310 = vmatpush1.msra.mxu0 0.0
  %3311 = vmatprep.subr.mxu0 0.0
  %3312 = vmatpush1.msra.mxu0 0.0
  %3313 = vmatprep.subr.mxu0 0.0
  %3314 = vmatpush1.msra.mxu0 0.0
  %3315 = vmatprep.subr.mxu0 0.0
  %3316 = vmatpush1.msra.mxu0 0.0
  %3317 = vmatprep.subr.mxu0 0.0
  %3318 = vmatpush1.msra.mxu0 0.0
  %3319 = vmatprep.subr.mxu0 0.0
  %3320 = vmatpush1.msra.mxu0 0.0
  %3321 = vmatprep.subr.mxu0 0.0
  %3322 = vmatpush1.msra.mxu0 0.0
  %3323 = vmatprep.subr.mxu0 0.0
  %3324 = vmatpush1.msra.mxu0 0.0
  %3325 = vmatprep.subr.mxu0 0.0
  %3326 = vmatpush1.msra.mxu0 0.0
  %3327 = vmatprep.subr.mxu0 0.0
  %3328 = vmatpush1.msra.mxu0 0.0
  %3329 = vmatprep.subr.mxu0 0.0
  %3330 = vmatpush1.msra.mxu0 0.0
  %3331 = vmatprep.subr.mxu0 0.0
  %3332 = vmatpush1.msra.mxu0 0.0
  %3333 = vmatprep.subr.mxu0 0.0
  %3334 = vmatpush1.msra.mxu0 0.0
  %3335 = vmatprep.subr.mxu0 0.0
  %3336 = vmatpush1.msra.mxu0 0.0
  %3337 = vmatprep.subr.mxu0 0.0
  %3338 = vmatpush1.msra.mxu0 0.0
  %3339 = vmatprep.subr.mxu0 0.0
  %3340 = vmatpush1.msra.mxu0 0.0
  %3341 = vmatprep.subr.mxu0 0.0
  %3342 = vmatpush1.msra.mxu0 0.0
  %3343 = vmatprep.subr.mxu0 0.0
  %3344 = vmatpush1.msra.mxu0 0.0
  %3345 = vmatprep.subr.mxu0 0.0
  %3346 = vmatpush1.msra.mxu0 0.0
  %3347 = vmatprep.subr.mxu0 0.0
  %3348 = vmatpush1.msra.mxu0 0.0
  %3349 = vmatprep.mubr.f32.mxu0 0.0
  %v3350 = vand.u32 %v1094, 4294901760
  %v3351 = vsub.f32 %v1094, %v3350
  %3352 = vmatmul.mubr.f32.gmra.mrb[0].mxu0 %v3351
  %v3353 = vpop.f32.mrb[0].mxu0
  %v3354 = vadd.f32 %v3272, %v3353
  %v3355 = vpop.f32.mrb[0].mxu0
  %3356 = vmatprep.mubr.f32.mxu0 0.0
  %v3357 = vand.u32 %v1097, 4294901760
  %v3358 = vsub.f32 %v1097, %v3357
  %3359 = vmatmul.mubr.f32.gmra.mrb[0].mxu0 %v3358
  %v3360 = vpop.f32.mrb[0].mxu0
  %v3361 = vadd.f32 %v3278, %v3360
  %v3362 = vpop.f32.mrb[0].mxu0
  %3363 = vdwg.mxu0
  %3364 = vmatprep.subr.mxu0 0.0
  %v3365 = vand.u32 %v1083, 4294901760
  %3366 = vmatpush1.msra.mxu0 %v3365
  %3367 = vmatprep.subr.mxu0 0.0
  %v3368 = vand.u32 %v1089, 4294901760
  %3369 = vmatpush1.msra.mxu0 %v3368
  %3370 = vmatprep.subr.mxu0 0.0
  %3371 = vmatpush1.msra.mxu0 0.0
  %3372 = vmatprep.subr.mxu0 0.0
  %3373 = vmatpush1.msra.mxu0 0.0
  %3374 = vmatprep.subr.mxu0 0.0
  %3375 = vmatpush1.msra.mxu0 0.0
  %3376 = vmatprep.subr.mxu0 0.0
  %3377 = vmatpush1.msra.mxu0 0.0
  %3378 = vmatprep.subr.mxu0 0.0
  %3379 = vmatpush1.msra.mxu0 0.0
  %3380 = vmatprep.subr.mxu0 0.0
  %3381 = vmatpush1.msra.mxu0 0.0
  %3382 = vmatprep.subr.mxu0 0.0
  %3383 = vmatpush1.msra.mxu0 0.0
  %3384 = vmatprep.subr.mxu0 0.0
  %3385 = vmatpush1.msra.mxu0 0.0
  %3386 = vmatprep.subr.mxu0 0.0
  %3387 = vmatpush1.msra.mxu0 0.0
  %3388 = vmatprep.subr.mxu0 0.0
  %3389 = vmatpush1.msra.mxu0 0.0
  %3390 = vmatprep.subr.mxu0 0.0
  %3391 = vmatpush1.msra.mxu0 0.0
  %3392 = vmatprep.subr.mxu0 0.0
  %3393 = vmatpush1.msra.mxu0 0.0
  %3394 = vmatprep.subr.mxu0 0.0
  %3395 = vmatpush1.msra.mxu0 0.0
  %3396 = vmatprep.subr.mxu0 0.0
  %3397 = vmatpush1.msra.mxu0 0.0
  %3398 = vmatprep.subr.mxu0 0.0
  %3399 = vmatpush1.msra.mxu0 0.0
  %3400 = vmatprep.subr.mxu0 0.0
  %3401 = vmatpush1.msra.mxu0 0.0
  %3402 = vmatprep.subr.mxu0 0.0
  %3403 = vmatpush1.msra.mxu0 0.0
  %3404 = vmatprep.subr.mxu0 0.0
  %3405 = vmatpush1.msra.mxu0 0.0
  %3406 = vmatprep.subr.mxu0 0.0
  %3407 = vmatpush1.msra.mxu0 0.0
  %3408 = vmatprep.subr.mxu0 0.0
  %3409 = vmatpush1.msra.mxu0 0.0
  %3410 = vmatprep.subr.mxu0 0.0
  %3411 = vmatpush1.msra.mxu0 0.0
  %3412 = vmatprep.subr.mxu0 0.0
  %3413 = vmatpush1.msra.mxu0 0.0
  %3414 = vmatprep.subr.mxu0 0.0
  %3415 = vmatpush1.msra.mxu0 0.0
  %3416 = vmatprep.subr.mxu0 0.0
  %3417 = vmatpush1.msra.mxu0 0.0
  %3418 = vmatprep.subr.mxu0 0.0
  %3419 = vmatpush1.msra.mxu0 0.0
  %3420 = vmatprep.subr.mxu0 0.0
  %3421 = vmatpush1.msra.mxu0 0.0
  %3422 = vmatprep.subr.mxu0 0.0
  %3423 = vmatpush1.msra.mxu0 0.0
  %3424 = vmatprep.subr.mxu0 0.0
  %3425 = vmatpush1.msra.mxu0 0.0
  %3426 = vmatprep.subr.mxu0 0.0
  %3427 = vmatpush1.msra.mxu0 0.0
  %3428 = vmatprep.subr.mxu0 0.0
  %3429 = vmatpush1.msra.mxu0 0.0
  %3430 = vmatprep.mubr.f32.mxu0 0.0
  %v3431 = vand.u32 %v1094, 4294901760
  %v3432 = vsub.f32 %v1094, %v3431
  %v3433 = vand.u32 %v3432, 4294901760
  %3434 = vmatmul.mubr.f32.gmra.mrb[0].mxu0 %v3433
  %v3435 = vpop.f32.mrb[0].mxu0
  %v3436 = vadd.f32 %v3354, %v3435
  %v3437 = vpop.f32.mrb[0].mxu0
  %3438 = vmatprep.mubr.f32.mxu0 0.0
  %v3439 = vand.u32 %v1097, 4294901760
  %v3440 = vsub.f32 %v1097, %v3439
  %v3441 = vand.u32 %v3440, 4294901760
  %3442 = vmatmul.mubr.f32.gmra.mrb[0].mxu0 %v3441
  %v3443 = vpop.f32.mrb[0].mxu0
  %v3444 = vadd.f32 %v3361, %v3443
  %v3445 = vpop.f32.mrb[0].mxu0
  %3446 = vdwg.mxu0
  %3447 = vmatprep.subr.mxu0 0.0
  %v3448 = vand.u32 %v1083, 4294901760
  %v3449 = vsub.f32 %v1083, %v3448
  %v3450 = vand.u32 %v3449, 4294901760
  %3451 = vmatpush1.msra.mxu0 %v3450
  %3452 = vmatprep.subr.mxu0 0.0
  %v3453 = vand.u32 %v1089, 4294901760
  %v3454 = vsub.f32 %v1089, %v3453
  %v3455 = vand.u32 %v3454, 4294901760
  %3456 = vmatpush1.msra.mxu0 %v3455
  %3457 = vmatprep.subr.mxu0 0.0
  %3458 = vmatpush1.msra.mxu0 0.0
  %3459 = vmatprep.subr.mxu0 0.0
  %3460 = vmatpush1.msra.mxu0 0.0
  %3461 = vmatprep.subr.mxu0 0.0
  %3462 = vmatpush1.msra.mxu0 0.0
  %3463 = vmatprep.subr.mxu0 0.0
  %3464 = vmatpush1.msra.mxu0 0.0
  %3465 = vmatprep.subr.mxu0 0.0
  %3466 = vmatpush1.msra.mxu0 0.0
  %3467 = vmatprep.subr.mxu0 0.0
  %3468 = vmatpush1.msra.mxu0 0.0
  %3469 = vmatprep.subr.mxu0 0.0
  %3470 = vmatpush1.msra.mxu0 0.0
  %3471 = vmatprep.subr.mxu0 0.0
  %3472 = vmatpush1.msra.mxu0 0.0
  %3473 = vmatprep.subr.mxu0 0.0
  %3474 = vmatpush1.msra.mxu0 0.0
  %3475 = vmatprep.subr.mxu0 0.0
  %3476 = vmatpush1.msra.mxu0 0.0
  %3477 = vmatprep.subr.mxu0 0.0
  %3478 = vmatpush1.msra.mxu0 0.0
  %3479 = vmatprep.subr.mxu0 0.0
  %3480 = vmatpush1.msra.mxu0 0.0
  %3481 = vmatprep.subr.mxu0 0.0
  %3482 = vmatpush1.msra.mxu0 0.0
  %3483 = vmatprep.subr.mxu0 0.0
  %3484 = vmatpush1.msra.mxu0 0.0
  %3485 = vmatprep.subr.mxu0 0.0
  %3486 = vmatpush1.msra.mxu0 0.0
  %3487 = vmatprep.subr.mxu0 0.0
  %3488 = vmatpush1.msra.mxu0 0.0
  %3489 = vmatprep.subr.mxu0 0.0
  %3490 = vmatpush1.msra.mxu0 0.0
  %3491 = vmatprep.subr.mxu0 0.0
  %3492 = vmatpush1.msra.mxu0 0.0
  %3493 = vmatprep.subr.mxu0 0.0
  %3494 = vmatpush1.msra.mxu0 0.0
  %3495 = vmatprep.subr.mxu0 0.0
  %3496 = vmatpush1.msra.mxu0 0.0
  %3497 = vmatprep.subr.mxu0 0.0
  %3498 = vmatpush1.msra.mxu0 0.0
  %3499 = vmatprep.subr.mxu0 0.0
  %3500 = vmatpush1.msra.mxu0 0.0
  %3501 = vmatprep.subr.mxu0 0.0
  %3502 = vmatpush1.msra.mxu0 0.0
  %3503 = vmatprep.subr.mxu0 0.0
  %3504 = vmatpush1.msra.mxu0 0.0
  %3505 = vmatprep.subr.mxu0 0.0
  %3506 = vmatpush1.msra.mxu0 0.0
  %3507 = vmatprep.subr.mxu0 0.0
  %3508 = vmatpush1.msra.mxu0 0.0
  %3509 = vmatprep.subr.mxu0 0.0
  %3510 = vmatpush1.msra.mxu0 0.0
  %3511 = vmatprep.subr.mxu0 0.0
  %3512 = vmatpush1.msra.mxu0 0.0
  %3513 = vmatprep.subr.mxu0 0.0
  %3514 = vmatpush1.msra.mxu0 0.0
  %3515 = vmatprep.subr.mxu0 0.0
  %3516 = vmatpush1.msra.mxu0 0.0
  %3517 = vmatprep.mubr.f32.mxu0 0.0
  %v3518 = vand.u32 %v1094, 4294901760
  %3519 = vmatmul.mubr.f32.gmra.mrb[0].mxu0 %v3518
  %v3520 = vpop.f32.mrb[0].mxu0
  %v3521 = vadd.f32 %v3436, %v3520
  %v3522 = vpop.f32.mrb[0].mxu0
  %3523 = vmatprep.mubr.f32.mxu0 0.0
  %v3524 = vand.u32 %v1097, 4294901760
  %3525 = vmatmul.mubr.f32.gmra.mrb[0].mxu0 %v3524
  %v3526 = vpop.f32.mrb[0].mxu0
  %v3527 = vadd.f32 %v3444, %v3526
  %v3528 = vpop.f32.mrb[0].mxu0
  %3529 = vdwg.mxu0
  %3530 = vmatprep.subr.mxu0 0.0
  %v3531 = vand.u32 %v1083, 4294901760
  %3532 = vmatpush1.msra.mxu0 %v3531
  %3533 = vmatprep.subr.mxu0 0.0
  %v3534 = vand.u32 %v1089, 4294901760
  %3535 = vmatpush1.msra.mxu0 %v3534
  %3536 = vmatprep.subr.mxu0 0.0
  %3537 = vmatpush1.msra.mxu0 0.0
  %3538 = vmatprep.subr.mxu0 0.0
  %3539 = vmatpush1.msra.mxu0 0.0
  %3540 = vmatprep.subr.mxu0 0.0
  %3541 = vmatpush1.msra.mxu0 0.0
  %3542 = vmatprep.subr.mxu0 0.0
  %3543 = vmatpush1.msra.mxu0 0.0
  %3544 = vmatprep.subr.mxu0 0.0
  %3545 = vmatpush1.msra.mxu0 0.0
  %3546 = vmatprep.subr.mxu0 0.0
  %3547 = vmatpush1.msra.mxu0 0.0
  %3548 = vmatprep.subr.mxu0 0.0
  %3549 = vmatpush1.msra.mxu0 0.0
  %3550 = vmatprep.subr.mxu0 0.0
  %3551 = vmatpush1.msra.mxu0 0.0
  %3552 = vmatprep.subr.mxu0 0.0
  %3553 = vmatpush1.msra.mxu0 0.0
  %3554 = vmatprep.subr.mxu0 0.0
  %3555 = vmatpush1.msra.mxu0 0.0
  %3556 = vmatprep.subr.mxu0 0.0
  %3557 = vmatpush1.msra.mxu0 0.0
  %3558 = vmatprep.subr.mxu0 0.0
  %3559 = vmatpush1.msra.mxu0 0.0
  %3560 = vmatprep.subr.mxu0 0.0
  %3561 = vmatpush1.msra.mxu0 0.0
  %3562 = vmatprep.subr.mxu0 0.0
  %3563 = vmatpush1.msra.mxu0 0.0
  %3564 = vmatprep.subr.mxu0 0.0
  %3565 = vmatpush1.msra.mxu0 0.0
  %3566 = vmatprep.subr.mxu0 0.0
  %3567 = vmatpush1.msra.mxu0 0.0
  %3568 = vmatprep.subr.mxu0 0.0
  %3569 = vmatpush1.msra.mxu0 0.0
  %3570 = vmatprep.subr.mxu0 0.0
  %3571 = vmatpush1.msra.mxu0 0.0
  %3572 = vmatprep.subr.mxu0 0.0
  %3573 = vmatpush1.msra.mxu0 0.0
  %3574 = vmatprep.subr.mxu0 0.0
  %3575 = vmatpush1.msra.mxu0 0.0
  %3576 = vmatprep.subr.mxu0 0.0
  %3577 = vmatpush1.msra.mxu0 0.0
  %3578 = vmatprep.subr.mxu0 0.0
  %3579 = vmatpush1.msra.mxu0 0.0
  %3580 = vmatprep.subr.mxu0 0.0
  %3581 = vmatpush1.msra.mxu0 0.0
  %3582 = vmatprep.subr.mxu0 0.0
  %3583 = vmatpush1.msra.mxu0 0.0
  %3584 = vmatprep.subr.mxu0 0.0
  %3585 = vmatpush1.msra.mxu0 0.0
  %3586 = vmatprep.subr.mxu0 0.0
  %3587 = vmatpush1.msra.mxu0 0.0
  %3588 = vmatprep.subr.mxu0 0.0
  %3589 = vmatpush1.msra.mxu0 0.0
  %3590 = vmatprep.subr.mxu0 0.0
  %3591 = vmatpush1.msra.mxu0 0.0
  %3592 = vmatprep.subr.mxu0 0.0
  %3593 = vmatpush1.msra.mxu0 0.0
  %3594 = vmatprep.subr.mxu0 0.0
  %3595 = vmatpush1.msra.mxu0 0.0
  %3596 = vmatprep.mubr.f32.mxu0 0.0
  %v3597 = vand.u32 %v1094, 4294901760
  %3598 = vmatmul.mubr.f32.gmra.mrb[0].mxu0 %v3597
  %v3599 = vpop.f32.mrb[0].mxu0
  %v3600 = vadd.f32 %v3521, %v3599
  %v3601 = vpop.f32.mrb[0].mxu0
  %3602 = vmatprep.mubr.f32.mxu0 0.0
  %v3603 = vand.u32 %v1097, 4294901760
  %3604 = vmatmul.mubr.f32.gmra.mrb[0].mxu0 %v3603
  %v3605 = vpop.f32.mrb[0].mxu0
  %v3606 = vadd.f32 %v3527, %v3605
  %v3607 = vpop.f32.mrb[0].mxu0
  %3608 = vdwg.mxu0
  %v3609 = vmul.f32 %v1592, %v1592
  %v3610 = vmul.f32 %v1598, %v1598
  %v3611 = vmul.f32 %v2094, %v2094
  %v3612 = vmul.f32 %v2100, %v2100
  %v3613 = vmul.f32 %v1592, %v2094
  %v3614 = vmul.f32 %v1598, %v2100
  %v3615 = vsub.f32 %v2596, %v3609
  %v3616 = vsub.f32 %v2602, %v3610
  %v3617 = vsub.f32 %v3098, %v3611
  %v3618 = vsub.f32 %v3104, %v3612
  %v3619 = vsub.f32 %v3600, %v3613
  %v3620 = vsub.f32 %v3606, %v3614
  %v3621 = vmul.f32 %v3613, 2.0
  %v3622 = vmul.f32 %v3614, 2.0
  %v3623 = vadd.f32 %v3621, 0.0001
  %v3624 = vadd.f32 %v3622, 0.0001
  %v3625 = vmul.f32 %v3619, 2.0
  %v3626 = vmul.f32 %v3620, 2.0
  %v3627 = vadd.f32 %v3625, 0.0009
  %v3628 = vadd.f32 %v3626, 0.0009
  %v3629 = vmul.f32 %v3623, %v3627
  %v3630 = vmul.f32 %v3624, %v3628
  %v3631 = vadd.f32 %v3609, %v3611
  %v3632 = vadd.f32 %v3610, %v3612
  %v3633 = vadd.f32 %v3631, 0.0001
  %v3634 = vadd.f32 %v3632, 0.0001
  %v3635 = vadd.f32 %v3615, %v3617
  %v3636 = vadd.f32 %v3616, %v3618
  %v3637 = vadd.f32 %v3635, 0.0009
  %v3638 = vadd.f32 %v3636, 0.0009
  %v3639 = vmul.f32 %v3633, %v3637
  %v3640 = vmul.f32 %v3634, %v3638
  %v3641 = vrcp.pop %v3639
  %v3642 = vrcp.pop %v3640
  %v3643 = vmul.f32 %v3629, %v3641
  %v3644 = vmul.f32 %v3630, %v3642
  %3645 = vmatprep.subr.mxu0 0.0
  %v3646 = vand.u32 %v42, 4294901760
  %3647 = vmatpush1.msra.mxu0 %v3646
  %3648 = vmatprep.subr.mxu0 0.0
  %v3649 = vand.u32 %v43, 4294901760
  %3650 = vmatpush1.msra.mxu0 %v3649
  %3651 = vmatprep.subr.mxu0 0.0
  %v3652 = vand.u32 %v44, 4294901760
  %3653 = vmatpush1.msra.mxu0 %v3652
  %3654 = vmatprep.subr.mxu0 0.0
  %v3655 = vand.u32 %v45, 4294901760
  %3656 = vmatpush1.msra.mxu0 %v3655
  %3657 = vmatprep.subr.mxu0 0.0
  %v3658 = vand.u32 %v46, 4294901760
  %3659 = vmatpush1.msra.mxu0 %v3658
  %3660 = vmatprep.subr.mxu0 0.0
  %v3661 = vand.u32 %v47, 4294901760
  %3662 = vmatpush1.msra.mxu0 %v3661
  %3663 = vmatprep.subr.mxu0 0.0
  %v3664 = vand.u32 %v48, 4294901760
  %3665 = vmatpush1.msra.mxu0 %v3664
  %3666 = vmatprep.subr.mxu0 0.0
  %v3667 = vand.u32 %v49, 4294901760
  %3668 = vmatpush1.msra.mxu0 %v3667
  %3669 = vmatprep.subr.mxu0 0.0
  %v3670 = vand.u32 %v50, 4294901760
  %3671 = vmatpush1.msra.mxu0 %v3670
  %3672 = vmatprep.subr.mxu0 0.0
  %v3673 = vand.u32 %v51, 4294901760
  %3674 = vmatpush1.msra.mxu0 %v3673
  %3675 = vmatprep.subr.mxu0 0.0
  %v3676 = vand.u32 %v52, 4294901760
  %3677 = vmatpush1.msra.mxu0 %v3676
  %3678 = vmatprep.subr.mxu0 0.0
  %v3679 = vand.u32 %v53, 4294901760
  %3680 = vmatpush1.msra.mxu0 %v3679
  %3681 = vmatprep.subr.mxu0 0.0
  %v3682 = vand.u32 %v54, 4294901760
  %3683 = vmatpush1.msra.mxu0 %v3682
  %3684 = vmatprep.subr.mxu0 0.0
  %v3685 = vand.u32 %v55, 4294901760
  %3686 = vmatpush1.msra.mxu0 %v3685
  %3687 = vmatprep.subr.mxu0 0.0
  %v3688 = vand.u32 %v56, 4294901760
  %3689 = vmatpush1.msra.mxu0 %v3688
  %3690 = vmatprep.subr.mxu0 0.0
  %v3691 = vand.u32 %v57, 4294901760
  %3692 = vmatpush1.msra.mxu0 %v3691
  %3693 = vmatprep.subr.mxu0 0.0
  %3694 = vmatpush1.msra.mxu0 0.0
  %3695 = vmatprep.subr.mxu0 0.0
  %3696 = vmatpush1.msra.mxu0 0.0
  %3697 = vmatprep.subr.mxu0 0.0
  %3698 = vmatpush1.msra.mxu0 0.0
  %3699 = vmatprep.subr.mxu0 0.0
  %3700 = vmatpush1.msra.mxu0 0.0
  %3701 = vmatprep.subr.mxu0 0.0
  %3702 = vmatpush1.msra.mxu0 0.0
  %3703 = vmatprep.subr.mxu0 0.0
  %3704 = vmatpush1.msra.mxu0 0.0
  %3705 = vmatprep.subr.mxu0 0.0
  %3706 = vmatpush1.msra.mxu0 0.0
  %3707 = vmatprep.subr.mxu0 0.0
  %3708 = vmatpush1.msra.mxu0 0.0
  %3709 = vmatprep.subr.mxu0 0.0
  %3710 = vmatpush1.msra.mxu0 0.0
  %3711 = vmatprep.subr.mxu0 0.0
  %3712 = vmatpush1.msra.mxu0 0.0
  %3713 = vmatprep.subr.mxu0 0.0
  %3714 = vmatpush1.msra.mxu0 0.0
  %3715 = vmatprep.subr.mxu0 0.0
  %3716 = vmatpush1.msra.mxu0 0.0
  %3717 = vmatprep.subr.mxu0 0.0
  %3718 = vmatpush1.msra.mxu0 0.0
  %3719 = vmatprep.subr.mxu0 0.0
  %3720 = vmatpush1.msra.mxu0 0.0
  %3721 = vmatprep.subr.mxu0 0.0
  %3722 = vmatpush1.msra.mxu0 0.0
  %3723 = vmatprep.subr.mxu0 0.0
  %3724 = vmatpush1.msra.mxu0 0.0
  %3725 = vmatprep.mubr.f32.mxu0 0.0
  %v3726 = vand.u32 %v3643, 4294901760
  %v3727 = vsub.f32 %v3643, %v3726
  %v3728 = vand.u32 %v3727, 4294901760
  %v3729 = vsub.f32 %v3727, %v3728
  %v3730 = vand.u32 %v3729, 4294901760
  %3731 = vmatmul.mubr.f32.gmra.mrb[0].mxu0 %v3730
  %v3732 = vpop.f32.mrb[0].mxu0
  %v3733 = vadd.f32 0.0, %v3732
  %v3734 = vpop.f32.mrb[0].mxu0
  %3735 = vmatprep.mubr.f32.mxu0 0.0
  %v3736 = vand.u32 %v3644, 4294901760
  %v3737 = vsub.f32 %v3644, %v3736
  %v3738 = vand.u32 %v3737, 4294901760
  %v3739 = vsub.f32 %v3737, %v3738
  %v3740 = vand.u32 %v3739, 4294901760
  %3741 = vmatmul.mubr.f32.gmra.mrb[0].mxu0 %v3740
  %v3742 = vpop.f32.mrb[0].mxu0
  %v3743 = vadd.f32 0.0, %v3742
  %v3744 = vpop.f32.mrb[0].mxu0
  %3745 = vdwg.mxu0
  %3746 = vmatprep.subr.mxu0 0.0
  %v3747 = vand.u32 %v42, 4294901760
  %v3748 = vsub.f32 %v42, %v3747
  %v3749 = vand.u32 %v3748, 4294901760
  %v3750 = vsub.f32 %v3748, %v3749
  %v3751 = vand.u32 %v3750, 4294901760
  %3752 = vmatpush1.msra.mxu0 %v3751
  %3753 = vmatprep.subr.mxu0 0.0
  %v3754 = vand.u32 %v43, 4294901760
  %v3755 = vsub.f32 %v43, %v3754
  %v3756 = vand.u32 %v3755, 4294901760
  %v3757 = vsub.f32 %v3755, %v3756
  %v3758 = vand.u32 %v3757, 4294901760
  %3759 = vmatpush1.msra.mxu0 %v3758
  %3760 = vmatprep.subr.mxu0 0.0
  %v3761 = vand.u32 %v44, 4294901760
  %v3762 = vsub.f32 %v44, %v3761
  %v3763 = vand.u32 %v3762, 4294901760
  %v3764 = vsub.f32 %v3762, %v3763
  %v3765 = vand.u32 %v3764, 4294901760
  %3766 = vmatpush1.msra.mxu0 %v3765
  %3767 = vmatprep.subr.mxu0 0.0
  %v3768 = vand.u32 %v45, 4294901760
  %v3769 = vsub.f32 %v45, %v3768
  %v3770 = vand.u32 %v3769, 4294901760
  %v3771 = vsub.f32 %v3769, %v3770
  %v3772 = vand.u32 %v3771, 4294901760
  %3773 = vmatpush1.msra.mxu0 %v3772
  %3774 = vmatprep.subr.mxu0 0.0
  %v3775 = vand.u32 %v46, 4294901760
  %v3776 = vsub.f32 %v46, %v3775
  %v3777 = vand.u32 %v3776, 4294901760
  %v3778 = vsub.f32 %v3776, %v3777
  %v3779 = vand.u32 %v3778, 4294901760
  %3780 = vmatpush1.msra.mxu0 %v3779
  %3781 = vmatprep.subr.mxu0 0.0
  %v3782 = vand.u32 %v47, 4294901760
  %v3783 = vsub.f32 %v47, %v3782
  %v3784 = vand.u32 %v3783, 4294901760
  %v3785 = vsub.f32 %v3783, %v3784
  %v3786 = vand.u32 %v3785, 4294901760
  %3787 = vmatpush1.msra.mxu0 %v3786
  %3788 = vmatprep.subr.mxu0 0.0
  %v3789 = vand.u32 %v48, 4294901760
  %v3790 = vsub.f32 %v48, %v3789
  %v3791 = vand.u32 %v3790, 4294901760
  %v3792 = vsub.f32 %v3790, %v3791
  %v3793 = vand.u32 %v3792, 4294901760
  %3794 = vmatpush1.msra.mxu0 %v3793
  %3795 = vmatprep.subr.mxu0 0.0
  %v3796 = vand.u32 %v49, 4294901760
  %v3797 = vsub.f32 %v49, %v3796
  %v3798 = vand.u32 %v3797, 4294901760
  %v3799 = vsub.f32 %v3797, %v3798
  %v3800 = vand.u32 %v3799, 4294901760
  %3801 = vmatpush1.msra.mxu0 %v3800
  %3802 = vmatprep.subr.mxu0 0.0
  %v3803 = vand.u32 %v50, 4294901760
  %v3804 = vsub.f32 %v50, %v3803
  %v3805 = vand.u32 %v3804, 4294901760
  %v3806 = vsub.f32 %v3804, %v3805
  %v3807 = vand.u32 %v3806, 4294901760
  %3808 = vmatpush1.msra.mxu0 %v3807
  %3809 = vmatprep.subr.mxu0 0.0
  %v3810 = vand.u32 %v51, 4294901760
  %v3811 = vsub.f32 %v51, %v3810
  %v3812 = vand.u32 %v3811, 4294901760
  %v3813 = vsub.f32 %v3811, %v3812
  %v3814 = vand.u32 %v3813, 4294901760
  %3815 = vmatpush1.msra.mxu0 %v3814
  %3816 = vmatprep.subr.mxu0 0.0
  %v3817 = vand.u32 %v52, 4294901760
  %v3818 = vsub.f32 %v52, %v3817
  %v3819 = vand.u32 %v3818, 4294901760
  %v3820 = vsub.f32 %v3818, %v3819
  %v3821 = vand.u32 %v3820, 4294901760
  %3822 = vmatpush1.msra.mxu0 %v3821
  %3823 = vmatprep.subr.mxu0 0.0
  %v3824 = vand.u32 %v53, 4294901760
  %v3825 = vsub.f32 %v53, %v3824
  %v3826 = vand.u32 %v3825, 4294901760
  %v3827 = vsub.f32 %v3825, %v3826
  %v3828 = vand.u32 %v3827, 4294901760
  %3829 = vmatpush1.msra.mxu0 %v3828
  %3830 = vmatprep.subr.mxu0 0.0
  %v3831 = vand.u32 %v54, 4294901760
  %v3832 = vsub.f32 %v54, %v3831
  %v3833 = vand.u32 %v3832, 4294901760
  %v3834 = vsub.f32 %v3832, %v3833
  %v3835 = vand.u32 %v3834, 4294901760
  %3836 = vmatpush1.msra.mxu0 %v3835
  %3837 = vmatprep.subr.mxu0 0.0
  %v3838 = vand.u32 %v55, 4294901760
  %v3839 = vsub.f32 %v55, %v3838
  %v3840 = vand.u32 %v3839, 4294901760
  %v3841 = vsub.f32 %v3839, %v3840
  %v3842 = vand.u32 %v3841, 4294901760
  %3843 = vmatpush1.msra.mxu0 %v3842
  %3844 = vmatprep.subr.mxu0 0.0
  %v3845 = vand.u32 %v56, 4294901760
  %v3846 = vsub.f32 %v56, %v3845
  %v3847 = vand.u32 %v3846, 4294901760
  %v3848 = vsub.f32 %v3846, %v3847
  %v3849 = vand.u32 %v3848, 4294901760
  %3850 = vmatpush1.msra.mxu0 %v3849
  %3851 = vmatprep.subr.mxu0 0.0
  %v3852 = vand.u32 %v57, 4294901760
  %v3853 = vsub.f32 %v57, %v3852
  %v3854 = vand.u32 %v3853, 4294901760
  %v3855 = vsub.f32 %v3853, %v3854
  %v3856 = vand.u32 %v3855, 4294901760
  %3857 = vmatpush1.msra.mxu0 %v3856
  %3858 = vmatprep.subr.mxu0 0.0
  %3859 = vmatpush1.msra.mxu0 0.0
  %3860 = vmatprep.subr.mxu0 0.0
  %3861 = vmatpush1.msra.mxu0 0.0
  %3862 = vmatprep.subr.mxu0 0.0
  %3863 = vmatpush1.msra.mxu0 0.0
  %3864 = vmatprep.subr.mxu0 0.0
  %3865 = vmatpush1.msra.mxu0 0.0
  %3866 = vmatprep.subr.mxu0 0.0
  %3867 = vmatpush1.msra.mxu0 0.0
  %3868 = vmatprep.subr.mxu0 0.0
  %3869 = vmatpush1.msra.mxu0 0.0
  %3870 = vmatprep.subr.mxu0 0.0
  %3871 = vmatpush1.msra.mxu0 0.0
  %3872 = vmatprep.subr.mxu0 0.0
  %3873 = vmatpush1.msra.mxu0 0.0
  %3874 = vmatprep.subr.mxu0 0.0
  %3875 = vmatpush1.msra.mxu0 0.0
  %3876 = vmatprep.subr.mxu0 0.0
  %3877 = vmatpush1.msra.mxu0 0.0
  %3878 = vmatprep.subr.mxu0 0.0
  %3879 = vmatpush1.msra.mxu0 0.0
  %3880 = vmatprep.subr.mxu0 0.0
  %3881 = vmatpush1.msra.mxu0 0.0
  %3882 = vmatprep.subr.mxu0 0.0
  %3883 = vmatpush1.msra.mxu0 0.0
  %3884 = vmatprep.subr.mxu0 0.0
  %3885 = vmatpush1.msra.mxu0 0.0
  %3886 = vmatprep.subr.mxu0 0.0
  %3887 = vmatpush1.msra.mxu0 0.0
  %3888 = vmatprep.subr.mxu0 0.0
  %3889 = vmatpush1.msra.mxu0 0.0
  %3890 = vmatprep.mubr.f32.mxu0 0.0
  %v3891 = vand.u32 %v3643, 4294901760
  %3892 = vmatmul.mubr.f32.gmra.mrb[0].mxu0 %v3891
  %v3893 = vpop.f32.mrb[0].mxu0
  %v3894 = vadd.f32 %v3733, %v3893
  %v3895 = vpop.f32.mrb[0].mxu0
  %3896 = vmatprep.mubr.f32.mxu0 0.0
  %v3897 = vand.u32 %v3644, 4294901760
  %3898 = vmatmul.mubr.f32.gmra.mrb[0].mxu0 %v3897
  %v3899 = vpop.f32.mrb[0].mxu0
  %v3900 = vadd.f32 %v3743, %v3899
  %v3901 = vpop.f32.mrb[0].mxu0
  %3902 = vdwg.mxu0
  %3903 = vmatprep.subr.mxu0 0.0
  %v3904 = vand.u32 %v42, 4294901760
  %v3905 = vsub.f32 %v42, %v3904
  %3906 = vmatpush1.msra.mxu0 %v3905
  %3907 = vmatprep.subr.mxu0 0.0
  %v3908 = vand.u32 %v43, 4294901760
  %v3909 = vsub.f32 %v43, %v3908
  %3910 = vmatpush1.msra.mxu0 %v3909
  %3911 = vmatprep.subr.mxu0 0.0
  %v3912 = vand.u32 %v44, 4294901760
  %v3913 = vsub.f32 %v44, %v3912
  %3914 = vmatpush1.msra.mxu0 %v3913
  %3915 = vmatprep.subr.mxu0 0.0
  %v3916 = vand.u32 %v45, 4294901760
  %v3917 = vsub.f32 %v45, %v3916
  %3918 = vmatpush1.msra.mxu0 %v3917
  %3919 = vmatprep.subr.mxu0 0.0
  %v3920 = vand.u32 %v46, 4294901760
  %v3921 = vsub.f32 %v46, %v3920
  %3922 = vmatpush1.msra.mxu0 %v3921
  %3923 = vmatprep.subr.mxu0 0.0
  %v3924 = vand.u32 %v47, 4294901760
  %v3925 = vsub.f32 %v47, %v3924
  %3926 = vmatpush1.msra.mxu0 %v3925
  %3927 = vmatprep.subr.mxu0 0.0
  %v3928 = vand.u32 %v48, 4294901760
  %v3929 = vsub.f32 %v48, %v3928
  %3930 = vmatpush1.msra.mxu0 %v3929
  %3931 = vmatprep.subr.mxu0 0.0
  %v3932 = vand.u32 %v49, 4294901760
  %v3933 = vsub.f32 %v49, %v3932
  %3934 = vmatpush1.msra.mxu0 %v3933
  %3935 = vmatprep.subr.mxu0 0.0
  %v3936 = vand.u32 %v50, 4294901760
  %v3937 = vsub.f32 %v50, %v3936
  %3938 = vmatpush1.msra.mxu0 %v3937
  %3939 = vmatprep.subr.mxu0 0.0
  %v3940 = vand.u32 %v51, 4294901760
  %v3941 = vsub.f32 %v51, %v3940
  %3942 = vmatpush1.msra.mxu0 %v3941
  %3943 = vmatprep.subr.mxu0 0.0
  %v3944 = vand.u32 %v52, 4294901760
  %v3945 = vsub.f32 %v52, %v3944
  %3946 = vmatpush1.msra.mxu0 %v3945
  %3947 = vmatprep.subr.mxu0 0.0
  %v3948 = vand.u32 %v53, 4294901760
  %v3949 = vsub.f32 %v53, %v3948
  %3950 = vmatpush1.msra.mxu0 %v3949
  %3951 = vmatprep.subr.mxu0 0.0
  %v3952 = vand.u32 %v54, 4294901760
  %v3953 = vsub.f32 %v54, %v3952
  %3954 = vmatpush1.msra.mxu0 %v3953
  %3955 = vmatprep.subr.mxu0 0.0
  %v3956 = vand.u32 %v55, 4294901760
  %v3957 = vsub.f32 %v55, %v3956
  %3958 = vmatpush1.msra.mxu0 %v3957
  %3959 = vmatprep.subr.mxu0 0.0
  %v3960 = vand.u32 %v56, 4294901760
  %v3961 = vsub.f32 %v56, %v3960
  %3962 = vmatpush1.msra.mxu0 %v3961
  %3963 = vmatprep.subr.mxu0 0.0
  %v3964 = vand.u32 %v57, 4294901760
  %v3965 = vsub.f32 %v57, %v3964
  %3966 = vmatpush1.msra.mxu0 %v3965
  %3967 = vmatprep.subr.mxu0 0.0
  %3968 = vmatpush1.msra.mxu0 0.0
  %3969 = vmatprep.subr.mxu0 0.0
  %3970 = vmatpush1.msra.mxu0 0.0
  %3971 = vmatprep.subr.mxu0 0.0
  %3972 = vmatpush1.msra.mxu0 0.0
  %3973 = vmatprep.subr.mxu0 0.0
  %3974 = vmatpush1.msra.mxu0 0.0
  %3975 = vmatprep.subr.mxu0 0.0
  %3976 = vmatpush1.msra.mxu0 0.0
  %3977 = vmatprep.subr.mxu0 0.0
  %3978 = vmatpush1.msra.mxu0 0.0
  %3979 = vmatprep.subr.mxu0 0.0
  %3980 = vmatpush1.msra.mxu0 0.0
  %3981 = vmatprep.subr.mxu0 0.0
  %3982 = vmatpush1.msra.mxu0 0.0
  %3983 = vmatprep.subr.mxu0 0.0
  %3984 = vmatpush1.msra.mxu0 0.0
  %3985 = vmatprep.subr.mxu0 0.0
  %3986 = vmatpush1.msra.mxu0 0.0
  %3987 = vmatprep.subr.mxu0 0.0
  %3988 = vmatpush1.msra.mxu0 0.0
  %3989 = vmatprep.subr.mxu0 0.0
  %3990 = vmatpush1.msra.mxu0 0.0
  %3991 = vmatprep.subr.mxu0 0.0
  %3992 = vmatpush1.msra.mxu0 0.0
  %3993 = vmatprep.subr.mxu0 0.0
  %3994 = vmatpush1.msra.mxu0 0.0
  %3995 = vmatprep.subr.mxu0 0.0
  %3996 = vmatpush1.msra.mxu0 0.0
  %3997 = vmatprep.subr.mxu0 0.0
  %3998 = vmatpush1.msra.mxu0 0.0
  %3999 = vmatprep.mubr.f32.mxu0 0.0
  %v4000 = vand.u32 %v3643, 4294901760
  %v4001 = vsub.f32 %v3643, %v4000
  %4002 = vmatmul.mubr.f32.gmra.mrb[0].mxu0 %v4001
  %v4003 = vpop.f32.mrb[0].mxu0
  %v4004 = vadd.f32 %v3894, %v4003
  %v4005 = vpop.f32.mrb[0].mxu0
  %4006 = vmatprep.mubr.f32.mxu0 0.0
  %v4007 = vand.u32 %v3644, 4294901760
  %v4008 = vsub.f32 %v3644, %v4007
  %4009 = vmatmul.mubr.f32.gmra.mrb[0].mxu0 %v4008
  %v4010 = vpop.f32.mrb[0].mxu0
  %v4011 = vadd.f32 %v3900, %v4010
  %v4012 = vpop.f32.mrb[0].mxu0
  %4013 = vdwg.mxu0
  %4014 = vmatprep.subr.mxu0 0.0
  %v4015 = vand.u32 %v42, 4294901760
  %4016 = vmatpush1.msra.mxu0 %v4015
  %4017 = vmatprep.subr.mxu0 0.0
  %v4018 = vand.u32 %v43, 4294901760
  %4019 = vmatpush1.msra.mxu0 %v4018
  %4020 = vmatprep.subr.mxu0 0.0
  %v4021 = vand.u32 %v44, 4294901760
  %4022 = vmatpush1.msra.mxu0 %v4021
  %4023 = vmatprep.subr.mxu0 0.0
  %v4024 = vand.u32 %v45, 4294901760
  %4025 = vmatpush1.msra.mxu0 %v4024
  %4026 = vmatprep.subr.mxu0 0.0
  %v4027 = vand.u32 %v46, 4294901760
  %4028 = vmatpush1.msra.mxu0 %v4027
  %4029 = vmatprep.subr.mxu0 0.0
  %v4030 = vand.u32 %v47, 4294901760
  %4031 = vmatpush1.msra.mxu0 %v4030
  %4032 = vmatprep.subr.mxu0 0.0
  %v4033 = vand.u32 %v48, 4294901760
  %4034 = vmatpush1.msra.mxu0 %v4033
  %4035 = vmatprep.subr.mxu0 0.0
  %v4036 = vand.u32 %v49, 4294901760
  %4037 = vmatpush1.msra.mxu0 %v4036
  %4038 = vmatprep.subr.mxu0 0.0
  %v4039 = vand.u32 %v50, 4294901760
  %4040 = vmatpush1.msra.mxu0 %v4039
  %4041 = vmatprep.subr.mxu0 0.0
  %v4042 = vand.u32 %v51, 4294901760
  %4043 = vmatpush1.msra.mxu0 %v4042
  %4044 = vmatprep.subr.mxu0 0.0
  %v4045 = vand.u32 %v52, 4294901760
  %4046 = vmatpush1.msra.mxu0 %v4045
  %4047 = vmatprep.subr.mxu0 0.0
  %v4048 = vand.u32 %v53, 4294901760
  %4049 = vmatpush1.msra.mxu0 %v4048
  %4050 = vmatprep.subr.mxu0 0.0
  %v4051 = vand.u32 %v54, 4294901760
  %4052 = vmatpush1.msra.mxu0 %v4051
  %4053 = vmatprep.subr.mxu0 0.0
  %v4054 = vand.u32 %v55, 4294901760
  %4055 = vmatpush1.msra.mxu0 %v4054
  %4056 = vmatprep.subr.mxu0 0.0
  %v4057 = vand.u32 %v56, 4294901760
  %4058 = vmatpush1.msra.mxu0 %v4057
  %4059 = vmatprep.subr.mxu0 0.0
  %v4060 = vand.u32 %v57, 4294901760
  %4061 = vmatpush1.msra.mxu0 %v4060
  %4062 = vmatprep.subr.mxu0 0.0
  %4063 = vmatpush1.msra.mxu0 0.0
  %4064 = vmatprep.subr.mxu0 0.0
  %4065 = vmatpush1.msra.mxu0 0.0
  %4066 = vmatprep.subr.mxu0 0.0
  %4067 = vmatpush1.msra.mxu0 0.0
  %4068 = vmatprep.subr.mxu0 0.0
  %4069 = vmatpush1.msra.mxu0 0.0
  %4070 = vmatprep.subr.mxu0 0.0
  %4071 = vmatpush1.msra.mxu0 0.0
  %4072 = vmatprep.subr.mxu0 0.0
  %4073 = vmatpush1.msra.mxu0 0.0
  %4074 = vmatprep.subr.mxu0 0.0
  %4075 = vmatpush1.msra.mxu0 0.0
  %4076 = vmatprep.subr.mxu0 0.0
  %4077 = vmatpush1.msra.mxu0 0.0
  %4078 = vmatprep.subr.mxu0 0.0
  %4079 = vmatpush1.msra.mxu0 0.0
  %4080 = vmatprep.subr.mxu0 0.0
  %4081 = vmatpush1.msra.mxu0 0.0
  %4082 = vmatprep.subr.mxu0 0.0
  %4083 = vmatpush1.msra.mxu0 0.0
  %4084 = vmatprep.subr.mxu0 0.0
  %4085 = vmatpush1.msra.mxu0 0.0
  %4086 = vmatprep.subr.mxu0 0.0
  %4087 = vmatpush1.msra.mxu0 0.0
  %4088 = vmatprep.subr.mxu0 0.0
  %4089 = vmatpush1.msra.mxu0 0.0
  %4090 = vmatprep.subr.mxu0 0.0
  %4091 = vmatpush1.msra.mxu0 0.0
  %4092 = vmatprep.subr.mxu0 0.0
  %4093 = vmatpush1.msra.mxu0 0.0
  %4094 = vmatprep.mubr.f32.mxu0 0.0
  %v4095 = vand.u32 %v3643, 4294901760
  %v4096 = vsub.f32 %v3643, %v4095
  %v4097 = vand.u32 %v4096, 4294901760
  %4098 = vmatmul.mubr.f32.gmra.mrb[0].mxu0 %v4097
  %v4099 = vpop.f32.mrb[0].mxu0
  %v4100 = vadd.f32 %v4004, %v4099
  %v4101 = vpop.f32.mrb[0].mxu0
  %4102 = vmatprep.mubr.f32.mxu0 0.0
  %v4103 = vand.u32 %v3644, 4294901760
  %v4104 = vsub.f32 %v3644, %v4103
  %v4105 = vand.u32 %v4104, 4294901760
  %4106 = vmatmul.mubr.f32.gmra.mrb[0].mxu0 %v4105
  %v4107 = vpop.f32.mrb[0].mxu0
  %v4108 = vadd.f32 %v4011, %v4107
  %v4109 = vpop.f32.mrb[0].mxu0
  %4110 = vdwg.mxu0
  %4111 = vmatprep.subr.mxu0 0.0
  %v4112 = vand.u32 %v42, 4294901760
  %v4113 = vsub.f32 %v42, %v4112
  %v4114 = vand.u32 %v4113, 4294901760
  %4115 = vmatpush1.msra.mxu0 %v4114
  %4116 = vmatprep.subr.mxu0 0.0
  %v4117 = vand.u32 %v43, 4294901760
  %v4118 = vsub.f32 %v43, %v4117
  %v4119 = vand.u32 %v4118, 4294901760
  %4120 = vmatpush1.msra.mxu0 %v4119
  %4121 = vmatprep.subr.mxu0 0.0
  %v4122 = vand.u32 %v44, 4294901760
  %v4123 = vsub.f32 %v44, %v4122
  %v4124 = vand.u32 %v4123, 4294901760
  %4125 = vmatpush1.msra.mxu0 %v4124
  %4126 = vmatprep.subr.mxu0 0.0
  %v4127 = vand.u32 %v45, 4294901760
  %v4128 = vsub.f32 %v45, %v4127
  %v4129 = vand.u32 %v4128, 4294901760
  %4130 = vmatpush1.msra.mxu0 %v4129
  %4131 = vmatprep.subr.mxu0 0.0
  %v4132 = vand.u32 %v46, 4294901760
  %v4133 = vsub.f32 %v46, %v4132
  %v4134 = vand.u32 %v4133, 4294901760
  %4135 = vmatpush1.msra.mxu0 %v4134
  %4136 = vmatprep.subr.mxu0 0.0
  %v4137 = vand.u32 %v47, 4294901760
  %v4138 = vsub.f32 %v47, %v4137
  %v4139 = vand.u32 %v4138, 4294901760
  %4140 = vmatpush1.msra.mxu0 %v4139
  %4141 = vmatprep.subr.mxu0 0.0
  %v4142 = vand.u32 %v48, 4294901760
  %v4143 = vsub.f32 %v48, %v4142
  %v4144 = vand.u32 %v4143, 4294901760
  %4145 = vmatpush1.msra.mxu0 %v4144
  %4146 = vmatprep.subr.mxu0 0.0
  %v4147 = vand.u32 %v49, 4294901760
  %v4148 = vsub.f32 %v49, %v4147
  %v4149 = vand.u32 %v4148, 4294901760
  %4150 = vmatpush1.msra.mxu0 %v4149
  %4151 = vmatprep.subr.mxu0 0.0
  %v4152 = vand.u32 %v50, 4294901760
  %v4153 = vsub.f32 %v50, %v4152
  %v4154 = vand.u32 %v4153, 4294901760
  %4155 = vmatpush1.msra.mxu0 %v4154
  %4156 = vmatprep.subr.mxu0 0.0
  %v4157 = vand.u32 %v51, 4294901760
  %v4158 = vsub.f32 %v51, %v4157
  %v4159 = vand.u32 %v4158, 4294901760
  %4160 = vmatpush1.msra.mxu0 %v4159
  %4161 = vmatprep.subr.mxu0 0.0
  %v4162 = vand.u32 %v52, 4294901760
  %v4163 = vsub.f32 %v52, %v4162
  %v4164 = vand.u32 %v4163, 4294901760
  %4165 = vmatpush1.msra.mxu0 %v4164
  %4166 = vmatprep.subr.mxu0 0.0
  %v4167 = vand.u32 %v53, 4294901760
  %v4168 = vsub.f32 %v53, %v4167
  %v4169 = vand.u32 %v4168, 4294901760
  %4170 = vmatpush1.msra.mxu0 %v4169
  %4171 = vmatprep.subr.mxu0 0.0
  %v4172 = vand.u32 %v54, 4294901760
  %v4173 = vsub.f32 %v54, %v4172
  %v4174 = vand.u32 %v4173, 4294901760
  %4175 = vmatpush1.msra.mxu0 %v4174
  %4176 = vmatprep.subr.mxu0 0.0
  %v4177 = vand.u32 %v55, 4294901760
  %v4178 = vsub.f32 %v55, %v4177
  %v4179 = vand.u32 %v4178, 4294901760
  %4180 = vmatpush1.msra.mxu0 %v4179
  %4181 = vmatprep.subr.mxu0 0.0
  %v4182 = vand.u32 %v56, 4294901760
  %v4183 = vsub.f32 %v56, %v4182
  %v4184 = vand.u32 %v4183, 4294901760
  %4185 = vmatpush1.msra.mxu0 %v4184
  %4186 = vmatprep.subr.mxu0 0.0
  %v4187 = vand.u32 %v57, 4294901760
  %v4188 = vsub.f32 %v57, %v4187
  %v4189 = vand.u32 %v4188, 4294901760
  %4190 = vmatpush1.msra.mxu0 %v4189
  %4191 = vmatprep.subr.mxu0 0.0
  %4192 = vmatpush1.msra.mxu0 0.0
  %4193 = vmatprep.subr.mxu0 0.0
  %4194 = vmatpush1.msra.mxu0 0.0
  %4195 = vmatprep.subr.mxu0 0.0
  %4196 = vmatpush1.msra.mxu0 0.0
  %4197 = vmatprep.subr.mxu0 0.0
  %4198 = vmatpush1.msra.mxu0 0.0
  %4199 = vmatprep.subr.mxu0 0.0
  %4200 = vmatpush1.msra.mxu0 0.0
  %4201 = vmatprep.subr.mxu0 0.0
  %4202 = vmatpush1.msra.mxu0 0.0
  %4203 = vmatprep.subr.mxu0 0.0
  %4204 = vmatpush1.msra.mxu0 0.0
  %4205 = vmatprep.subr.mxu0 0.0
  %4206 = vmatpush1.msra.mxu0 0.0
  %4207 = vmatprep.subr.mxu0 0.0
  %4208 = vmatpush1.msra.mxu0 0.0
  %4209 = vmatprep.subr.mxu0 0.0
  %4210 = vmatpush1.msra.mxu0 0.0
  %4211 = vmatprep.subr.mxu0 0.0
  %4212 = vmatpush1.msra.mxu0 0.0
  %4213 = vmatprep.subr.mxu0 0.0
  %4214 = vmatpush1.msra.mxu0 0.0
  %4215 = vmatprep.subr.mxu0 0.0
  %4216 = vmatpush1.msra.mxu0 0.0
  %4217 = vmatprep.subr.mxu0 0.0
  %4218 = vmatpush1.msra.mxu0 0.0
  %4219 = vmatprep.subr.mxu0 0.0
  %4220 = vmatpush1.msra.mxu0 0.0
  %4221 = vmatprep.subr.mxu0 0.0
  %4222 = vmatpush1.msra.mxu0 0.0
  %4223 = vmatprep.mubr.f32.mxu0 0.0
  %v4224 = vand.u32 %v3643, 4294901760
  %4225 = vmatmul.mubr.f32.gmra.mrb[0].mxu0 %v4224
  %v4226 = vpop.f32.mrb[0].mxu0
  %v4227 = vadd.f32 %v4100, %v4226
  %v4228 = vpop.f32.mrb[0].mxu0
  %4229 = vmatprep.mubr.f32.mxu0 0.0
  %v4230 = vand.u32 %v3644, 4294901760
  %4231 = vmatmul.mubr.f32.gmra.mrb[0].mxu0 %v4230
  %v4232 = vpop.f32.mrb[0].mxu0
  %v4233 = vadd.f32 %v4108, %v4232
  %v4234 = vpop.f32.mrb[0].mxu0
  %4235 = vdwg.mxu0
  %4236 = vmatprep.subr.mxu0 0.0
  %v4237 = vand.u32 %v42, 4294901760
  %4238 = vmatpush1.msra.mxu0 %v4237
  %4239 = vmatprep.subr.mxu0 0.0
  %v4240 = vand.u32 %v43, 4294901760
  %4241 = vmatpush1.msra.mxu0 %v4240
  %4242 = vmatprep.subr.mxu0 0.0
  %v4243 = vand.u32 %v44, 4294901760
  %4244 = vmatpush1.msra.mxu0 %v4243
  %4245 = vmatprep.subr.mxu0 0.0
  %v4246 = vand.u32 %v45, 4294901760
  %4247 = vmatpush1.msra.mxu0 %v4246
  %4248 = vmatprep.subr.mxu0 0.0
  %v4249 = vand.u32 %v46, 4294901760
  %4250 = vmatpush1.msra.mxu0 %v4249
  %4251 = vmatprep.subr.mxu0 0.0
  %v4252 = vand.u32 %v47, 4294901760
  %4253 = vmatpush1.msra.mxu0 %v4252
  %4254 = vmatprep.subr.mxu0 0.0
  %v4255 = vand.u32 %v48, 4294901760
  %4256 = vmatpush1.msra.mxu0 %v4255
  %4257 = vmatprep.subr.mxu0 0.0
  %v4258 = vand.u32 %v49, 4294901760
  %4259 = vmatpush1.msra.mxu0 %v4258
  %4260 = vmatprep.subr.mxu0 0.0
  %v4261 = vand.u32 %v50, 4294901760
  %4262 = vmatpush1.msra.mxu0 %v4261
  %4263 = vmatprep.subr.mxu0 0.0
  %v4264 = vand.u32 %v51, 4294901760
  %4265 = vmatpush1.msra.mxu0 %v4264
  %4266 = vmatprep.subr.mxu0 0.0
  %v4267 = vand.u32 %v52, 4294901760
  %4268 = vmatpush1.msra.mxu0 %v4267
  %4269 = vmatprep.subr.mxu0 0.0
  %v4270 = vand.u32 %v53, 4294901760
  %4271 = vmatpush1.msra.mxu0 %v4270
  %4272 = vmatprep.subr.mxu0 0.0
  %v4273 = vand.u32 %v54, 4294901760
  %4274 = vmatpush1.msra.mxu0 %v4273
  %4275 = vmatprep.subr.mxu0 0.0
  %v4276 = vand.u32 %v55, 4294901760
  %4277 = vmatpush1.msra.mxu0 %v4276
  %4278 = vmatprep.subr.mxu0 0.0
  %v4279 = vand.u32 %v56, 4294901760
  %4280 = vmatpush1.msra.mxu0 %v4279
  %4281 = vmatprep.subr.mxu0 0.0
  %v4282 = vand.u32 %v57, 4294901760
  %4283 = vmatpush1.msra.mxu0 %v4282
  %4284 = vmatprep.subr.mxu0 0.0
  %4285 = vmatpush1.msra.mxu0 0.0
  %4286 = vmatprep.subr.mxu0 0.0
  %4287 = vmatpush1.msra.mxu0 0.0
  %4288 = vmatprep.subr.mxu0 0.0
  %4289 = vmatpush1.msra.mxu0 0.0
  %4290 = vmatprep.subr.mxu0 0.0
  %4291 = vmatpush1.msra.mxu0 0.0
  %4292 = vmatprep.subr.mxu0 0.0
  %4293 = vmatpush1.msra.mxu0 0.0
  %4294 = vmatprep.subr.mxu0 0.0
  %4295 = vmatpush1.msra.mxu0 0.0
  %4296 = vmatprep.subr.mxu0 0.0
  %4297 = vmatpush1.msra.mxu0 0.0
  %4298 = vmatprep.subr.mxu0 0.0
  %4299 = vmatpush1.msra.mxu0 0.0
  %4300 = vmatprep.subr.mxu0 0.0
  %4301 = vmatpush1.msra.mxu0 0.0
  %4302 = vmatprep.subr.mxu0 0.0
  %4303 = vmatpush1.msra.mxu0 0.0
  %4304 = vmatprep.subr.mxu0 0.0
  %4305 = vmatpush1.msra.mxu0 0.0
  %4306 = vmatprep.subr.mxu0 0.0
  %4307 = vmatpush1.msra.mxu0 0.0
  %4308 = vmatprep.subr.mxu0 0.0
  %4309 = vmatpush1.msra.mxu0 0.0
  %4310 = vmatprep.subr.mxu0 0.0
  %4311 = vmatpush1.msra.mxu0 0.0
  %4312 = vmatprep.subr.mxu0 0.0
  %4313 = vmatpush1.msra.mxu0 0.0
  %4314 = vmatprep.subr.mxu0 0.0
  %4315 = vmatpush1.msra.mxu0 0.0
  %4316 = vmatprep.mubr.f32.mxu0 0.0
  %v4317 = vand.u32 %v3643, 4294901760
  %4318 = vmatmul.mubr.f32.gmra.mrb[0].mxu0 %v4317
  %v4319 = vpop.f32.mrb[0].mxu0
  %v4320 = vadd.f32 %v4227, %v4319
  %v4321 = vpop.f32.mrb[0].mxu0
  %4322 = vmatprep.mubr.f32.mxu0 0.0
  %v4323 = vand.u32 %v3644, 4294901760
  %4324 = vmatmul.mubr.f32.gmra.mrb[0].mxu0 %v4323
  %v4325 = vpop.f32.mrb[0].mxu0
  %v4326 = vadd.f32 %v4233, %v4325
  %v4327 = vpop.f32.mrb[0].mxu0
  %4328 = vdwg.mxu0
  %vm4329 = vcmask 64512
  %v4330 = vsel %vm4329, %v4320, 0.0
  %v4331 = vsel %vm4329, %v4326, 0.0
  %v4332 = vadd.f32 %v4330, %v4331
  %v4333 = vrot.slane %v4332, 4
  %v4334 = vadd.f32 %v4332, %v4333
  %v4335 = vrot.slane %v4334, 2
  %v4336 = vadd.f32 %v4334, %v4335
  %v4337 = vrot.slane %v4336, 1
  %v4338 = vadd.f32 %v4336, %v4337
  %vm4339 = vcmask 57344
  %4340 = vst.msk [vmem:[%s5] sm:$0x1] %vm4339, %v4338
  // Predicated region
  $region22: #{mssim.1} parent=0 // pred_check
    _
  $region23: #{mssim.1} parent=0 // pred_check_branch
    %4342 = sbr.rel (0) target = $region25
  $region24: #{mssim.1} parent=0 // pred_region
    _
  $region25: #{mssim.1} parent=0 // pred_fallthru
    _
  // Predicated region
  $region26: #{mssim.1} parent=0 // pred_check
    _
  $region27: #{mssim.1} parent=0 // pred_check_branch
    %4344 = sbr.rel (0) target = $region29
  $region28: #{mssim.1} parent=0 // pred_region
    _
  $region29: #{mssim.1} parent=0 // pred_fallthru
    _

</llo_original>
